<compile_context>
chip_gen: v7x
topology: tpu7x:2x2x1
jax: 0.10.0
libtpu: 0.0.40
codegen_flags: <defaults>
</compile_context>

<pallas_src>
import numpy as np

import jax
import jax.numpy as jnp
from jax.experimental import pallas as pl
from jax.experimental.pallas import tpu as pltpu


# ----------------------------------------------------------------------------
# One-time weight preprocessing: full Toeplitz operator + bias row per layer.
# Built by pushing an NCHW-flat identity basis through the exact XLA
# conv / conv-transpose (guarantees Conv2d / ConvTranspose2d semantics,
# including stride / padding / output_padding), at HIGHEST precision.
# Total operator size: 4 * 512*1024 f32 = 8 MiB.
# ----------------------------------------------------------------------------
def _full_conv_operator(w_oihw, b, h_in, w_in, stride, pad):
    c_in = w_oihw.shape[1]
    d_in = c_in * h_in * w_in
    eye = jnp.eye(d_in, dtype=jnp.float32).reshape(d_in, c_in, h_in, w_in)
    out = jax.lax.conv_general_dilated(
        eye, w_oihw, (stride, stride), [(pad, pad)] * 2,
        dimension_numbers=("NCHW", "OIHW", "NCHW"),
        precision=jax.lax.Precision.HIGHEST)
    _, c_out, h_out, w_out = out.shape
    w_full = out.reshape(d_in, c_out * h_out * w_out)        # NCHW-flat rows/cols
    bias_row = jnp.repeat(b, h_out * w_out).reshape(1, -1)    # NCHW-flat bias
    return w_full, bias_row, (c_out, h_out, w_out)


def _full_convt_operator(w_iohw, b, h_in, w_in, stride, pad, out_pad):
    c_in = w_iohw.shape[0]
    k = w_iohw.shape[2]
    d_in = c_in * h_in * w_in
    eye = jnp.eye(d_in, dtype=jnp.float32).reshape(d_in, c_in, h_in, w_in)
    w_flip = jnp.transpose(w_iohw[:, :, ::-1, ::-1], (1, 0, 2, 3))  # -> OIHW, flipped
    out = jax.lax.conv_general_dilated(
        eye, w_flip, (1, 1),
        [(k - 1 - pad, k - 1 - pad + out_pad)] * 2,
        lhs_dilation=(stride, stride),
        dimension_numbers=("NCHW", "OIHW", "NCHW"),
        precision=jax.lax.Precision.HIGHEST)
    _, c_out, h_out, w_out = out.shape
    w_full = out.reshape(d_in, c_out * h_out * w_out)
    bias_row = jnp.repeat(b, h_out * w_out).reshape(1, -1)
    return w_full, bias_row, (c_out, h_out, w_out)


def prepare_operands(params, h=16, w=16):
    """One-time weight preprocessing (kept off the per-call data path)."""
    w1, b1, (_, h1, w1s) = _full_conv_operator(params["enc1_w"], params["enc1_b"], h, w, 2, 1)
    w2, b2, (_, h2, w2s) = _full_conv_operator(params["enc2_w"], params["enc2_b"], h1, w1s, 2, 1)
    w3, b3, (_, h3, w3s) = _full_convt_operator(params["dec1_w"], params["dec1_b"], h2, w2s, 2, 1, 1)
    w4, b4, (c4, h4, w4s) = _full_convt_operator(params["dec2_w"], params["dec2_b"], h3, w3s, 2, 1, 1)
    assert (h4, w4s) == (h, w) and c4 == 2
    return {"W1": w1, "B1": b1, "W2": w2, "B2": b2,
            "W3": w3, "B3": b3, "W4": w4, "B4": b4}


# ----------------------------------------------------------------------------
# Fused Pallas kernel: B_tile samples per grid step, one matmul per layer.
# ----------------------------------------------------------------------------
def _autoencoder_kernel(x_ref,
                        w1_ref, b1_ref, w2_ref, b2_ref,
                        w3_ref, b3_ref, w4_ref, b4_ref,
                        o_ref):
    def dense(h, w_ref, b_ref):
        return jnp.dot(h, w_ref[...], preferred_element_type=jnp.float32) + b_ref[...]

    h = x_ref[...]                                    # (B_tile, 512)  NCHW-flat f32
    h = jnp.maximum(dense(h, w1_ref, b1_ref), 0.0)    # (B_tile, 1024) enc conv1 + ReLU
    h = jnp.maximum(dense(h, w2_ref, b2_ref), 0.0)    # (B_tile, 512)  enc conv2 + ReLU
    h = jnp.maximum(dense(h, w3_ref, b3_ref), 0.0)    # (B_tile, 1024) dec convT1 + ReLU
    z = dense(h, w4_ref, b4_ref)                      # (B_tile, 512)  dec convT2
    o_ref[...] = 1.0 / (1.0 + jnp.exp(-z))            # exact sigmoid (keeps 2e-4 tol)


def _round_up(x, m):
    return ((x + m - 1) // m) * m


def autoencoder_forward(prep, x_nchw, block_b=256):
    n, c_in, h, w = x_nchw.shape
    d_in = c_in * h * w
    d_out = prep["B4"].shape[1]
    c_out = d_out // (h * w)

    # NCHW-flat per-sample layout: a free reshape (no transposes, no HBM pass).
    x_flat = x_nchw.reshape(n, d_in)

    # Batch tile: up to `block_b` samples per grid step, sublane-aligned.
    b_tile = min(block_b, _round_up(n, 8))
    n_pad = _round_up(n, b_tile)
    if n_pad != n:
        x_flat = jnp.pad(x_flat, ((0, n_pad - n), (0, 0)))

    operands = (x_flat,
                prep["W1"], prep["B1"], prep["W2"], prep["B2"],
                prep["W3"], prep["B3"], prep["W4"], prep["B4"])

    def resident(arr):
        nd = arr.ndim
        return pl.BlockSpec(arr.shape, lambda i, _nd=nd: (0,) * _nd)

    in_specs = [pl.BlockSpec((b_tile, d_in), lambda i: (i, 0))]
    in_specs += [resident(a) for a in operands[1:]]

    out_flat = pl.pallas_call(
        _autoencoder_kernel,
        out_shape=jax.ShapeDtypeStruct((n_pad, d_out), jnp.float32),
        grid=(n_pad // b_tile,),
        in_specs=in_specs,
        out_specs=pl.BlockSpec((b_tile, d_out), lambda i: (i, 0)),
        compiler_params=pltpu.CompilerParams(
            dimension_semantics=("parallel",),        # shard batch tiles across TCs
            vmem_limit_bytes=48 * 1024 * 1024),       # > v5e 16MiB default, < v7x 64MiB
    )(*operands)

    # NCHW-flat -> (N, C, H, W): a free reshape after dropping padding rows.
    return out_flat[:n].reshape(n, c_out, h, w)


# ----------------------------------------------------------------------------
# Parameter init (PyTorch layouts) and pure-JAX reference
# ----------------------------------------------------------------------------
def init_params(key):
    ks = jax.random.split(key, 8)

    def wgt(k, shape, fan_in):
        return (jax.random.normal(k, shape, jnp.float32) / np.sqrt(fan_in)).astype(jnp.float32)

    return {
        # Conv2d weights: (C_out, C_in, K, K); ConvTranspose2d weights: (C_in, C_out, K, K)
        "enc1_w": wgt(ks[0], (16, 2, 3, 3), 2 * 9),
        "enc1_b": 0.01 * jax.random.normal(ks[1], (16,), jnp.float32),
        "enc2_w": wgt(ks[2], (32, 16, 3, 3), 16 * 9),
        "enc2_b": 0.01 * jax.random.normal(ks[3], (32,), jnp.float32),
        "dec1_w": wgt(ks[4], (32, 16, 3, 3), 32 * 9),
        "dec1_b": 0.01 * jax.random.normal(ks[5], (16,), jnp.float32),
        "dec2_w": wgt(ks[6], (16, 2, 3, 3), 16 * 9),
        "dec2_b": 0.01 * jax.random.normal(ks[7], (2,), jnp.float32),
    }


def _ref_conv(x, w_oihw, b, stride, padding):
    out = jax.lax.conv_general_dilated(
        x, w_oihw, (stride, stride), [(padding, padding)] * 2,
        dimension_numbers=("NCHW", "OIHW", "NCHW"),
        precision=jax.lax.Precision.HIGHEST)
    return out + b.reshape(1, -1, 1, 1)


def _ref_conv_transpose(x, w_iohw, b, stride, padding, output_padding):
    k = w_iohw.shape[2]
    w = jnp.transpose(w_iohw[:, :, ::-1, ::-1], (1, 0, 2, 3))  # -> OIHW, flipped
    out = jax.lax.conv_general_dilated(
        x, w, (1, 1),
        [(k - 1 - padding, k - 1 - padding + output_padding)] * 2,
        lhs_dilation=(stride, stride),
        dimension_numbers=("NCHW", "OIHW", "NCHW"),
        precision=jax.lax.Precision.HIGHEST)
    return out + b.reshape(1, -1, 1, 1)


def reference_forward(params, x):
    h = jax.nn.relu(_ref_conv(x, params["enc1_w"], params["enc1_b"], 2, 1))
    h = jax.nn.relu(_ref_conv(h, params["enc2_w"], params["enc2_b"], 2, 1))
    h = jax.nn.relu(_ref_conv_transpose(h, params["dec1_w"], params["dec1_b"], 2, 1, 1))
    h = jax.nn.sigmoid(_ref_conv_transpose(h, params["dec2_w"], params["dec2_b"], 2, 1, 1))
    return h


# ----------------------------------------------------------------------------
if __name__ == "__main__":
    key = jax.random.PRNGKey(0)
    k_params, k_x1, k_x2 = jax.random.split(key, 3)
    params = init_params(k_params)

    prep = prepare_operands(params, h=16, w=16)          # one-time weight prep
    fwd = jax.jit(autoencoder_forward, static_argnames=("block_b",))

    # small deterministic input consistent with Conv2d(2, ...): (batch=2, C=2, 16, 16)
    x = jax.random.normal(k_x1, (2, 2, 16, 16), jnp.float32)
    out = jax.block_until_ready(fwd(prep, x))
    assert out.shape == (2, 2, 16, 16), out.shape
    ref = jax.block_until_ready(reference_forward(params, x))
    np.testing.assert_allclose(np.asarray(out), np.asarray(ref), atol=2e-4, rtol=2e-4)

    # also exercise the batched multi-tile grid path (padding + >1 grid step)
    x_big = jax.random.normal(k_x2, (300, 2, 16, 16), jnp.float32)
    out_big = jax.block_until_ready(fwd(prep, x_big, block_b=128))
    assert out_big.shape == (300, 2, 16, 16), out_big.shape
    ref_big = jax.block_until_ready(reference_forward(params, x_big))
    np.testing.assert_allclose(np.asarray(out_big), np.asarray(ref_big), atol=5e-4, rtol=5e-4)

    print("KERNEL_OK")
</pallas_src>

<mosaic_0001>
module attributes {stable_mosaic.version = 11 : i64} {
  func.func @_autoencoder_kernel(%arg0: i32, %arg1: memref<8x512xf32, #tpu.memory_space<vmem>>, %arg2: memref<512x1024xf32, #tpu.memory_space<vmem>>, %arg3: memref<1x1024xf32, #tpu.memory_space<vmem>>, %arg4: memref<1024x512xf32, #tpu.memory_space<vmem>>, %arg5: memref<1x512xf32, #tpu.memory_space<vmem>>, %arg6: memref<512x1024xf32, #tpu.memory_space<vmem>>, %arg7: memref<1x1024xf32, #tpu.memory_space<vmem>>, %arg8: memref<1024x512xf32, #tpu.memory_space<vmem>>, %arg9: memref<1x512xf32, #tpu.memory_space<vmem>>, %arg10: memref<8x512xf32, #tpu.memory_space<vmem>>) attributes {dimension_semantics = [#tpu.dimension_semantics<parallel>], iteration_bounds = array<i64: 1>, scalar_prefetch = 0 : i64, scratch_operands = 0 : i64, tpu.core_type = #tpu.core_type<tc>, window_params = [{transform_indices = @transform_0, window_bounds = array<i64: 8, 512>}, {pipeline_mode = #tpu.pipeline_mode<synchronous>, transform_indices = @transform_1, window_bounds = array<i64: 512, 1024>}, {pipeline_mode = #tpu.pipeline_mode<synchronous>, transform_indices = @transform_2, window_bounds = array<i64: 1, 1024>}, {pipeline_mode = #tpu.pipeline_mode<synchronous>, transform_indices = @transform_3, window_bounds = array<i64: 1024, 512>}, {pipeline_mode = #tpu.pipeline_mode<synchronous>, transform_indices = @transform_4, window_bounds = array<i64: 1, 512>}, {pipeline_mode = #tpu.pipeline_mode<synchronous>, transform_indices = @transform_5, window_bounds = array<i64: 512, 1024>}, {pipeline_mode = #tpu.pipeline_mode<synchronous>, transform_indices = @transform_6, window_bounds = array<i64: 1, 1024>}, {pipeline_mode = #tpu.pipeline_mode<synchronous>, transform_indices = @transform_7, window_bounds = array<i64: 1024, 512>}, {pipeline_mode = #tpu.pipeline_mode<synchronous>, transform_indices = @transform_8, window_bounds = array<i64: 1, 512>}, {transform_indices = @transform_9, window_bounds = array<i64: 8, 512>}]} {
    %c0 = arith.constant 0 : index
    %c0_0 = arith.constant 0 : index
    %0 = vector.load %arg1[%c0, %c0_0] : memref<8x512xf32, #tpu.memory_space<vmem>>, vector<8x512xf32>
    %c0_1 = arith.constant 0 : index
    %c0_2 = arith.constant 0 : index
    %1 = vector.load %arg2[%c0_1, %c0_2] : memref<512x1024xf32, #tpu.memory_space<vmem>>, vector<512x1024xf32>
    %cst = arith.constant dense<0.000000e+00> : vector<8x1024xf32>
    %2 = tpu.matmul %0, %1, %cst {dimension_numbers = #tpu.dot_dimension_numbers<[1], [0], [0], [1], [0, 0, 1, 1], [], []>} : vector<8x512xf32>, vector<512x1024xf32>, vector<8x1024xf32> -> vector<8x1024xf32>
    %c0_3 = arith.constant 0 : index
    %c0_4 = arith.constant 0 : index
    %3 = vector.load %arg3[%c0_3, %c0_4] : memref<1x1024xf32, #tpu.memory_space<vmem>>, vector<1x1024xf32>
    %4 = vector.broadcast %3 : vector<1x1024xf32> to vector<8x1024xf32>
    %5 = arith.addf %2, %4 : vector<8x1024xf32>
    %cst_5 = arith.constant 0.000000e+00 : f32
    %6 = vector.broadcast %cst_5 : f32 to vector<8x1024xf32>
    %7 = arith.maximumf %5, %6 : vector<8x1024xf32>
    %c0_6 = arith.constant 0 : index
    %c0_7 = arith.constant 0 : index
    %8 = vector.load %arg4[%c0_6, %c0_7] : memref<1024x512xf32, #tpu.memory_space<vmem>>, vector<1024x512xf32>
    %cst_8 = arith.constant dense<0.000000e+00> : vector<8x512xf32>
    %9 = tpu.matmul %7, %8, %cst_8 {dimension_numbers = #tpu.dot_dimension_numbers<[1], [0], [0], [1], [0, 0, 1, 1], [], []>} : vector<8x1024xf32>, vector<1024x512xf32>, vector<8x512xf32> -> vector<8x512xf32>
    %c0_9 = arith.constant 0 : index
    %c0_10 = arith.constant 0 : index
    %10 = vector.load %arg5[%c0_9, %c0_10] : memref<1x512xf32, #tpu.memory_space<vmem>>, vector<1x512xf32>
    %11 = vector.broadcast %10 : vector<1x512xf32> to vector<8x512xf32>
    %12 = arith.addf %9, %11 : vector<8x512xf32>
    %cst_11 = arith.constant 0.000000e+00 : f32
    %13 = vector.broadcast %cst_11 : f32 to vector<8x512xf32>
    %14 = arith.maximumf %12, %13 : vector<8x512xf32>
    %c0_12 = arith.constant 0 : index
    %c0_13 = arith.constant 0 : index
    %15 = vector.load %arg6[%c0_12, %c0_13] : memref<512x1024xf32, #tpu.memory_space<vmem>>, vector<512x1024xf32>
    %cst_14 = arith.constant dense<0.000000e+00> : vector<8x1024xf32>
    %16 = tpu.matmul %14, %15, %cst_14 {dimension_numbers = #tpu.dot_dimension_numbers<[1], [0], [0], [1], [0, 0, 1, 1], [], []>} : vector<8x512xf32>, vector<512x1024xf32>, vector<8x1024xf32> -> vector<8x1024xf32>
    %c0_15 = arith.constant 0 : index
    %c0_16 = arith.constant 0 : index
    %17 = vector.load %arg7[%c0_15, %c0_16] : memref<1x1024xf32, #tpu.memory_space<vmem>>, vector<1x1024xf32>
    %18 = vector.broadcast %17 : vector<1x1024xf32> to vector<8x1024xf32>
    %19 = arith.addf %16, %18 : vector<8x1024xf32>
    %cst_17 = arith.constant 0.000000e+00 : f32
    %20 = vector.broadcast %cst_17 : f32 to vector<8x1024xf32>
    %21 = arith.maximumf %19, %20 : vector<8x1024xf32>
    %c0_18 = arith.constant 0 : index
    %c0_19 = arith.constant 0 : index
    %22 = vector.load %arg8[%c0_18, %c0_19] : memref<1024x512xf32, #tpu.memory_space<vmem>>, vector<1024x512xf32>
    %cst_20 = arith.constant dense<0.000000e+00> : vector<8x512xf32>
    %23 = tpu.matmul %21, %22, %cst_20 {dimension_numbers = #tpu.dot_dimension_numbers<[1], [0], [0], [1], [0, 0, 1, 1], [], []>} : vector<8x1024xf32>, vector<1024x512xf32>, vector<8x512xf32> -> vector<8x512xf32>
    %c0_21 = arith.constant 0 : index
    %c0_22 = arith.constant 0 : index
    %24 = vector.load %arg9[%c0_21, %c0_22] : memref<1x512xf32, #tpu.memory_space<vmem>>, vector<1x512xf32>
    %25 = vector.broadcast %24 : vector<1x512xf32> to vector<8x512xf32>
    %26 = arith.addf %23, %25 : vector<8x512xf32>
    %cst_23 = arith.constant 0.000000e+00 : f32
    %27 = vector.broadcast %cst_23 : f32 to vector<8x512xf32>
    %28 = arith.subf %27, %26 : vector<8x512xf32>
    %29 = math.exp %28 : vector<8x512xf32>
    %cst_24 = arith.constant 1.000000e+00 : f32
    %30 = vector.broadcast %cst_24 : f32 to vector<8x512xf32>
    %31 = arith.addf %30, %29 : vector<8x512xf32>
    %cst_25 = arith.constant 1.000000e+00 : f32
    %32 = vector.broadcast %cst_25 : f32 to vector<8x512xf32>
    %33 = arith.divf %32, %31 : vector<8x512xf32>
    %c0_26 = arith.constant 0 : index
    %c0_27 = arith.constant 0 : index
    %34 = vector.load %arg10[%c0_26, %c0_27] : memref<8x512xf32, #tpu.memory_space<vmem>>, vector<8x512xf32>
    tpu.vector_store %arg10[%c0_26, %c0_27], %33 {strides = array<i32>} : memref<8x512xf32, #tpu.memory_space<vmem>>, vector<8x512xf32>,
    return
  }
  func.func @transform_0(%arg0: i32) -> (i32, i32) {
    %c0_i32 = arith.constant 0 : i32
    %c0_i32_0 = arith.constant 0 : i32
    return %arg0, %c0_i32 : i32, i32
  }
  func.func @transform_1(%arg0: i32) -> (i32, i32) {
    %c0_i32 = arith.constant 0 : i32
    %c0_i32_0 = arith.constant 0 : i32
    %c0_i32_1 = arith.constant 0 : i32
    return %c0_i32, %c0_i32_0 : i32, i32
  }
  func.func @transform_2(%arg0: i32) -> (i32, i32) {
    %c0_i32 = arith.constant 0 : i32
    %c0_i32_0 = arith.constant 0 : i32
    %c0_i32_1 = arith.constant 0 : i32
    return %c0_i32, %c0_i32_0 : i32, i32
  }
  func.func @transform_3(%arg0: i32) -> (i32, i32) {
    %c0_i32 = arith.constant 0 : i32
    %c0_i32_0 = arith.constant 0 : i32
    %c0_i32_1 = arith.constant 0 : i32
    return %c0_i32, %c0_i32_0 : i32, i32
  }
  func.func @transform_4(%arg0: i32) -> (i32, i32) {
    %c0_i32 = arith.constant 0 : i32
    %c0_i32_0 = arith.constant 0 : i32
    %c0_i32_1 = arith.constant 0 : i32
    return %c0_i32, %c0_i32_0 : i32, i32
  }
  func.func @transform_5(%arg0: i32) -> (i32, i32) {
    %c0_i32 = arith.constant 0 : i32
    %c0_i32_0 = arith.constant 0 : i32
    %c0_i32_1 = arith.constant 0 : i32
    return %c0_i32, %c0_i32_0 : i32, i32
  }
  func.func @transform_6(%arg0: i32) -> (i32, i32) {
    %c0_i32 = arith.constant 0 : i32
    %c0_i32_0 = arith.constant 0 : i32
    %c0_i32_1 = arith.constant 0 : i32
    return %c0_i32, %c0_i32_0 : i32, i32
  }
  func.func @transform_7(%arg0: i32) -> (i32, i32) {
    %c0_i32 = arith.constant 0 : i32
    %c0_i32_0 = arith.constant 0 : i32
    %c0_i32_1 = arith.constant 0 : i32
    return %c0_i32, %c0_i32_0 : i32, i32
  }
  func.func @transform_8(%arg0: i32) -> (i32, i32) {
    %c0_i32 = arith.constant 0 : i32
    %c0_i32_0 = arith.constant 0 : i32
    %c0_i32_1 = arith.constant 0 : i32
    return %c0_i32, %c0_i32_0 : i32, i32
  }
  func.func @transform_9(%arg0: i32) -> (i32, i32) {
    %c0_i32 = arith.constant 0 : i32
    %c0_i32_0 = arith.constant 0 : i32
    return %arg0, %c0_i32 : i32, i32
  }
}

</mosaic_0001>

<llo_original>
// kernel: autoencoder_forward.1
$region0: #{autoencoder_forward.1}
  #allocation0 [shape = 'u32[]', space=smem, size = 0x4, offset = 0x4, fixed_abs, tag = 'smem constant byte address 0x4 - core index']
  #allocation1 [shape = 'u32[144,128]{1,0:T(1,128)}', space=vmem, size = 0x12000, scoped, tag = 'internal scratch']
  %s0 = inlined_call_operand.vmem [shape: f32[8,512], index: 0, kind: input, shape index: {}]
  %s1 = inlined_call_operand.hbm [shape: f32[512,1024], index: 1, kind: input, shape index: {}]
  %s2 = inlined_call_operand.hbm [shape: f32[1,1024], index: 2, kind: input, shape index: {}]
  %s3 = inlined_call_operand.hbm [shape: f32[1024,512], index: 3, kind: input, shape index: {}]
  %s4 = inlined_call_operand.hbm [shape: f32[1,512], index: 4, kind: input, shape index: {}]
  %s5 = inlined_call_operand.hbm [shape: f32[512,1024], index: 5, kind: input, shape index: {}]
  %s6 = inlined_call_operand.hbm [shape: f32[1,1024], index: 6, kind: input, shape index: {}]
  %s7 = inlined_call_operand.hbm [shape: f32[1024,512], index: 7, kind: input, shape index: {}]
  %s8 = inlined_call_operand.hbm [shape: f32[1,512], index: 8, kind: input, shape index: {}]
  %s9 = inlined_call_operand.vmem [shape: f32[8,512], index: 9, kind: output, shape index: {}]
  %s10 = sld [smem:[#allocation0]]
  $region78: #{autoencoder_forward.1} parent=0
    _
  %s12 = ssub.s32 1, %s10
  %s13 = scalar_select 0, %s12, %s10
  $region1: #{autoencoder_forward.1} parent=0
    #allocation2 [shape = 'u8[2097152]{0}', space=vmem, size = 0x200000, scoped, tag = 'input window, operand 1, single buffered']
    #allocation3 [shape = 's32[1]{0}', space=sflag, size = 0x4, scoped, tag = 'scoped memory for autoencoder_forward.1']
    #allocation4 [shape = 'u8[4096]{0}', space=vmem, size = 0x1000, scoped, tag = 'input window, operand 2, single buffered']
    #allocation5 [shape = 's32[1]{0}', space=sflag, size = 0x4, scoped, tag = 'scoped memory for autoencoder_forward.1']
    #allocation6 [shape = 'u8[2097152]{0}', space=vmem, size = 0x200000, scoped, tag = 'input window, operand 3, single buffered']
    #allocation7 [shape = 'u8[2048]{0}', space=vmem, size = 0x800, scoped, tag = 'input window, operand 4, single buffered']
    #allocation8 [shape = 's32[1]{0}', space=sflag, size = 0x4, scoped, tag = 'scoped memory for autoencoder_forward.1']
    #allocation9 [shape = 'u8[2097152]{0}', space=vmem, size = 0x200000, scoped, tag = 'input window, operand 5, single buffered']
    #allocation10 [shape = 'u8[4096]{0}', space=vmem, size = 0x1000, scoped, tag = 'input window, operand 6, single buffered']
    #allocation11 [shape = 's32[1]{0}', space=sflag, size = 0x4, scoped, tag = 'scoped memory for autoencoder_forward.1']
    #allocation12 [shape = 'u8[2097152]{0}', space=vmem, size = 0x200000, scoped, tag = 'input window, operand 7, single buffered']
    #allocation13 [shape = 'u8[2048]{0}', space=vmem, size = 0x800, scoped, tag = 'input window, operand 8, single buffered']
    #allocation14 [shape = 's32[1]{0}', space=sflag, size = 0x4, scoped, tag = 'scoped memory for autoencoder_forward.1']
    %14 = vsyncpa [#allocation3], 0
    %15 = vsyncpa [#allocation5], 0
    %16 = vsyncpa [#allocation8], 0
    %17 = vsyncpa [#allocation11], 0
    %18 = vsyncpa [#allocation14], 0
    // Predicated region
    $region2: #{autoencoder_forward.1} parent=1 // pred_check
      _
    $region3: #{autoencoder_forward.1} parent=1 // pred_check_branch
      %20 = sbr.rel (0) target = $region5
    $region4: #{autoencoder_forward.1} parent=1 // pred_region
      _
    $region5: #{autoencoder_forward.1} parent=1 // pred_fallthru
      _
    // Predicated region
    $region6: #{autoencoder_forward.1} parent=1 // pred_check
      _
    $region7: #{autoencoder_forward.1} parent=1 // pred_check_branch
      %22 = sbr.rel (0) target = $region9
    $region8: #{autoencoder_forward.1} parent=1 // pred_region
      %s24 = ssub.s32 65536, 65536
      %25 = vsyncadd [#allocation3], %s24
      %s26 = sshll.u32 [#allocation2], 4
      %s27 = int_to_ptr.vmem [resolvable:$true] %s26
      %32 = dma.hbm_to_vmem [thread:$0]  %s1, 65536, %s27, [#allocation3], 1024, 1024, 64
    $region9: #{autoencoder_forward.1} parent=1 // pred_fallthru
      _
    // Predicated region
    $region10: #{autoencoder_forward.1} parent=1 // pred_check
      _
    $region11: #{autoencoder_forward.1} parent=1 // pred_check_branch
      %34 = sbr.rel (0) target = $region13
    $region12: #{autoencoder_forward.1} parent=1 // pred_region
      %s36 = ssub.s32 128, 128
      %37 = vsyncadd [#allocation5], %s36
      %s39 = sshll.u32 [#allocation4], 4
      %s40 = int_to_ptr.vmem [resolvable:$true] %s39
      %42 = dma.hbm_to_vmem [thread:$0]  %s2, 128, %s40, [#allocation5]
    $region13: #{autoencoder_forward.1} parent=1 // pred_fallthru
      _
    // Predicated region
    $region14: #{autoencoder_forward.1} parent=1 // pred_check
      _
    $region15: #{autoencoder_forward.1} parent=1 // pred_check_branch
      %44 = sbr.rel (0) target = $region17
    $region16: #{autoencoder_forward.1} parent=1 // pred_region
      %s46 = ssub.s32 65536, 65536
      %47 = vsyncadd [#allocation5], %s46
      %s48 = sshll.u32 [#allocation6], 4
      %s49 = int_to_ptr.vmem [resolvable:$true] %s48
      %54 = dma.hbm_to_vmem [thread:$0]  %s3, 65536, %s49, [#allocation5], 512, 512, 32
    $region17: #{autoencoder_forward.1} parent=1 // pred_fallthru
      _
    // Predicated region
    $region18: #{autoencoder_forward.1} parent=1 // pred_check
      _
    $region19: #{autoencoder_forward.1} parent=1 // pred_check_branch
      %56 = sbr.rel (0) target = $region21
    $region20: #{autoencoder_forward.1} parent=1 // pred_region
      %s58 = ssub.s32 64, 64
      %59 = vsyncadd [#allocation8], %s58
      %s61 = sshll.u32 [#allocation7], 4
      %s62 = int_to_ptr.vmem [resolvable:$true] %s61
      %64 = dma.hbm_to_vmem [thread:$0]  %s4, 64, %s62, [#allocation8]
    $region21: #{autoencoder_forward.1} parent=1 // pred_fallthru
      _
    // Predicated region
    $region22: #{autoencoder_forward.1} parent=1 // pred_check
      _
    $region23: #{autoencoder_forward.1} parent=1 // pred_check_branch
      %66 = sbr.rel (0) target = $region25
    $region24: #{autoencoder_forward.1} parent=1 // pred_region
      %s68 = ssub.s32 65536, 65536
      %69 = vsyncadd [#allocation8], %s68
      %s70 = sshll.u32 [#allocation9], 4
      %s71 = int_to_ptr.vmem [resolvable:$true] %s70
      %76 = dma.hbm_to_vmem [thread:$0]  %s5, 65536, %s71, [#allocation8], 1024, 1024, 64
    $region25: #{autoencoder_forward.1} parent=1 // pred_fallthru
      _
    // Predicated region
    $region26: #{autoencoder_forward.1} parent=1 // pred_check
      _
    $region27: #{autoencoder_forward.1} parent=1 // pred_check_branch
      %78 = sbr.rel (0) target = $region29
    $region28: #{autoencoder_forward.1} parent=1 // pred_region
      %s80 = ssub.s32 128, 128
      %81 = vsyncadd [#allocation11], %s80
      %s83 = sshll.u32 [#allocation10], 4
      %s84 = int_to_ptr.vmem [resolvable:$true] %s83
      %86 = dma.hbm_to_vmem [thread:$0]  %s6, 128, %s84, [#allocation11]
    $region29: #{autoencoder_forward.1} parent=1 // pred_fallthru
      _
    // Predicated region
    $region30: #{autoencoder_forward.1} parent=1 // pred_check
      _
    $region31: #{autoencoder_forward.1} parent=1 // pred_check_branch
      %88 = sbr.rel (0) target = $region33
    $region32: #{autoencoder_forward.1} parent=1 // pred_region
      %s90 = ssub.s32 65536, 65536
      %91 = vsyncadd [#allocation11], %s90
      %s92 = sshll.u32 [#allocation12], 4
      %s93 = int_to_ptr.vmem [resolvable:$true] %s92
      %98 = dma.hbm_to_vmem [thread:$0]  %s7, 65536, %s93, [#allocation11], 512, 512, 32
    $region33: #{autoencoder_forward.1} parent=1 // pred_fallthru
      _
    // Predicated region
    $region34: #{autoencoder_forward.1} parent=1 // pred_check
      _
    $region35: #{autoencoder_forward.1} parent=1 // pred_check_branch
      %100 = sbr.rel (0) target = $region37
    $region36: #{autoencoder_forward.1} parent=1 // pred_region
      %s102 = ssub.s32 64, 64
      %103 = vsyncadd [#allocation14], %s102
      %s105 = sshll.u32 [#allocation13], 4
      %s106 = int_to_ptr.vmem [resolvable:$true] %s105
      %108 = dma.hbm_to_vmem [thread:$0]  %s8, 64, %s106, [#allocation14]
    $region37: #{autoencoder_forward.1} parent=1 // pred_fallthru
      _
    // Predicated region
    $region38: #{autoencoder_forward.1} parent=1 // pred_check
      _
    $region39: #{autoencoder_forward.1} parent=1 // pred_check_branch
      %110 = sbr.rel (0) target = $region41
    $region40: #{autoencoder_forward.1} parent=1 // pred_region
      %111 = dma.done [#allocation3], 65536
    $region41: #{autoencoder_forward.1} parent=1 // pred_fallthru
      _
    // Predicated region
    $region42: #{autoencoder_forward.1} parent=1 // pred_check
      _
    $region43: #{autoencoder_forward.1} parent=1 // pred_check_branch
      %113 = sbr.rel (0) target = $region45
    $region44: #{autoencoder_forward.1} parent=1 // pred_region
      %114 = dma.done [#allocation5], 128
    $region45: #{autoencoder_forward.1} parent=1 // pred_fallthru
      _
    // Predicated region
    $region46: #{autoencoder_forward.1} parent=1 // pred_check
      _
    $region47: #{autoencoder_forward.1} parent=1 // pred_check_branch
      %116 = sbr.rel (0) target = $region49
    $region48: #{autoencoder_forward.1} parent=1 // pred_region
      %117 = dma.done [#allocation5], 65536
    $region49: #{autoencoder_forward.1} parent=1 // pred_fallthru
      _
    // Predicated region
    $region50: #{autoencoder_forward.1} parent=1 // pred_check
      _
    $region51: #{autoencoder_forward.1} parent=1 // pred_check_branch
      %119 = sbr.rel (0) target = $region53
    $region52: #{autoencoder_forward.1} parent=1 // pred_region
      %120 = dma.done [#allocation8], 64
    $region53: #{autoencoder_forward.1} parent=1 // pred_fallthru
      _
    // Predicated region
    $region54: #{autoencoder_forward.1} parent=1 // pred_check
      _
    $region55: #{autoencoder_forward.1} parent=1 // pred_check_branch
      %122 = sbr.rel (0) target = $region57
    $region56: #{autoencoder_forward.1} parent=1 // pred_region
      %123 = dma.done [#allocation8], 65536
    $region57: #{autoencoder_forward.1} parent=1 // pred_fallthru
      _
    // Predicated region
    $region58: #{autoencoder_forward.1} parent=1 // pred_check
      _
    $region59: #{autoencoder_forward.1} parent=1 // pred_check_branch
      %125 = sbr.rel (0) target = $region61
    $region60: #{autoencoder_forward.1} parent=1 // pred_region
      %126 = dma.done [#allocation11], 128
    $region61: #{autoencoder_forward.1} parent=1 // pred_fallthru
      _
    // Predicated region
    $region62: #{autoencoder_forward.1} parent=1 // pred_check
      _
    $region63: #{autoencoder_forward.1} parent=1 // pred_check_branch
      %128 = sbr.rel (0) target = $region65
    $region64: #{autoencoder_forward.1} parent=1 // pred_region
      %129 = dma.done [#allocation11], 65536
    $region65: #{autoencoder_forward.1} parent=1 // pred_fallthru
      _
    // Predicated region
    $region66: #{autoencoder_forward.1} parent=1 // pred_check
      _
    $region67: #{autoencoder_forward.1} parent=1 // pred_check_branch
      %131 = sbr.rel (0) target = $region69
    $region68: #{autoencoder_forward.1} parent=1 // pred_region
      %132 = dma.done [#allocation14], 64
    $region69: #{autoencoder_forward.1} parent=1 // pred_fallthru
      _
    %v133 = vld [vmem:[%s0] sm:$0xff]
    %v134 = vld [vmem:[%s0 + $0x8] sm:$0xff]
    %v135 = vld [vmem:[%s0 + $0x10] sm:$0xff]
    %v136 = vld [vmem:[%s0 + $0x18] sm:$0xff]
    %v137 = vld [vmem:[#allocation2] sm:$0xff]
    %v138 = vld [vmem:[#allocation2 + $0x8] sm:$0xff]
    %v139 = vld [vmem:[#allocation2 + $0x10] sm:$0xff]
    %v140 = vld [vmem:[#allocation2 + $0x18] sm:$0xff]
    %v141 = vld [vmem:[#allocation2 + $0x20] sm:$0xff]
    %v142 = vld [vmem:[#allocation2 + $0x28] sm:$0xff]
    %v143 = vld [vmem:[#allocation2 + $0x30] sm:$0xff]
    %v144 = vld [vmem:[#allocation2 + $0x38] sm:$0xff]
    %v145 = vld [vmem:[#allocation2 + $0x40] sm:$0xff]
    %v146 = vld [vmem:[#allocation2 + $0x48] sm:$0xff]
    %v147 = vld [vmem:[#allocation2 + $0x50] sm:$0xff]
    %v148 = vld [vmem:[#allocation2 + $0x58] sm:$0xff]
    %v149 = vld [vmem:[#allocation2 + $0x60] sm:$0xff]
    %v150 = vld [vmem:[#allocation2 + $0x68] sm:$0xff]
    %v151 = vld [vmem:[#allocation2 + $0x70] sm:$0xff]
    %v152 = vld [vmem:[#allocation2 + $0x78] sm:$0xff]
    %v153 = vld [vmem:[#allocation2 + $0x80] sm:$0xff]
    %v154 = vld [vmem:[#allocation2 + $0x88] sm:$0xff]
    %v155 = vld [vmem:[#allocation2 + $0x90] sm:$0xff]
    %v156 = vld [vmem:[#allocation2 + $0x98] sm:$0xff]
    %v157 = vld [vmem:[#allocation2 + $0xa0] sm:$0xff]
    %v158 = vld [vmem:[#allocation2 + $0xa8] sm:$0xff]
    %v159 = vld [vmem:[#allocation2 + $0xb0] sm:$0xff]
    %v160 = vld [vmem:[#allocation2 + $0xb8] sm:$0xff]
    %v161 = vld [vmem:[#allocation2 + $0xc0] sm:$0xff]
    %v162 = vld [vmem:[#allocation2 + $0xc8] sm:$0xff]
    %v163 = vld [vmem:[#allocation2 + $0xd0] sm:$0xff]
    %v164 = vld [vmem:[#allocation2 + $0xd8] sm:$0xff]
    %v165 = vld [vmem:[#allocation2 + $0xe0] sm:$0xff]
    %v166 = vld [vmem:[#allocation2 + $0xe8] sm:$0xff]
    %v167 = vld [vmem:[#allocation2 + $0xf0] sm:$0xff]
    %v168 = vld [vmem:[#allocation2 + $0xf8] sm:$0xff]
    %v169 = vld [vmem:[#allocation2 + $0x100] sm:$0xff]
    %v170 = vld [vmem:[#allocation2 + $0x108] sm:$0xff]
    %v171 = vld [vmem:[#allocation2 + $0x110] sm:$0xff]
    %v172 = vld [vmem:[#allocation2 + $0x118] sm:$0xff]
    %v173 = vld [vmem:[#allocation2 + $0x120] sm:$0xff]
    %v174 = vld [vmem:[#allocation2 + $0x128] sm:$0xff]
    %v175 = vld [vmem:[#allocation2 + $0x130] sm:$0xff]
    %v176 = vld [vmem:[#allocation2 + $0x138] sm:$0xff]
    %v177 = vld [vmem:[#allocation2 + $0x140] sm:$0xff]
    %v178 = vld [vmem:[#allocation2 + $0x148] sm:$0xff]
    %v179 = vld [vmem:[#allocation2 + $0x150] sm:$0xff]
    %v180 = vld [vmem:[#allocation2 + $0x158] sm:$0xff]
    %v181 = vld [vmem:[#allocation2 + $0x160] sm:$0xff]
    %v182 = vld [vmem:[#allocation2 + $0x168] sm:$0xff]
    %v183 = vld [vmem:[#allocation2 + $0x170] sm:$0xff]
    %v184 = vld [vmem:[#allocation2 + $0x178] sm:$0xff]
    %v185 = vld [vmem:[#allocation2 + $0x180] sm:$0xff]
    %v186 = vld [vmem:[#allocation2 + $0x188] sm:$0xff]
    %v187 = vld [vmem:[#allocation2 + $0x190] sm:$0xff]
    %v188 = vld [vmem:[#allocation2 + $0x198] sm:$0xff]
    %v189 = vld [vmem:[#allocation2 + $0x1a0] sm:$0xff]
    %v190 = vld [vmem:[#allocation2 + $0x1a8] sm:$0xff]
    %v191 = vld [vmem:[#allocation2 + $0x1b0] sm:$0xff]
    %v192 = vld [vmem:[#allocation2 + $0x1b8] sm:$0xff]
    %v193 = vld [vmem:[#allocation2 + $0x1c0] sm:$0xff]
    %v194 = vld [vmem:[#allocation2 + $0x1c8] sm:$0xff]
    %v195 = vld [vmem:[#allocation2 + $0x1d0] sm:$0xff]
    %v196 = vld [vmem:[#allocation2 + $0x1d8] sm:$0xff]
    %v197 = vld [vmem:[#allocation2 + $0x1e0] sm:$0xff]
    %v198 = vld [vmem:[#allocation2 + $0x1e8] sm:$0xff]
    %v199 = vld [vmem:[#allocation2 + $0x1f0] sm:$0xff]
    %v200 = vld [vmem:[#allocation2 + $0x1f8] sm:$0xff]
    %v201 = vld [vmem:[#allocation2 + $0x200] sm:$0xff]
    %v202 = vld [vmem:[#allocation2 + $0x208] sm:$0xff]
    %v203 = vld [vmem:[#allocation2 + $0x210] sm:$0xff]
    %v204 = vld [vmem:[#allocation2 + $0x218] sm:$0xff]
    %v205 = vld [vmem:[#allocation2 + $0x220] sm:$0xff]
    %v206 = vld [vmem:[#allocation2 + $0x228] sm:$0xff]
    %v207 = vld [vmem:[#allocation2 + $0x230] sm:$0xff]
    %v208 = vld [vmem:[#allocation2 + $0x238] sm:$0xff]
    %v209 = vld [vmem:[#allocation2 + $0x240] sm:$0xff]
    %v210 = vld [vmem:[#allocation2 + $0x248] sm:$0xff]
    %v211 = vld [vmem:[#allocation2 + $0x250] sm:$0xff]
    %v212 = vld [vmem:[#allocation2 + $0x258] sm:$0xff]
    %v213 = vld [vmem:[#allocation2 + $0x260] sm:$0xff]
    %v214 = vld [vmem:[#allocation2 + $0x268] sm:$0xff]
    %v215 = vld [vmem:[#allocation2 + $0x270] sm:$0xff]
    %v216 = vld [vmem:[#allocation2 + $0x278] sm:$0xff]
    %v217 = vld [vmem:[#allocation2 + $0x280] sm:$0xff]
    %v218 = vld [vmem:[#allocation2 + $0x288] sm:$0xff]
    %v219 = vld [vmem:[#allocation2 + $0x290] sm:$0xff]
    %v220 = vld [vmem:[#allocation2 + $0x298] sm:$0xff]
    %v221 = vld [vmem:[#allocation2 + $0x2a0] sm:$0xff]
    %v222 = vld [vmem:[#allocation2 + $0x2a8] sm:$0xff]
    %v223 = vld [vmem:[#allocation2 + $0x2b0] sm:$0xff]
    %v224 = vld [vmem:[#allocation2 + $0x2b8] sm:$0xff]
    %v225 = vld [vmem:[#allocation2 + $0x2c0] sm:$0xff]
    %v226 = vld [vmem:[#allocation2 + $0x2c8] sm:$0xff]
    %v227 = vld [vmem:[#allocation2 + $0x2d0] sm:$0xff]
    %v228 = vld [vmem:[#allocation2 + $0x2d8] sm:$0xff]
    %v229 = vld [vmem:[#allocation2 + $0x2e0] sm:$0xff]
    %v230 = vld [vmem:[#allocation2 + $0x2e8] sm:$0xff]
    %v231 = vld [vmem:[#allocation2 + $0x2f0] sm:$0xff]
    %v232 = vld [vmem:[#allocation2 + $0x2f8] sm:$0xff]
    %v233 = vld [vmem:[#allocation2 + $0x300] sm:$0xff]
    %v234 = vld [vmem:[#allocation2 + $0x308] sm:$0xff]
    %v235 = vld [vmem:[#allocation2 + $0x310] sm:$0xff]
    %v236 = vld [vmem:[#allocation2 + $0x318] sm:$0xff]
    %v237 = vld [vmem:[#allocation2 + $0x320] sm:$0xff]
    %v238 = vld [vmem:[#allocation2 + $0x328] sm:$0xff]
    %v239 = vld [vmem:[#allocation2 + $0x330] sm:$0xff]
    %v240 = vld [vmem:[#allocation2 + $0x338] sm:$0xff]
    %v241 = vld [vmem:[#allocation2 + $0x340] sm:$0xff]
    %v242 = vld [vmem:[#allocation2 + $0x348] sm:$0xff]
    %v243 = vld [vmem:[#allocation2 + $0x350] sm:$0xff]
    %v244 = vld [vmem:[#allocation2 + $0x358] sm:$0xff]
    %v245 = vld [vmem:[#allocation2 + $0x360] sm:$0xff]
    %v246 = vld [vmem:[#allocation2 + $0x368] sm:$0xff]
    %v247 = vld [vmem:[#allocation2 + $0x370] sm:$0xff]
    %v248 = vld [vmem:[#allocation2 + $0x378] sm:$0xff]
    %v249 = vld [vmem:[#allocation2 + $0x380] sm:$0xff]
    %v250 = vld [vmem:[#allocation2 + $0x388] sm:$0xff]
    %v251 = vld [vmem:[#allocation2 + $0x390] sm:$0xff]
    %v252 = vld [vmem:[#allocation2 + $0x398] sm:$0xff]
    %v253 = vld [vmem:[#allocation2 + $0x3a0] sm:$0xff]
    %v254 = vld [vmem:[#allocation2 + $0x3a8] sm:$0xff]
    %v255 = vld [vmem:[#allocation2 + $0x3b0] sm:$0xff]
    %v256 = vld [vmem:[#allocation2 + $0x3b8] sm:$0xff]
    %v257 = vld [vmem:[#allocation2 + $0x3c0] sm:$0xff]
    %v258 = vld [vmem:[#allocation2 + $0x3c8] sm:$0xff]
    %v259 = vld [vmem:[#allocation2 + $0x3d0] sm:$0xff]
    %v260 = vld [vmem:[#allocation2 + $0x3d8] sm:$0xff]
    %v261 = vld [vmem:[#allocation2 + $0x3e0] sm:$0xff]
    %v262 = vld [vmem:[#allocation2 + $0x3e8] sm:$0xff]
    %v263 = vld [vmem:[#allocation2 + $0x3f0] sm:$0xff]
    %v264 = vld [vmem:[#allocation2 + $0x3f8] sm:$0xff]
    %v265 = vld [vmem:[#allocation2 + $0x400] sm:$0xff]
    %v266 = vld [vmem:[#allocation2 + $0x408] sm:$0xff]
    %v267 = vld [vmem:[#allocation2 + $0x410] sm:$0xff]
    %v268 = vld [vmem:[#allocation2 + $0x418] sm:$0xff]
    %v269 = vld [vmem:[#allocation2 + $0x420] sm:$0xff]
    %v270 = vld [vmem:[#allocation2 + $0x428] sm:$0xff]
    %v271 = vld [vmem:[#allocation2 + $0x430] sm:$0xff]
    %v272 = vld [vmem:[#allocation2 + $0x438] sm:$0xff]
    %v273 = vld [vmem:[#allocation2 + $0x440] sm:$0xff]
    %v274 = vld [vmem:[#allocation2 + $0x448] sm:$0xff]
    %v275 = vld [vmem:[#allocation2 + $0x450] sm:$0xff]
    %v276 = vld [vmem:[#allocation2 + $0x458] sm:$0xff]
    %v277 = vld [vmem:[#allocation2 + $0x460] sm:$0xff]
    %v278 = vld [vmem:[#allocation2 + $0x468] sm:$0xff]
    %v279 = vld [vmem:[#allocation2 + $0x470] sm:$0xff]
    %v280 = vld [vmem:[#allocation2 + $0x478] sm:$0xff]
    %v281 = vld [vmem:[#allocation2 + $0x480] sm:$0xff]
    %v282 = vld [vmem:[#allocation2 + $0x488] sm:$0xff]
    %v283 = vld [vmem:[#allocation2 + $0x490] sm:$0xff]
    %v284 = vld [vmem:[#allocation2 + $0x498] sm:$0xff]
    %v285 = vld [vmem:[#allocation2 + $0x4a0] sm:$0xff]
    %v286 = vld [vmem:[#allocation2 + $0x4a8] sm:$0xff]
    %v287 = vld [vmem:[#allocation2 + $0x4b0] sm:$0xff]
    %v288 = vld [vmem:[#allocation2 + $0x4b8] sm:$0xff]
    %v289 = vld [vmem:[#allocation2 + $0x4c0] sm:$0xff]
    %v290 = vld [vmem:[#allocation2 + $0x4c8] sm:$0xff]
    %v291 = vld [vmem:[#allocation2 + $0x4d0] sm:$0xff]
    %v292 = vld [vmem:[#allocation2 + $0x4d8] sm:$0xff]
    %v293 = vld [vmem:[#allocation2 + $0x4e0] sm:$0xff]
    %v294 = vld [vmem:[#allocation2 + $0x4e8] sm:$0xff]
    %v295 = vld [vmem:[#allocation2 + $0x4f0] sm:$0xff]
    %v296 = vld [vmem:[#allocation2 + $0x4f8] sm:$0xff]
    %v297 = vld [vmem:[#allocation2 + $0x500] sm:$0xff]
    %v298 = vld [vmem:[#allocation2 + $0x508] sm:$0xff]
    %v299 = vld [vmem:[#allocation2 + $0x510] sm:$0xff]
    %v300 = vld [vmem:[#allocation2 + $0x518] sm:$0xff]
    %v301 = vld [vmem:[#allocation2 + $0x520] sm:$0xff]
    %v302 = vld [vmem:[#allocation2 + $0x528] sm:$0xff]
    %v303 = vld [vmem:[#allocation2 + $0x530] sm:$0xff]
    %v304 = vld [vmem:[#allocation2 + $0x538] sm:$0xff]
    %v305 = vld [vmem:[#allocation2 + $0x540] sm:$0xff]
    %v306 = vld [vmem:[#allocation2 + $0x548] sm:$0xff]
    %v307 = vld [vmem:[#allocation2 + $0x550] sm:$0xff]
    %v308 = vld [vmem:[#allocation2 + $0x558] sm:$0xff]
    %v309 = vld [vmem:[#allocation2 + $0x560] sm:$0xff]
    %v310 = vld [vmem:[#allocation2 + $0x568] sm:$0xff]
    %v311 = vld [vmem:[#allocation2 + $0x570] sm:$0xff]
    %v312 = vld [vmem:[#allocation2 + $0x578] sm:$0xff]
    %v313 = vld [vmem:[#allocation2 + $0x580] sm:$0xff]
    %v314 = vld [vmem:[#allocation2 + $0x588] sm:$0xff]
    %v315 = vld [vmem:[#allocation2 + $0x590] sm:$0xff]
    %v316 = vld [vmem:[#allocation2 + $0x598] sm:$0xff]
    %v317 = vld [vmem:[#allocation2 + $0x5a0] sm:$0xff]
    %v318 = vld [vmem:[#allocation2 + $0x5a8] sm:$0xff]
    %v319 = vld [vmem:[#allocation2 + $0x5b0] sm:$0xff]
    %v320 = vld [vmem:[#allocation2 + $0x5b8] sm:$0xff]
    %v321 = vld [vmem:[#allocation2 + $0x5c0] sm:$0xff]
    %v322 = vld [vmem:[#allocation2 + $0x5c8] sm:$0xff]
    %v323 = vld [vmem:[#allocation2 + $0x5d0] sm:$0xff]
    %v324 = vld [vmem:[#allocation2 + $0x5d8] sm:$0xff]
    %v325 = vld [vmem:[#allocation2 + $0x5e0] sm:$0xff]
    %v326 = vld [vmem:[#allocation2 + $0x5e8] sm:$0xff]
    %v327 = vld [vmem:[#allocation2 + $0x5f0] sm:$0xff]
    %v328 = vld [vmem:[#allocation2 + $0x5f8] sm:$0xff]
    %v329 = vld [vmem:[#allocation2 + $0x600] sm:$0xff]
    %v330 = vld [vmem:[#allocation2 + $0x608] sm:$0xff]
    %v331 = vld [vmem:[#allocation2 + $0x610] sm:$0xff]
    %v332 = vld [vmem:[#allocation2 + $0x618] sm:$0xff]
    %v333 = vld [vmem:[#allocation2 + $0x620] sm:$0xff]
    %v334 = vld [vmem:[#allocation2 + $0x628] sm:$0xff]
    %v335 = vld [vmem:[#allocation2 + $0x630] sm:$0xff]
    %v336 = vld [vmem:[#allocation2 + $0x638] sm:$0xff]
    %v337 = vld [vmem:[#allocation2 + $0x640] sm:$0xff]
    %v338 = vld [vmem:[#allocation2 + $0x648] sm:$0xff]
    %v339 = vld [vmem:[#allocation2 + $0x650] sm:$0xff]
    %v340 = vld [vmem:[#allocation2 + $0x658] sm:$0xff]
    %v341 = vld [vmem:[#allocation2 + $0x660] sm:$0xff]
    %v342 = vld [vmem:[#allocation2 + $0x668] sm:$0xff]
    %v343 = vld [vmem:[#allocation2 + $0x670] sm:$0xff]
    %v344 = vld [vmem:[#allocation2 + $0x678] sm:$0xff]
    %v345 = vld [vmem:[#allocation2 + $0x680] sm:$0xff]
    %v346 = vld [vmem:[#allocation2 + $0x688] sm:$0xff]
    %v347 = vld [vmem:[#allocation2 + $0x690] sm:$0xff]
    %v348 = vld [vmem:[#allocation2 + $0x698] sm:$0xff]
    %v349 = vld [vmem:[#allocation2 + $0x6a0] sm:$0xff]
    %v350 = vld [vmem:[#allocation2 + $0x6a8] sm:$0xff]
    %v351 = vld [vmem:[#allocation2 + $0x6b0] sm:$0xff]
    %v352 = vld [vmem:[#allocation2 + $0x6b8] sm:$0xff]
    %v353 = vld [vmem:[#allocation2 + $0x6c0] sm:$0xff]
    %v354 = vld [vmem:[#allocation2 + $0x6c8] sm:$0xff]
    %v355 = vld [vmem:[#allocation2 + $0x6d0] sm:$0xff]
    %v356 = vld [vmem:[#allocation2 + $0x6d8] sm:$0xff]
    %v357 = vld [vmem:[#allocation2 + $0x6e0] sm:$0xff]
    %v358 = vld [vmem:[#allocation2 + $0x6e8] sm:$0xff]
    %v359 = vld [vmem:[#allocation2 + $0x6f0] sm:$0xff]
    %v360 = vld [vmem:[#allocation2 + $0x6f8] sm:$0xff]
    %v361 = vld [vmem:[#allocation2 + $0x700] sm:$0xff]
    %v362 = vld [vmem:[#allocation2 + $0x708] sm:$0xff]
    %v363 = vld [vmem:[#allocation2 + $0x710] sm:$0xff]
    %v364 = vld [vmem:[#allocation2 + $0x718] sm:$0xff]
    %v365 = vld [vmem:[#allocation2 + $0x720] sm:$0xff]
    %v366 = vld [vmem:[#allocation2 + $0x728] sm:$0xff]
    %v367 = vld [vmem:[#allocation2 + $0x730] sm:$0xff]
    %v368 = vld [vmem:[#allocation2 + $0x738] sm:$0xff]
    %v369 = vld [vmem:[#allocation2 + $0x740] sm:$0xff]
    %v370 = vld [vmem:[#allocation2 + $0x748] sm:$0xff]
    %v371 = vld [vmem:[#allocation2 + $0x750] sm:$0xff]
    %v372 = vld [vmem:[#allocation2 + $0x758] sm:$0xff]
    %v373 = vld [vmem:[#allocation2 + $0x760] sm:$0xff]
    %v374 = vld [vmem:[#allocation2 + $0x768] sm:$0xff]
    %v375 = vld [vmem:[#allocation2 + $0x770] sm:$0xff]
    %v376 = vld [vmem:[#allocation2 + $0x778] sm:$0xff]
    %v377 = vld [vmem:[#allocation2 + $0x780] sm:$0xff]
    %v378 = vld [vmem:[#allocation2 + $0x788] sm:$0xff]
    %v379 = vld [vmem:[#allocation2 + $0x790] sm:$0xff]
    %v380 = vld [vmem:[#allocation2 + $0x798] sm:$0xff]
    %v381 = vld [vmem:[#allocation2 + $0x7a0] sm:$0xff]
    %v382 = vld [vmem:[#allocation2 + $0x7a8] sm:$0xff]
    %v383 = vld [vmem:[#allocation2 + $0x7b0] sm:$0xff]
    %v384 = vld [vmem:[#allocation2 + $0x7b8] sm:$0xff]
    %v385 = vld [vmem:[#allocation2 + $0x7c0] sm:$0xff]
    %v386 = vld [vmem:[#allocation2 + $0x7c8] sm:$0xff]
    %v387 = vld [vmem:[#allocation2 + $0x7d0] sm:$0xff]
    %v388 = vld [vmem:[#allocation2 + $0x7d8] sm:$0xff]
    %v389 = vld [vmem:[#allocation2 + $0x7e0] sm:$0xff]
    %v390 = vld [vmem:[#allocation2 + $0x7e8] sm:$0xff]
    %v391 = vld [vmem:[#allocation2 + $0x7f0] sm:$0xff]
    %v392 = vld [vmem:[#allocation2 + $0x7f8] sm:$0xff]
    %v393 = vld [vmem:[#allocation2 + $0x800] sm:$0xff]
    %v394 = vld [vmem:[#allocation2 + $0x808] sm:$0xff]
    %v395 = vld [vmem:[#allocation2 + $0x810] sm:$0xff]
    %v396 = vld [vmem:[#allocation2 + $0x818] sm:$0xff]
    %v397 = vld [vmem:[#allocation2 + $0x820] sm:$0xff]
    %v398 = vld [vmem:[#allocation2 + $0x828] sm:$0xff]
    %v399 = vld [vmem:[#allocation2 + $0x830] sm:$0xff]
    %v400 = vld [vmem:[#allocation2 + $0x838] sm:$0xff]
    %v401 = vld [vmem:[#allocation2 + $0x840] sm:$0xff]
    %v402 = vld [vmem:[#allocation2 + $0x848] sm:$0xff]
    %v403 = vld [vmem:[#allocation2 + $0x850] sm:$0xff]
    %v404 = vld [vmem:[#allocation2 + $0x858] sm:$0xff]
    %v405 = vld [vmem:[#allocation2 + $0x860] sm:$0xff]
    %v406 = vld [vmem:[#allocation2 + $0x868] sm:$0xff]
    %v407 = vld [vmem:[#allocation2 + $0x870] sm:$0xff]
    %v408 = vld [vmem:[#allocation2 + $0x878] sm:$0xff]
    %v409 = vld [vmem:[#allocation2 + $0x880] sm:$0xff]
    %v410 = vld [vmem:[#allocation2 + $0x888] sm:$0xff]
    %v411 = vld [vmem:[#allocation2 + $0x890] sm:$0xff]
    %v412 = vld [vmem:[#allocation2 + $0x898] sm:$0xff]
    %v413 = vld [vmem:[#allocation2 + $0x8a0] sm:$0xff]
    %v414 = vld [vmem:[#allocation2 + $0x8a8] sm:$0xff]
    %v415 = vld [vmem:[#allocation2 + $0x8b0] sm:$0xff]
    %v416 = vld [vmem:[#allocation2 + $0x8b8] sm:$0xff]
    %v417 = vld [vmem:[#allocation2 + $0x8c0] sm:$0xff]
    %v418 = vld [vmem:[#allocation2 + $0x8c8] sm:$0xff]
    %v419 = vld [vmem:[#allocation2 + $0x8d0] sm:$0xff]
    %v420 = vld [vmem:[#allocation2 + $0x8d8] sm:$0xff]
    %v421 = vld [vmem:[#allocation2 + $0x8e0] sm:$0xff]
    %v422 = vld [vmem:[#allocation2 + $0x8e8] sm:$0xff]
    %v423 = vld [vmem:[#allocation2 + $0x8f0] sm:$0xff]
    %v424 = vld [vmem:[#allocation2 + $0x8f8] sm:$0xff]
    %v425 = vld [vmem:[#allocation2 + $0x900] sm:$0xff]
    %v426 = vld [vmem:[#allocation2 + $0x908] sm:$0xff]
    %v427 = vld [vmem:[#allocation2 + $0x910] sm:$0xff]
    %v428 = vld [vmem:[#allocation2 + $0x918] sm:$0xff]
    %v429 = vld [vmem:[#allocation2 + $0x920] sm:$0xff]
    %v430 = vld [vmem:[#allocation2 + $0x928] sm:$0xff]
    %v431 = vld [vmem:[#allocation2 + $0x930] sm:$0xff]
    %v432 = vld [vmem:[#allocation2 + $0x938] sm:$0xff]
    %v433 = vld [vmem:[#allocation2 + $0x940] sm:$0xff]
    %v434 = vld [vmem:[#allocation2 + $0x948] sm:$0xff]
    %v435 = vld [vmem:[#allocation2 + $0x950] sm:$0xff]
    %v436 = vld [vmem:[#allocation2 + $0x958] sm:$0xff]
    %v437 = vld [vmem:[#allocation2 + $0x960] sm:$0xff]
    %v438 = vld [vmem:[#allocation2 + $0x968] sm:$0xff]
    %v439 = vld [vmem:[#allocation2 + $0x970] sm:$0xff]
    %v440 = vld [vmem:[#allocation2 + $0x978] sm:$0xff]
    %v441 = vld [vmem:[#allocation2 + $0x980] sm:$0xff]
    %v442 = vld [vmem:[#allocation2 + $0x988] sm:$0xff]
    %v443 = vld [vmem:[#allocation2 + $0x990] sm:$0xff]
    %v444 = vld [vmem:[#allocation2 + $0x998] sm:$0xff]
    %v445 = vld [vmem:[#allocation2 + $0x9a0] sm:$0xff]
    %v446 = vld [vmem:[#allocation2 + $0x9a8] sm:$0xff]
    %v447 = vld [vmem:[#allocation2 + $0x9b0] sm:$0xff]
    %v448 = vld [vmem:[#allocation2 + $0x9b8] sm:$0xff]
    %v449 = vld [vmem:[#allocation2 + $0x9c0] sm:$0xff]
    %v450 = vld [vmem:[#allocation2 + $0x9c8] sm:$0xff]
    %v451 = vld [vmem:[#allocation2 + $0x9d0] sm:$0xff]
    %v452 = vld [vmem:[#allocation2 + $0x9d8] sm:$0xff]
    %v453 = vld [vmem:[#allocation2 + $0x9e0] sm:$0xff]
    %v454 = vld [vmem:[#allocation2 + $0x9e8] sm:$0xff]
    %v455 = vld [vmem:[#allocation2 + $0x9f0] sm:$0xff]
    %v456 = vld [vmem:[#allocation2 + $0x9f8] sm:$0xff]
    %v457 = vld [vmem:[#allocation2 + $0xa00] sm:$0xff]
    %v458 = vld [vmem:[#allocation2 + $0xa08] sm:$0xff]
    %v459 = vld [vmem:[#allocation2 + $0xa10] sm:$0xff]
    %v460 = vld [vmem:[#allocation2 + $0xa18] sm:$0xff]
    %v461 = vld [vmem:[#allocation2 + $0xa20] sm:$0xff]
    %v462 = vld [vmem:[#allocation2 + $0xa28] sm:$0xff]
    %v463 = vld [vmem:[#allocation2 + $0xa30] sm:$0xff]
    %v464 = vld [vmem:[#allocation2 + $0xa38] sm:$0xff]
    %v465 = vld [vmem:[#allocation2 + $0xa40] sm:$0xff]
    %v466 = vld [vmem:[#allocation2 + $0xa48] sm:$0xff]
    %v467 = vld [vmem:[#allocation2 + $0xa50] sm:$0xff]
    %v468 = vld [vmem:[#allocation2 + $0xa58] sm:$0xff]
    %v469 = vld [vmem:[#allocation2 + $0xa60] sm:$0xff]
    %v470 = vld [vmem:[#allocation2 + $0xa68] sm:$0xff]
    %v471 = vld [vmem:[#allocation2 + $0xa70] sm:$0xff]
    %v472 = vld [vmem:[#allocation2 + $0xa78] sm:$0xff]
    %v473 = vld [vmem:[#allocation2 + $0xa80] sm:$0xff]
    %v474 = vld [vmem:[#allocation2 + $0xa88] sm:$0xff]
    %v475 = vld [vmem:[#allocation2 + $0xa90] sm:$0xff]
    %v476 = vld [vmem:[#allocation2 + $0xa98] sm:$0xff]
    %v477 = vld [vmem:[#allocation2 + $0xaa0] sm:$0xff]
    %v478 = vld [vmem:[#allocation2 + $0xaa8] sm:$0xff]
    %v479 = vld [vmem:[#allocation2 + $0xab0] sm:$0xff]
    %v480 = vld [vmem:[#allocation2 + $0xab8] sm:$0xff]
    %v481 = vld [vmem:[#allocation2 + $0xac0] sm:$0xff]
    %v482 = vld [vmem:[#allocation2 + $0xac8] sm:$0xff]
    %v483 = vld [vmem:[#allocation2 + $0xad0] sm:$0xff]
    %v484 = vld [vmem:[#allocation2 + $0xad8] sm:$0xff]
    %v485 = vld [vmem:[#allocation2 + $0xae0] sm:$0xff]
    %v486 = vld [vmem:[#allocation2 + $0xae8] sm:$0xff]
    %v487 = vld [vmem:[#allocation2 + $0xaf0] sm:$0xff]
    %v488 = vld [vmem:[#allocation2 + $0xaf8] sm:$0xff]
    %v489 = vld [vmem:[#allocation2 + $0xb00] sm:$0xff]
    %v490 = vld [vmem:[#allocation2 + $0xb08] sm:$0xff]
    %v491 = vld [vmem:[#allocation2 + $0xb10] sm:$0xff]
    %v492 = vld [vmem:[#allocation2 + $0xb18] sm:$0xff]
    %v493 = vld [vmem:[#allocation2 + $0xb20] sm:$0xff]
    %v494 = vld [vmem:[#allocation2 + $0xb28] sm:$0xff]
    %v495 = vld [vmem:[#allocation2 + $0xb30] sm:$0xff]
    %v496 = vld [vmem:[#allocation2 + $0xb38] sm:$0xff]
    %v497 = vld [vmem:[#allocation2 + $0xb40] sm:$0xff]
    %v498 = vld [vmem:[#allocation2 + $0xb48] sm:$0xff]
    %v499 = vld [vmem:[#allocation2 + $0xb50] sm:$0xff]
    %v500 = vld [vmem:[#allocation2 + $0xb58] sm:$0xff]
    %v501 = vld [vmem:[#allocation2 + $0xb60] sm:$0xff]
    %v502 = vld [vmem:[#allocation2 + $0xb68] sm:$0xff]
    %v503 = vld [vmem:[#allocation2 + $0xb70] sm:$0xff]
    %v504 = vld [vmem:[#allocation2 + $0xb78] sm:$0xff]
    %v505 = vld [vmem:[#allocation2 + $0xb80] sm:$0xff]
    %v506 = vld [vmem:[#allocation2 + $0xb88] sm:$0xff]
    %v507 = vld [vmem:[#allocation2 + $0xb90] sm:$0xff]
    %v508 = vld [vmem:[#allocation2 + $0xb98] sm:$0xff]
    %v509 = vld [vmem:[#allocation2 + $0xba0] sm:$0xff]
    %v510 = vld [vmem:[#allocation2 + $0xba8] sm:$0xff]
    %v511 = vld [vmem:[#allocation2 + $0xbb0] sm:$0xff]
    %v512 = vld [vmem:[#allocation2 + $0xbb8] sm:$0xff]
    %v513 = vld [vmem:[#allocation2 + $0xbc0] sm:$0xff]
    %v514 = vld [vmem:[#allocation2 + $0xbc8] sm:$0xff]
    %v515 = vld [vmem:[#allocation2 + $0xbd0] sm:$0xff]
    %v516 = vld [vmem:[#allocation2 + $0xbd8] sm:$0xff]
    %v517 = vld [vmem:[#allocation2 + $0xbe0] sm:$0xff]
    %v518 = vld [vmem:[#allocation2 + $0xbe8] sm:$0xff]
    %v519 = vld [vmem:[#allocation2 + $0xbf0] sm:$0xff]
    %v520 = vld [vmem:[#allocation2 + $0xbf8] sm:$0xff]
    %v521 = vld [vmem:[#allocation2 + $0xc00] sm:$0xff]
    %v522 = vld [vmem:[#allocation2 + $0xc08] sm:$0xff]
    %v523 = vld [vmem:[#allocation2 + $0xc10] sm:$0xff]
    %v524 = vld [vmem:[#allocation2 + $0xc18] sm:$0xff]
    %v525 = vld [vmem:[#allocation2 + $0xc20] sm:$0xff]
    %v526 = vld [vmem:[#allocation2 + $0xc28] sm:$0xff]
    %v527 = vld [vmem:[#allocation2 + $0xc30] sm:$0xff]
    %v528 = vld [vmem:[#allocation2 + $0xc38] sm:$0xff]
    %v529 = vld [vmem:[#allocation2 + $0xc40] sm:$0xff]
    %v530 = vld [vmem:[#allocation2 + $0xc48] sm:$0xff]
    %v531 = vld [vmem:[#allocation2 + $0xc50] sm:$0xff]
    %v532 = vld [vmem:[#allocation2 + $0xc58] sm:$0xff]
    %v533 = vld [vmem:[#allocation2 + $0xc60] sm:$0xff]
    %v534 = vld [vmem:[#allocation2 + $0xc68] sm:$0xff]
    %v535 = vld [vmem:[#allocation2 + $0xc70] sm:$0xff]
    %v536 = vld [vmem:[#allocation2 + $0xc78] sm:$0xff]
    %v537 = vld [vmem:[#allocation2 + $0xc80] sm:$0xff]
    %v538 = vld [vmem:[#allocation2 + $0xc88] sm:$0xff]
    %v539 = vld [vmem:[#allocation2 + $0xc90] sm:$0xff]
    %v540 = vld [vmem:[#allocation2 + $0xc98] sm:$0xff]
    %v541 = vld [vmem:[#allocation2 + $0xca0] sm:$0xff]
    %v542 = vld [vmem:[#allocation2 + $0xca8] sm:$0xff]
    %v543 = vld [vmem:[#allocation2 + $0xcb0] sm:$0xff]
    %v544 = vld [vmem:[#allocation2 + $0xcb8] sm:$0xff]
    %v545 = vld [vmem:[#allocation2 + $0xcc0] sm:$0xff]
    %v546 = vld [vmem:[#allocation2 + $0xcc8] sm:$0xff]
    %v547 = vld [vmem:[#allocation2 + $0xcd0] sm:$0xff]
    %v548 = vld [vmem:[#allocation2 + $0xcd8] sm:$0xff]
    %v549 = vld [vmem:[#allocation2 + $0xce0] sm:$0xff]
    %v550 = vld [vmem:[#allocation2 + $0xce8] sm:$0xff]
    %v551 = vld [vmem:[#allocation2 + $0xcf0] sm:$0xff]
    %v552 = vld [vmem:[#allocation2 + $0xcf8] sm:$0xff]
    %v553 = vld [vmem:[#allocation2 + $0xd00] sm:$0xff]
    %v554 = vld [vmem:[#allocation2 + $0xd08] sm:$0xff]
    %v555 = vld [vmem:[#allocation2 + $0xd10] sm:$0xff]
    %v556 = vld [vmem:[#allocation2 + $0xd18] sm:$0xff]
    %v557 = vld [vmem:[#allocation2 + $0xd20] sm:$0xff]
    %v558 = vld [vmem:[#allocation2 + $0xd28] sm:$0xff]
    %v559 = vld [vmem:[#allocation2 + $0xd30] sm:$0xff]
    %v560 = vld [vmem:[#allocation2 + $0xd38] sm:$0xff]
    %v561 = vld [vmem:[#allocation2 + $0xd40] sm:$0xff]
    %v562 = vld [vmem:[#allocation2 + $0xd48] sm:$0xff]
    %v563 = vld [vmem:[#allocation2 + $0xd50] sm:$0xff]
    %v564 = vld [vmem:[#allocation2 + $0xd58] sm:$0xff]
    %v565 = vld [vmem:[#allocation2 + $0xd60] sm:$0xff]
    %v566 = vld [vmem:[#allocation2 + $0xd68] sm:$0xff]
    %v567 = vld [vmem:[#allocation2 + $0xd70] sm:$0xff]
    %v568 = vld [vmem:[#allocation2 + $0xd78] sm:$0xff]
    %v569 = vld [vmem:[#allocation2 + $0xd80] sm:$0xff]
    %v570 = vld [vmem:[#allocation2 + $0xd88] sm:$0xff]
    %v571 = vld [vmem:[#allocation2 + $0xd90] sm:$0xff]
    %v572 = vld [vmem:[#allocation2 + $0xd98] sm:$0xff]
    %v573 = vld [vmem:[#allocation2 + $0xda0] sm:$0xff]
    %v574 = vld [vmem:[#allocation2 + $0xda8] sm:$0xff]
    %v575 = vld [vmem:[#allocation2 + $0xdb0] sm:$0xff]
    %v576 = vld [vmem:[#allocation2 + $0xdb8] sm:$0xff]
    %v577 = vld [vmem:[#allocation2 + $0xdc0] sm:$0xff]
    %v578 = vld [vmem:[#allocation2 + $0xdc8] sm:$0xff]
    %v579 = vld [vmem:[#allocation2 + $0xdd0] sm:$0xff]
    %v580 = vld [vmem:[#allocation2 + $0xdd8] sm:$0xff]
    %v581 = vld [vmem:[#allocation2 + $0xde0] sm:$0xff]
    %v582 = vld [vmem:[#allocation2 + $0xde8] sm:$0xff]
    %v583 = vld [vmem:[#allocation2 + $0xdf0] sm:$0xff]
    %v584 = vld [vmem:[#allocation2 + $0xdf8] sm:$0xff]
    %v585 = vld [vmem:[#allocation2 + $0xe00] sm:$0xff]
    %v586 = vld [vmem:[#allocation2 + $0xe08] sm:$0xff]
    %v587 = vld [vmem:[#allocation2 + $0xe10] sm:$0xff]
    %v588 = vld [vmem:[#allocation2 + $0xe18] sm:$0xff]
    %v589 = vld [vmem:[#allocation2 + $0xe20] sm:$0xff]
    %v590 = vld [vmem:[#allocation2 + $0xe28] sm:$0xff]
    %v591 = vld [vmem:[#allocation2 + $0xe30] sm:$0xff]
    %v592 = vld [vmem:[#allocation2 + $0xe38] sm:$0xff]
    %v593 = vld [vmem:[#allocation2 + $0xe40] sm:$0xff]
    %v594 = vld [vmem:[#allocation2 + $0xe48] sm:$0xff]
    %v595 = vld [vmem:[#allocation2 + $0xe50] sm:$0xff]
    %v596 = vld [vmem:[#allocation2 + $0xe58] sm:$0xff]
    %v597 = vld [vmem:[#allocation2 + $0xe60] sm:$0xff]
    %v598 = vld [vmem:[#allocation2 + $0xe68] sm:$0xff]
    %v599 = vld [vmem:[#allocation2 + $0xe70] sm:$0xff]
    %v600 = vld [vmem:[#allocation2 + $0xe78] sm:$0xff]
    %v601 = vld [vmem:[#allocation2 + $0xe80] sm:$0xff]
    %v602 = vld [vmem:[#allocation2 + $0xe88] sm:$0xff]
    %v603 = vld [vmem:[#allocation2 + $0xe90] sm:$0xff]
    %v604 = vld [vmem:[#allocation2 + $0xe98] sm:$0xff]
    %v605 = vld [vmem:[#allocation2 + $0xea0] sm:$0xff]
    %v606 = vld [vmem:[#allocation2 + $0xea8] sm:$0xff]
    %v607 = vld [vmem:[#allocation2 + $0xeb0] sm:$0xff]
    %v608 = vld [vmem:[#allocation2 + $0xeb8] sm:$0xff]
    %v609 = vld [vmem:[#allocation2 + $0xec0] sm:$0xff]
    %v610 = vld [vmem:[#allocation2 + $0xec8] sm:$0xff]
    %v611 = vld [vmem:[#allocation2 + $0xed0] sm:$0xff]
    %v612 = vld [vmem:[#allocation2 + $0xed8] sm:$0xff]
    %v613 = vld [vmem:[#allocation2 + $0xee0] sm:$0xff]
    %v614 = vld [vmem:[#allocation2 + $0xee8] sm:$0xff]
    %v615 = vld [vmem:[#allocation2 + $0xef0] sm:$0xff]
    %v616 = vld [vmem:[#allocation2 + $0xef8] sm:$0xff]
    %v617 = vld [vmem:[#allocation2 + $0xf00] sm:$0xff]
    %v618 = vld [vmem:[#allocation2 + $0xf08] sm:$0xff]
    %v619 = vld [vmem:[#allocation2 + $0xf10] sm:$0xff]
    %v620 = vld [vmem:[#allocation2 + $0xf18] sm:$0xff]
    %v621 = vld [vmem:[#allocation2 + $0xf20] sm:$0xff]
    %v622 = vld [vmem:[#allocation2 + $0xf28] sm:$0xff]
    %v623 = vld [vmem:[#allocation2 + $0xf30] sm:$0xff]
    %v624 = vld [vmem:[#allocation2 + $0xf38] sm:$0xff]
    %v625 = vld [vmem:[#allocation2 + $0xf40] sm:$0xff]
    %v626 = vld [vmem:[#allocation2 + $0xf48] sm:$0xff]
    %v627 = vld [vmem:[#allocation2 + $0xf50] sm:$0xff]
    %v628 = vld [vmem:[#allocation2 + $0xf58] sm:$0xff]
    %v629 = vld [vmem:[#allocation2 + $0xf60] sm:$0xff]
    %v630 = vld [vmem:[#allocation2 + $0xf68] sm:$0xff]
    %v631 = vld [vmem:[#allocation2 + $0xf70] sm:$0xff]
    %v632 = vld [vmem:[#allocation2 + $0xf78] sm:$0xff]
    %v633 = vld [vmem:[#allocation2 + $0xf80] sm:$0xff]
    %v634 = vld [vmem:[#allocation2 + $0xf88] sm:$0xff]
    %v635 = vld [vmem:[#allocation2 + $0xf90] sm:$0xff]
    %v636 = vld [vmem:[#allocation2 + $0xf98] sm:$0xff]
    %v637 = vld [vmem:[#allocation2 + $0xfa0] sm:$0xff]
    %v638 = vld [vmem:[#allocation2 + $0xfa8] sm:$0xff]
    %v639 = vld [vmem:[#allocation2 + $0xfb0] sm:$0xff]
    %v640 = vld [vmem:[#allocation2 + $0xfb8] sm:$0xff]
    %v641 = vld [vmem:[#allocation2 + $0xfc0] sm:$0xff]
    %v642 = vld [vmem:[#allocation2 + $0xfc8] sm:$0xff]
    %v643 = vld [vmem:[#allocation2 + $0xfd0] sm:$0xff]
    %v644 = vld [vmem:[#allocation2 + $0xfd8] sm:$0xff]
    %v645 = vld [vmem:[#allocation2 + $0xfe0] sm:$0xff]
    %v646 = vld [vmem:[#allocation2 + $0xfe8] sm:$0xff]
    %v647 = vld [vmem:[#allocation2 + $0xff0] sm:$0xff]
    %v648 = vld [vmem:[#allocation2 + $0xff8] sm:$0xff]
    %v649 = vld [vmem:[#allocation4] sm:$0xff]
    %v651 = vlaneseq
    %v652 = vshrl.u32 %v651, 7
    %v653 = vsub.s32 0, %v652
    %v654 = vrot.slane %v649, %v653
    %v655 = vlaneseq
    %v656 = vshrl.u32 %v655, 7
    %v657 = vsub.s32 1, %v656
    %v658 = vrot.slane %v649, %v657
    %v659 = vlaneseq
    %v660 = vshrl.u32 %v659, 7
    %v661 = vsub.s32 2, %v660
    %v662 = vrot.slane %v649, %v661
    %v663 = vlaneseq
    %v664 = vshrl.u32 %v663, 7
    %v665 = vsub.s32 3, %v664
    %v666 = vrot.slane %v649, %v665
    %v667 = vlaneseq
    %v668 = vshrl.u32 %v667, 7
    %v669 = vsub.s32 4, %v668
    %v670 = vrot.slane %v649, %v669
    %v671 = vlaneseq
    %v672 = vshrl.u32 %v671, 7
    %v673 = vsub.s32 5, %v672
    %v674 = vrot.slane %v649, %v673
    %v675 = vlaneseq
    %v676 = vshrl.u32 %v675, 7
    %v677 = vsub.s32 6, %v676
    %v678 = vrot.slane %v649, %v677
    %v679 = vlaneseq
    %v680 = vshrl.u32 %v679, 7
    %v681 = vsub.s32 7, %v680
    %v682 = vrot.slane %v649, %v681
    %691 = vmatprep.subr.mxu0 %v138
    %692 = vmatpush1.msra.mxu0 %v137
    %693 = vmatprep.subr.mxu0 %v146
    %694 = vmatpush1.msra.mxu0 %v145
    %695 = vmatprep.subr.mxu0 %v154
    %696 = vmatpush1.msra.mxu0 %v153
    %697 = vmatprep.subr.mxu0 %v162
    %698 = vmatpush1.msra.mxu0 %v161
    %699 = vmatprep.subr.mxu0 %v170
    %700 = vmatpush1.msra.mxu0 %v169
    %701 = vmatprep.subr.mxu0 %v178
    %702 = vmatpush1.msra.mxu0 %v177
    %703 = vmatprep.subr.mxu0 %v186
    %704 = vmatpush1.msra.mxu0 %v185
    %705 = vmatprep.subr.mxu0 %v194
    %706 = vmatpush1.msra.mxu0 %v193
    %707 = vmatprep.subr.mxu0 %v202
    %708 = vmatpush1.msra.mxu0 %v201
    %709 = vmatprep.subr.mxu0 %v210
    %710 = vmatpush1.msra.mxu0 %v209
    %711 = vmatprep.subr.mxu0 %v218
    %712 = vmatpush1.msra.mxu0 %v217
    %713 = vmatprep.subr.mxu0 %v226
    %714 = vmatpush1.msra.mxu0 %v225
    %715 = vmatprep.subr.mxu0 %v234
    %716 = vmatpush1.msra.mxu0 %v233
    %717 = vmatprep.subr.mxu0 %v242
    %718 = vmatpush1.msra.mxu0 %v241
    %719 = vmatprep.subr.mxu0 %v250
    %720 = vmatpush1.msra.mxu0 %v249
    %721 = vmatprep.subr.mxu0 %v258
    %722 = vmatpush1.msra.mxu0 %v257
    %723 = vmatprep.subr.mxu0 %v266
    %724 = vmatpush1.msra.mxu0 %v265
    %725 = vmatprep.subr.mxu0 %v274
    %726 = vmatpush1.msra.mxu0 %v273
    %727 = vmatprep.subr.mxu0 %v282
    %728 = vmatpush1.msra.mxu0 %v281
    %729 = vmatprep.subr.mxu0 %v290
    %730 = vmatpush1.msra.mxu0 %v289
    %731 = vmatprep.subr.mxu0 %v298
    %732 = vmatpush1.msra.mxu0 %v297
    %733 = vmatprep.subr.mxu0 %v306
    %734 = vmatpush1.msra.mxu0 %v305
    %735 = vmatprep.subr.mxu0 %v314
    %736 = vmatpush1.msra.mxu0 %v313
    %737 = vmatprep.subr.mxu0 %v322
    %738 = vmatpush1.msra.mxu0 %v321
    %739 = vmatprep.subr.mxu0 %v330
    %740 = vmatpush1.msra.mxu0 %v329
    %741 = vmatprep.subr.mxu0 %v338
    %742 = vmatpush1.msra.mxu0 %v337
    %743 = vmatprep.subr.mxu0 %v346
    %744 = vmatpush1.msra.mxu0 %v345
    %745 = vmatprep.subr.mxu0 %v354
    %746 = vmatpush1.msra.mxu0 %v353
    %747 = vmatprep.subr.mxu0 %v362
    %748 = vmatpush1.msra.mxu0 %v361
    %749 = vmatprep.subr.mxu0 %v370
    %750 = vmatpush1.msra.mxu0 %v369
    %751 = vmatprep.subr.mxu0 %v378
    %752 = vmatpush1.msra.mxu0 %v377
    %753 = vmatprep.subr.mxu0 %v386
    %754 = vmatpush1.msra.mxu0 %v385
    %755 = vmatprep.mubr.f32.mxu0 %v134
    %756 = vmatmul.mubr.f32.gmra.mrb[0].mxu0 %v133
    %v757 = vpop.f32.mrb[0].mxu0
    %v758 = vadd.f32 %v654, %v757
    %v759 = vpop.f32.mrb[0].mxu0
    %v760 = vadd.f32 %v658, %v759
    %761 = vdwg.mxu0
    %762 = vmatprep.subr.mxu0 %v394
    %763 = vmatpush1.msra.mxu0 %v393
    %764 = vmatprep.subr.mxu0 %v402
    %765 = vmatpush1.msra.mxu0 %v401
    %766 = vmatprep.subr.mxu0 %v410
    %767 = vmatpush1.msra.mxu0 %v409
    %768 = vmatprep.subr.mxu0 %v418
    %769 = vmatpush1.msra.mxu0 %v417
    %770 = vmatprep.subr.mxu0 %v426
    %771 = vmatpush1.msra.mxu0 %v425
    %772 = vmatprep.subr.mxu0 %v434
    %773 = vmatpush1.msra.mxu0 %v433
    %774 = vmatprep.subr.mxu0 %v442
    %775 = vmatpush1.msra.mxu0 %v441
    %776 = vmatprep.subr.mxu0 %v450
    %777 = vmatpush1.msra.mxu0 %v449
    %778 = vmatprep.subr.mxu0 %v458
    %779 = vmatpush1.msra.mxu0 %v457
    %780 = vmatprep.subr.mxu0 %v466
    %781 = vmatpush1.msra.mxu0 %v465
    %782 = vmatprep.subr.mxu0 %v474
    %783 = vmatpush1.msra.mxu0 %v473
    %784 = vmatprep.subr.mxu0 %v482
    %785 = vmatpush1.msra.mxu0 %v481
    %786 = vmatprep.subr.mxu0 %v490
    %787 = vmatpush1.msra.mxu0 %v489
    %788 = vmatprep.subr.mxu0 %v498
    %789 = vmatpush1.msra.mxu0 %v497
    %790 = vmatprep.subr.mxu0 %v506
    %791 = vmatpush1.msra.mxu0 %v505
    %792 = vmatprep.subr.mxu0 %v514
    %793 = vmatpush1.msra.mxu0 %v513
    %794 = vmatprep.subr.mxu0 %v522
    %795 = vmatpush1.msra.mxu0 %v521
    %796 = vmatprep.subr.mxu0 %v530
    %797 = vmatpush1.msra.mxu0 %v529
    %798 = vmatprep.subr.mxu0 %v538
    %799 = vmatpush1.msra.mxu0 %v537
    %800 = vmatprep.subr.mxu0 %v546
    %801 = vmatpush1.msra.mxu0 %v545
    %802 = vmatprep.subr.mxu0 %v554
    %803 = vmatpush1.msra.mxu0 %v553
    %804 = vmatprep.subr.mxu0 %v562
    %805 = vmatpush1.msra.mxu0 %v561
    %806 = vmatprep.subr.mxu0 %v570
    %807 = vmatpush1.msra.mxu0 %v569
    %808 = vmatprep.subr.mxu0 %v578
    %809 = vmatpush1.msra.mxu0 %v577
    %810 = vmatprep.subr.mxu0 %v586
    %811 = vmatpush1.msra.mxu0 %v585
    %812 = vmatprep.subr.mxu0 %v594
    %813 = vmatpush1.msra.mxu0 %v593
    %814 = vmatprep.subr.mxu0 %v602
    %815 = vmatpush1.msra.mxu0 %v601
    %816 = vmatprep.subr.mxu0 %v610
    %817 = vmatpush1.msra.mxu0 %v609
    %818 = vmatprep.subr.mxu0 %v618
    %819 = vmatpush1.msra.mxu0 %v617
    %820 = vmatprep.subr.mxu0 %v626
    %821 = vmatpush1.msra.mxu0 %v625
    %822 = vmatprep.subr.mxu0 %v634
    %823 = vmatpush1.msra.mxu0 %v633
    %824 = vmatprep.subr.mxu0 %v642
    %825 = vmatpush1.msra.mxu0 %v641
    %826 = vmatprep.mubr.f32.mxu0 %v136
    %827 = vmatmul.mubr.f32.gmra.mrb[0].mxu0 %v135
    %v828 = vpop.f32.mrb[0].mxu0
    %v829 = vadd.f32 %v758, %v828
    %v830 = vpop.f32.mrb[0].mxu0
    %v831 = vadd.f32 %v760, %v830
    %832 = vdwg.mxu0
    %833 = vmatprep.subr.mxu0 %v140
    %834 = vmatpush1.msra.mxu0 %v139
    %835 = vmatprep.subr.mxu0 %v148
    %836 = vmatpush1.msra.mxu0 %v147
    %837 = vmatprep.subr.mxu0 %v156
    %838 = vmatpush1.msra.mxu0 %v155
    %839 = vmatprep.subr.mxu0 %v164
    %840 = vmatpush1.msra.mxu0 %v163
    %841 = vmatprep.subr.mxu0 %v172
    %842 = vmatpush1.msra.mxu0 %v171
    %843 = vmatprep.subr.mxu0 %v180
    %844 = vmatpush1.msra.mxu0 %v179
    %845 = vmatprep.subr.mxu0 %v188
    %846 = vmatpush1.msra.mxu0 %v187
    %847 = vmatprep.subr.mxu0 %v196
    %848 = vmatpush1.msra.mxu0 %v195
    %849 = vmatprep.subr.mxu0 %v204
    %850 = vmatpush1.msra.mxu0 %v203
    %851 = vmatprep.subr.mxu0 %v212
    %852 = vmatpush1.msra.mxu0 %v211
    %853 = vmatprep.subr.mxu0 %v220
    %854 = vmatpush1.msra.mxu0 %v219
    %855 = vmatprep.subr.mxu0 %v228
    %856 = vmatpush1.msra.mxu0 %v227
    %857 = vmatprep.subr.mxu0 %v236
    %858 = vmatpush1.msra.mxu0 %v235
    %859 = vmatprep.subr.mxu0 %v244
    %860 = vmatpush1.msra.mxu0 %v243
    %861 = vmatprep.subr.mxu0 %v252
    %862 = vmatpush1.msra.mxu0 %v251
    %863 = vmatprep.subr.mxu0 %v260
    %864 = vmatpush1.msra.mxu0 %v259
    %865 = vmatprep.subr.mxu0 %v268
    %866 = vmatpush1.msra.mxu0 %v267
    %867 = vmatprep.subr.mxu0 %v276
    %868 = vmatpush1.msra.mxu0 %v275
    %869 = vmatprep.subr.mxu0 %v284
    %870 = vmatpush1.msra.mxu0 %v283
    %871 = vmatprep.subr.mxu0 %v292
    %872 = vmatpush1.msra.mxu0 %v291
    %873 = vmatprep.subr.mxu0 %v300
    %874 = vmatpush1.msra.mxu0 %v299
    %875 = vmatprep.subr.mxu0 %v308
    %876 = vmatpush1.msra.mxu0 %v307
    %877 = vmatprep.subr.mxu0 %v316
    %878 = vmatpush1.msra.mxu0 %v315
    %879 = vmatprep.subr.mxu0 %v324
    %880 = vmatpush1.msra.mxu0 %v323
    %881 = vmatprep.subr.mxu0 %v332
    %882 = vmatpush1.msra.mxu0 %v331
    %883 = vmatprep.subr.mxu0 %v340
    %884 = vmatpush1.msra.mxu0 %v339
    %885 = vmatprep.subr.mxu0 %v348
    %886 = vmatpush1.msra.mxu0 %v347
    %887 = vmatprep.subr.mxu0 %v356
    %888 = vmatpush1.msra.mxu0 %v355
    %889 = vmatprep.subr.mxu0 %v364
    %890 = vmatpush1.msra.mxu0 %v363
    %891 = vmatprep.subr.mxu0 %v372
    %892 = vmatpush1.msra.mxu0 %v371
    %893 = vmatprep.subr.mxu0 %v380
    %894 = vmatpush1.msra.mxu0 %v379
    %895 = vmatprep.subr.mxu0 %v388
    %896 = vmatpush1.msra.mxu0 %v387
    %897 = vmatprep.mubr.f32.mxu0 %v134
    %898 = vmatmul.mubr.f32.gmra.mrb[0].mxu0 %v133
    %v899 = vpop.f32.mrb[0].mxu0
    %v900 = vadd.f32 %v662, %v899
    %v901 = vpop.f32.mrb[0].mxu0
    %v902 = vadd.f32 %v666, %v901
    %903 = vdwg.mxu0
    %904 = vmatprep.subr.mxu0 %v396
    %905 = vmatpush1.msra.mxu0 %v395
    %906 = vmatprep.subr.mxu0 %v404
    %907 = vmatpush1.msra.mxu0 %v403
    %908 = vmatprep.subr.mxu0 %v412
    %909 = vmatpush1.msra.mxu0 %v411
    %910 = vmatprep.subr.mxu0 %v420
    %911 = vmatpush1.msra.mxu0 %v419
    %912 = vmatprep.subr.mxu0 %v428
    %913 = vmatpush1.msra.mxu0 %v427
    %914 = vmatprep.subr.mxu0 %v436
    %915 = vmatpush1.msra.mxu0 %v435
    %916 = vmatprep.subr.mxu0 %v444
    %917 = vmatpush1.msra.mxu0 %v443
    %918 = vmatprep.subr.mxu0 %v452
    %919 = vmatpush1.msra.mxu0 %v451
    %920 = vmatprep.subr.mxu0 %v460
    %921 = vmatpush1.msra.mxu0 %v459
    %922 = vmatprep.subr.mxu0 %v468
    %923 = vmatpush1.msra.mxu0 %v467
    %924 = vmatprep.subr.mxu0 %v476
    %925 = vmatpush1.msra.mxu0 %v475
    %926 = vmatprep.subr.mxu0 %v484
    %927 = vmatpush1.msra.mxu0 %v483
    %928 = vmatprep.subr.mxu0 %v492
    %929 = vmatpush1.msra.mxu0 %v491
    %930 = vmatprep.subr.mxu0 %v500
    %931 = vmatpush1.msra.mxu0 %v499
    %932 = vmatprep.subr.mxu0 %v508
    %933 = vmatpush1.msra.mxu0 %v507
    %934 = vmatprep.subr.mxu0 %v516
    %935 = vmatpush1.msra.mxu0 %v515
    %936 = vmatprep.subr.mxu0 %v524
    %937 = vmatpush1.msra.mxu0 %v523
    %938 = vmatprep.subr.mxu0 %v532
    %939 = vmatpush1.msra.mxu0 %v531
    %940 = vmatprep.subr.mxu0 %v540
    %941 = vmatpush1.msra.mxu0 %v539
    %942 = vmatprep.subr.mxu0 %v548
    %943 = vmatpush1.msra.mxu0 %v547
    %944 = vmatprep.subr.mxu0 %v556
    %945 = vmatpush1.msra.mxu0 %v555
    %946 = vmatprep.subr.mxu0 %v564
    %947 = vmatpush1.msra.mxu0 %v563
    %948 = vmatprep.subr.mxu0 %v572
    %949 = vmatpush1.msra.mxu0 %v571
    %950 = vmatprep.subr.mxu0 %v580
    %951 = vmatpush1.msra.mxu0 %v579
    %952 = vmatprep.subr.mxu0 %v588
    %953 = vmatpush1.msra.mxu0 %v587
    %954 = vmatprep.subr.mxu0 %v596
    %955 = vmatpush1.msra.mxu0 %v595
    %956 = vmatprep.subr.mxu0 %v604
    %957 = vmatpush1.msra.mxu0 %v603
    %958 = vmatprep.subr.mxu0 %v612
    %959 = vmatpush1.msra.mxu0 %v611
    %960 = vmatprep.subr.mxu0 %v620
    %961 = vmatpush1.msra.mxu0 %v619
    %962 = vmatprep.subr.mxu0 %v628
    %963 = vmatpush1.msra.mxu0 %v627
    %964 = vmatprep.subr.mxu0 %v636
    %965 = vmatpush1.msra.mxu0 %v635
    %966 = vmatprep.subr.mxu0 %v644
    %967 = vmatpush1.msra.mxu0 %v643
    %968 = vmatprep.mubr.f32.mxu0 %v136
    %969 = vmatmul.mubr.f32.gmra.mrb[0].mxu0 %v135
    %v970 = vpop.f32.mrb[0].mxu0
    %v971 = vadd.f32 %v900, %v970
    %v972 = vpop.f32.mrb[0].mxu0
    %v973 = vadd.f32 %v902, %v972
    %974 = vdwg.mxu0
    %975 = vmatprep.subr.mxu0 %v142
    %976 = vmatpush1.msra.mxu0 %v141
    %977 = vmatprep.subr.mxu0 %v150
    %978 = vmatpush1.msra.mxu0 %v149
    %979 = vmatprep.subr.mxu0 %v158
    %980 = vmatpush1.msra.mxu0 %v157
    %981 = vmatprep.subr.mxu0 %v166
    %982 = vmatpush1.msra.mxu0 %v165
    %983 = vmatprep.subr.mxu0 %v174
    %984 = vmatpush1.msra.mxu0 %v173
    %985 = vmatprep.subr.mxu0 %v182
    %986 = vmatpush1.msra.mxu0 %v181
    %987 = vmatprep.subr.mxu0 %v190
    %988 = vmatpush1.msra.mxu0 %v189
    %989 = vmatprep.subr.mxu0 %v198
    %990 = vmatpush1.msra.mxu0 %v197
    %991 = vmatprep.subr.mxu0 %v206
    %992 = vmatpush1.msra.mxu0 %v205
    %993 = vmatprep.subr.mxu0 %v214
    %994 = vmatpush1.msra.mxu0 %v213
    %995 = vmatprep.subr.mxu0 %v222
    %996 = vmatpush1.msra.mxu0 %v221
    %997 = vmatprep.subr.mxu0 %v230
    %998 = vmatpush1.msra.mxu0 %v229
    %999 = vmatprep.subr.mxu0 %v238
    %1000 = vmatpush1.msra.mxu0 %v237
    %1001 = vmatprep.subr.mxu0 %v246
    %1002 = vmatpush1.msra.mxu0 %v245
    %1003 = vmatprep.subr.mxu0 %v254
    %1004 = vmatpush1.msra.mxu0 %v253
    %1005 = vmatprep.subr.mxu0 %v262
    %1006 = vmatpush1.msra.mxu0 %v261
    %1007 = vmatprep.subr.mxu0 %v270
    %1008 = vmatpush1.msra.mxu0 %v269
    %1009 = vmatprep.subr.mxu0 %v278
    %1010 = vmatpush1.msra.mxu0 %v277
    %1011 = vmatprep.subr.mxu0 %v286
    %1012 = vmatpush1.msra.mxu0 %v285
    %1013 = vmatprep.subr.mxu0 %v294
    %1014 = vmatpush1.msra.mxu0 %v293
    %1015 = vmatprep.subr.mxu0 %v302
    %1016 = vmatpush1.msra.mxu0 %v301
    %1017 = vmatprep.subr.mxu0 %v310
    %1018 = vmatpush1.msra.mxu0 %v309
    %1019 = vmatprep.subr.mxu0 %v318
    %1020 = vmatpush1.msra.mxu0 %v317
    %1021 = vmatprep.subr.mxu0 %v326
    %1022 = vmatpush1.msra.mxu0 %v325
    %1023 = vmatprep.subr.mxu0 %v334
    %1024 = vmatpush1.msra.mxu0 %v333
    %1025 = vmatprep.subr.mxu0 %v342
    %1026 = vmatpush1.msra.mxu0 %v341
    %1027 = vmatprep.subr.mxu0 %v350
    %1028 = vmatpush1.msra.mxu0 %v349
    %1029 = vmatprep.subr.mxu0 %v358
    %1030 = vmatpush1.msra.mxu0 %v357
    %1031 = vmatprep.subr.mxu0 %v366
    %1032 = vmatpush1.msra.mxu0 %v365
    %1033 = vmatprep.subr.mxu0 %v374
    %1034 = vmatpush1.msra.mxu0 %v373
    %1035 = vmatprep.subr.mxu0 %v382
    %1036 = vmatpush1.msra.mxu0 %v381
    %1037 = vmatprep.subr.mxu0 %v390
    %1038 = vmatpush1.msra.mxu0 %v389
    %1039 = vmatprep.mubr.f32.mxu0 %v134
    %1040 = vmatmul.mubr.f32.gmra.mrb[0].mxu0 %v133
    %v1041 = vpop.f32.mrb[0].mxu0
    %v1042 = vadd.f32 %v670, %v1041
    %v1043 = vpop.f32.mrb[0].mxu0
    %v1044 = vadd.f32 %v674, %v1043
    %1045 = vdwg.mxu0
    %1046 = vmatprep.subr.mxu0 %v398
    %1047 = vmatpush1.msra.mxu0 %v397
    %1048 = vmatprep.subr.mxu0 %v406
    %1049 = vmatpush1.msra.mxu0 %v405
    %1050 = vmatprep.subr.mxu0 %v414
    %1051 = vmatpush1.msra.mxu0 %v413
    %1052 = vmatprep.subr.mxu0 %v422
    %1053 = vmatpush1.msra.mxu0 %v421
    %1054 = vmatprep.subr.mxu0 %v430
    %1055 = vmatpush1.msra.mxu0 %v429
    %1056 = vmatprep.subr.mxu0 %v438
    %1057 = vmatpush1.msra.mxu0 %v437
    %1058 = vmatprep.subr.mxu0 %v446
    %1059 = vmatpush1.msra.mxu0 %v445
    %1060 = vmatprep.subr.mxu0 %v454
    %1061 = vmatpush1.msra.mxu0 %v453
    %1062 = vmatprep.subr.mxu0 %v462
    %1063 = vmatpush1.msra.mxu0 %v461
    %1064 = vmatprep.subr.mxu0 %v470
    %1065 = vmatpush1.msra.mxu0 %v469
    %1066 = vmatprep.subr.mxu0 %v478
    %1067 = vmatpush1.msra.mxu0 %v477
    %1068 = vmatprep.subr.mxu0 %v486
    %1069 = vmatpush1.msra.mxu0 %v485
    %1070 = vmatprep.subr.mxu0 %v494
    %1071 = vmatpush1.msra.mxu0 %v493
    %1072 = vmatprep.subr.mxu0 %v502
    %1073 = vmatpush1.msra.mxu0 %v501
    %1074 = vmatprep.subr.mxu0 %v510
    %1075 = vmatpush1.msra.mxu0 %v509
    %1076 = vmatprep.subr.mxu0 %v518
    %1077 = vmatpush1.msra.mxu0 %v517
    %1078 = vmatprep.subr.mxu0 %v526
    %1079 = vmatpush1.msra.mxu0 %v525
    %1080 = vmatprep.subr.mxu0 %v534
    %1081 = vmatpush1.msra.mxu0 %v533
    %1082 = vmatprep.subr.mxu0 %v542
    %1083 = vmatpush1.msra.mxu0 %v541
    %1084 = vmatprep.subr.mxu0 %v550
    %1085 = vmatpush1.msra.mxu0 %v549
    %1086 = vmatprep.subr.mxu0 %v558
    %1087 = vmatpush1.msra.mxu0 %v557
    %1088 = vmatprep.subr.mxu0 %v566
    %1089 = vmatpush1.msra.mxu0 %v565
    %1090 = vmatprep.subr.mxu0 %v574
    %1091 = vmatpush1.msra.mxu0 %v573
    %1092 = vmatprep.subr.mxu0 %v582
    %1093 = vmatpush1.msra.mxu0 %v581
    %1094 = vmatprep.subr.mxu0 %v590
    %1095 = vmatpush1.msra.mxu0 %v589
    %1096 = vmatprep.subr.mxu0 %v598
    %1097 = vmatpush1.msra.mxu0 %v597
    %1098 = vmatprep.subr.mxu0 %v606
    %1099 = vmatpush1.msra.mxu0 %v605
    %1100 = vmatprep.subr.mxu0 %v614
    %1101 = vmatpush1.msra.mxu0 %v613
    %1102 = vmatprep.subr.mxu0 %v622
    %1103 = vmatpush1.msra.mxu0 %v621
    %1104 = vmatprep.subr.mxu0 %v630
    %1105 = vmatpush1.msra.mxu0 %v629
    %1106 = vmatprep.subr.mxu0 %v638
    %1107 = vmatpush1.msra.mxu0 %v637
    %1108 = vmatprep.subr.mxu0 %v646
    %1109 = vmatpush1.msra.mxu0 %v645
    %1110 = vmatprep.mubr.f32.mxu0 %v136
    %1111 = vmatmul.mubr.f32.gmra.mrb[0].mxu0 %v135
    %v1112 = vpop.f32.mrb[0].mxu0
    %v1113 = vadd.f32 %v1042, %v1112
    %v1114 = vpop.f32.mrb[0].mxu0
    %v1115 = vadd.f32 %v1044, %v1114
    %1116 = vdwg.mxu0
    %1117 = vmatprep.subr.mxu0 %v144
    %1118 = vmatpush1.msra.mxu0 %v143
    %1119 = vmatprep.subr.mxu0 %v152
    %1120 = vmatpush1.msra.mxu0 %v151
    %1121 = vmatprep.subr.mxu0 %v160
    %1122 = vmatpush1.msra.mxu0 %v159
    %1123 = vmatprep.subr.mxu0 %v168
    %1124 = vmatpush1.msra.mxu0 %v167
    %1125 = vmatprep.subr.mxu0 %v176
    %1126 = vmatpush1.msra.mxu0 %v175
    %1127 = vmatprep.subr.mxu0 %v184
    %1128 = vmatpush1.msra.mxu0 %v183
    %1129 = vmatprep.subr.mxu0 %v192
    %1130 = vmatpush1.msra.mxu0 %v191
    %1131 = vmatprep.subr.mxu0 %v200
    %1132 = vmatpush1.msra.mxu0 %v199
    %1133 = vmatprep.subr.mxu0 %v208
    %1134 = vmatpush1.msra.mxu0 %v207
    %1135 = vmatprep.subr.mxu0 %v216
    %1136 = vmatpush1.msra.mxu0 %v215
    %1137 = vmatprep.subr.mxu0 %v224
    %1138 = vmatpush1.msra.mxu0 %v223
    %1139 = vmatprep.subr.mxu0 %v232
    %1140 = vmatpush1.msra.mxu0 %v231
    %1141 = vmatprep.subr.mxu0 %v240
    %1142 = vmatpush1.msra.mxu0 %v239
    %1143 = vmatprep.subr.mxu0 %v248
    %1144 = vmatpush1.msra.mxu0 %v247
    %1145 = vmatprep.subr.mxu0 %v256
    %1146 = vmatpush1.msra.mxu0 %v255
    %1147 = vmatprep.subr.mxu0 %v264
    %1148 = vmatpush1.msra.mxu0 %v263
    %1149 = vmatprep.subr.mxu0 %v272
    %1150 = vmatpush1.msra.mxu0 %v271
    %1151 = vmatprep.subr.mxu0 %v280
    %1152 = vmatpush1.msra.mxu0 %v279
    %1153 = vmatprep.subr.mxu0 %v288
    %1154 = vmatpush1.msra.mxu0 %v287
    %1155 = vmatprep.subr.mxu0 %v296
    %1156 = vmatpush1.msra.mxu0 %v295
    %1157 = vmatprep.subr.mxu0 %v304
    %1158 = vmatpush1.msra.mxu0 %v303
    %1159 = vmatprep.subr.mxu0 %v312
    %1160 = vmatpush1.msra.mxu0 %v311
    %1161 = vmatprep.subr.mxu0 %v320
    %1162 = vmatpush1.msra.mxu0 %v319
    %1163 = vmatprep.subr.mxu0 %v328
    %1164 = vmatpush1.msra.mxu0 %v327
    %1165 = vmatprep.subr.mxu0 %v336
    %1166 = vmatpush1.msra.mxu0 %v335
    %1167 = vmatprep.subr.mxu0 %v344
    %1168 = vmatpush1.msra.mxu0 %v343
    %1169 = vmatprep.subr.mxu0 %v352
    %1170 = vmatpush1.msra.mxu0 %v351
    %1171 = vmatprep.subr.mxu0 %v360
    %1172 = vmatpush1.msra.mxu0 %v359
    %1173 = vmatprep.subr.mxu0 %v368
    %1174 = vmatpush1.msra.mxu0 %v367
    %1175 = vmatprep.subr.mxu0 %v376
    %1176 = vmatpush1.msra.mxu0 %v375
    %1177 = vmatprep.subr.mxu0 %v384
    %1178 = vmatpush1.msra.mxu0 %v383
    %1179 = vmatprep.subr.mxu0 %v392
    %1180 = vmatpush1.msra.mxu0 %v391
    %1181 = vmatprep.mubr.f32.mxu0 %v134
    %1182 = vmatmul.mubr.f32.gmra.mrb[0].mxu0 %v133
    %v1183 = vpop.f32.mrb[0].mxu0
    %v1184 = vadd.f32 %v678, %v1183
    %v1185 = vpop.f32.mrb[0].mxu0
    %v1186 = vadd.f32 %v682, %v1185
    %1187 = vdwg.mxu0
    %1188 = vmatprep.subr.mxu0 %v400
    %1189 = vmatpush1.msra.mxu0 %v399
    %1190 = vmatprep.subr.mxu0 %v408
    %1191 = vmatpush1.msra.mxu0 %v407
    %1192 = vmatprep.subr.mxu0 %v416
    %1193 = vmatpush1.msra.mxu0 %v415
    %1194 = vmatprep.subr.mxu0 %v424
    %1195 = vmatpush1.msra.mxu0 %v423
    %1196 = vmatprep.subr.mxu0 %v432
    %1197 = vmatpush1.msra.mxu0 %v431
    %1198 = vmatprep.subr.mxu0 %v440
    %1199 = vmatpush1.msra.mxu0 %v439
    %1200 = vmatprep.subr.mxu0 %v448
    %1201 = vmatpush1.msra.mxu0 %v447
    %1202 = vmatprep.subr.mxu0 %v456
    %1203 = vmatpush1.msra.mxu0 %v455
    %1204 = vmatprep.subr.mxu0 %v464
    %1205 = vmatpush1.msra.mxu0 %v463
    %1206 = vmatprep.subr.mxu0 %v472
    %1207 = vmatpush1.msra.mxu0 %v471
    %1208 = vmatprep.subr.mxu0 %v480
    %1209 = vmatpush1.msra.mxu0 %v479
    %1210 = vmatprep.subr.mxu0 %v488
    %1211 = vmatpush1.msra.mxu0 %v487
    %1212 = vmatprep.subr.mxu0 %v496
    %1213 = vmatpush1.msra.mxu0 %v495
    %1214 = vmatprep.subr.mxu0 %v504
    %1215 = vmatpush1.msra.mxu0 %v503
    %1216 = vmatprep.subr.mxu0 %v512
    %1217 = vmatpush1.msra.mxu0 %v511
    %1218 = vmatprep.subr.mxu0 %v520
    %1219 = vmatpush1.msra.mxu0 %v519
    %1220 = vmatprep.subr.mxu0 %v528
    %1221 = vmatpush1.msra.mxu0 %v527
    %1222 = vmatprep.subr.mxu0 %v536
    %1223 = vmatpush1.msra.mxu0 %v535
    %1224 = vmatprep.subr.mxu0 %v544
    %1225 = vmatpush1.msra.mxu0 %v543
    %1226 = vmatprep.subr.mxu0 %v552
    %1227 = vmatpush1.msra.mxu0 %v551
    %1228 = vmatprep.subr.mxu0 %v560
    %1229 = vmatpush1.msra.mxu0 %v559
    %1230 = vmatprep.subr.mxu0 %v568
    %1231 = vmatpush1.msra.mxu0 %v567
    %1232 = vmatprep.subr.mxu0 %v576
    %1233 = vmatpush1.msra.mxu0 %v575
    %1234 = vmatprep.subr.mxu0 %v584
    %1235 = vmatpush1.msra.mxu0 %v583
    %1236 = vmatprep.subr.mxu0 %v592
    %1237 = vmatpush1.msra.mxu0 %v591
    %1238 = vmatprep.subr.mxu0 %v600
    %1239 = vmatpush1.msra.mxu0 %v599
    %1240 = vmatprep.subr.mxu0 %v608
    %1241 = vmatpush1.msra.mxu0 %v607
    %1242 = vmatprep.subr.mxu0 %v616
    %1243 = vmatpush1.msra.mxu0 %v615
    %1244 = vmatprep.subr.mxu0 %v624
    %1245 = vmatpush1.msra.mxu0 %v623
    %1246 = vmatprep.subr.mxu0 %v632
    %1247 = vmatpush1.msra.mxu0 %v631
    %1248 = vmatprep.subr.mxu0 %v640
    %1249 = vmatpush1.msra.mxu0 %v639
    %1250 = vmatprep.subr.mxu0 %v648
    %1251 = vmatpush1.msra.mxu0 %v647
    %1252 = vmatprep.mubr.f32.mxu0 %v136
    %1253 = vmatmul.mubr.f32.gmra.mrb[0].mxu0 %v135
    %v1254 = vpop.f32.mrb[0].mxu0
    %v1255 = vadd.f32 %v1184, %v1254
    %v1256 = vpop.f32.mrb[0].mxu0
    %v1257 = vadd.f32 %v1186, %v1256
    %1258 = vdwg.mxu0
    %v1259 = vmax.f32 %v829, 0.0
    %v1260 = vmax.f32 %v831, 0.0
    %v1261 = vmax.f32 %v971, 0.0
    %v1262 = vmax.f32 %v973, 0.0
    %v1263 = vmax.f32 %v1113, 0.0
    %v1264 = vmax.f32 %v1115, 0.0
    %v1265 = vmax.f32 %v1255, 0.0
    %v1266 = vmax.f32 %v1257, 0.0
    %v1267 = vld [vmem:[#allocation6] sm:$0xff]
    %v1268 = vld [vmem:[#allocation6 + $0x8] sm:$0xff]
    %v1269 = vld [vmem:[#allocation6 + $0x10] sm:$0xff]
    %v1270 = vld [vmem:[#allocation6 + $0x18] sm:$0xff]
    %v1271 = vld [vmem:[#allocation6 + $0x20] sm:$0xff]
    %v1272 = vld [vmem:[#allocation6 + $0x28] sm:$0xff]
    %v1273 = vld [vmem:[#allocation6 + $0x30] sm:$0xff]
    %v1274 = vld [vmem:[#allocation6 + $0x38] sm:$0xff]
    %v1275 = vld [vmem:[#allocation6 + $0x40] sm:$0xff]
    %v1276 = vld [vmem:[#allocation6 + $0x48] sm:$0xff]
    %v1277 = vld [vmem:[#allocation6 + $0x50] sm:$0xff]
    %v1278 = vld [vmem:[#allocation6 + $0x58] sm:$0xff]
    %v1279 = vld [vmem:[#allocation6 + $0x60] sm:$0xff]
    %v1280 = vld [vmem:[#allocation6 + $0x68] sm:$0xff]
    %v1281 = vld [vmem:[#allocation6 + $0x70] sm:$0xff]
    %v1282 = vld [vmem:[#allocation6 + $0x78] sm:$0xff]
    %v1283 = vld [vmem:[#allocation6 + $0x80] sm:$0xff]
    %v1284 = vld [vmem:[#allocation6 + $0x88] sm:$0xff]
    %v1285 = vld [vmem:[#allocation6 + $0x90] sm:$0xff]
    %v1286 = vld [vmem:[#allocation6 + $0x98] sm:$0xff]
    %v1287 = vld [vmem:[#allocation6 + $0xa0] sm:$0xff]
    %v1288 = vld [vmem:[#allocation6 + $0xa8] sm:$0xff]
    %v1289 = vld [vmem:[#allocation6 + $0xb0] sm:$0xff]
    %v1290 = vld [vmem:[#allocation6 + $0xb8] sm:$0xff]
    %v1291 = vld [vmem:[#allocation6 + $0xc0] sm:$0xff]
    %v1292 = vld [vmem:[#allocation6 + $0xc8] sm:$0xff]
    %v1293 = vld [vmem:[#allocation6 + $0xd0] sm:$0xff]
    %v1294 = vld [vmem:[#allocation6 + $0xd8] sm:$0xff]
    %v1295 = vld [vmem:[#allocation6 + $0xe0] sm:$0xff]
    %v1296 = vld [vmem:[#allocation6 + $0xe8] sm:$0xff]
    %v1297 = vld [vmem:[#allocation6 + $0xf0] sm:$0xff]
    %v1298 = vld [vmem:[#allocation6 + $0xf8] sm:$0xff]
    %v1299 = vld [vmem:[#allocation6 + $0x100] sm:$0xff]
    %v1300 = vld [vmem:[#allocation6 + $0x108] sm:$0xff]
    %v1301 = vld [vmem:[#allocation6 + $0x110] sm:$0xff]
    %v1302 = vld [vmem:[#allocation6 + $0x118] sm:$0xff]
    %v1303 = vld [vmem:[#allocation6 + $0x120] sm:$0xff]
    %v1304 = vld [vmem:[#allocation6 + $0x128] sm:$0xff]
    %v1305 = vld [vmem:[#allocation6 + $0x130] sm:$0xff]
    %v1306 = vld [vmem:[#allocation6 + $0x138] sm:$0xff]
    %v1307 = vld [vmem:[#allocation6 + $0x140] sm:$0xff]
    %v1308 = vld [vmem:[#allocation6 + $0x148] sm:$0xff]
    %v1309 = vld [vmem:[#allocation6 + $0x150] sm:$0xff]
    %v1310 = vld [vmem:[#allocation6 + $0x158] sm:$0xff]
    %v1311 = vld [vmem:[#allocation6 + $0x160] sm:$0xff]
    %v1312 = vld [vmem:[#allocation6 + $0x168] sm:$0xff]
    %v1313 = vld [vmem:[#allocation6 + $0x170] sm:$0xff]
    %v1314 = vld [vmem:[#allocation6 + $0x178] sm:$0xff]
    %v1315 = vld [vmem:[#allocation6 + $0x180] sm:$0xff]
    %v1316 = vld [vmem:[#allocation6 + $0x188] sm:$0xff]
    %v1317 = vld [vmem:[#allocation6 + $0x190] sm:$0xff]
    %v1318 = vld [vmem:[#allocation6 + $0x198] sm:$0xff]
    %v1319 = vld [vmem:[#allocation6 + $0x1a0] sm:$0xff]
    %v1320 = vld [vmem:[#allocation6 + $0x1a8] sm:$0xff]
    %v1321 = vld [vmem:[#allocation6 + $0x1b0] sm:$0xff]
    %v1322 = vld [vmem:[#allocation6 + $0x1b8] sm:$0xff]
    %v1323 = vld [vmem:[#allocation6 + $0x1c0] sm:$0xff]
    %v1324 = vld [vmem:[#allocation6 + $0x1c8] sm:$0xff]
    %v1325 = vld [vmem:[#allocation6 + $0x1d0] sm:$0xff]
    %v1326 = vld [vmem:[#allocation6 + $0x1d8] sm:$0xff]
    %v1327 = vld [vmem:[#allocation6 + $0x1e0] sm:$0xff]
    %v1328 = vld [vmem:[#allocation6 + $0x1e8] sm:$0xff]
    %v1329 = vld [vmem:[#allocation6 + $0x1f0] sm:$0xff]
    %v1330 = vld [vmem:[#allocation6 + $0x1f8] sm:$0xff]
    %v1331 = vld [vmem:[#allocation6 + $0x200] sm:$0xff]
    %v1332 = vld [vmem:[#allocation6 + $0x208] sm:$0xff]
    %v1333 = vld [vmem:[#allocation6 + $0x210] sm:$0xff]
    %v1334 = vld [vmem:[#allocation6 + $0x218] sm:$0xff]
    %v1335 = vld [vmem:[#allocation6 + $0x220] sm:$0xff]
    %v1336 = vld [vmem:[#allocation6 + $0x228] sm:$0xff]
    %v1337 = vld [vmem:[#allocation6 + $0x230] sm:$0xff]
    %v1338 = vld [vmem:[#allocation6 + $0x238] sm:$0xff]
    %v1339 = vld [vmem:[#allocation6 + $0x240] sm:$0xff]
    %v1340 = vld [vmem:[#allocation6 + $0x248] sm:$0xff]
    %v1341 = vld [vmem:[#allocation6 + $0x250] sm:$0xff]
    %v1342 = vld [vmem:[#allocation6 + $0x258] sm:$0xff]
    %v1343 = vld [vmem:[#allocation6 + $0x260] sm:$0xff]
    %v1344 = vld [vmem:[#allocation6 + $0x268] sm:$0xff]
    %v1345 = vld [vmem:[#allocation6 + $0x270] sm:$0xff]
    %v1346 = vld [vmem:[#allocation6 + $0x278] sm:$0xff]
    %v1347 = vld [vmem:[#allocation6 + $0x280] sm:$0xff]
    %v1348 = vld [vmem:[#allocation6 + $0x288] sm:$0xff]
    %v1349 = vld [vmem:[#allocation6 + $0x290] sm:$0xff]
    %v1350 = vld [vmem:[#allocation6 + $0x298] sm:$0xff]
    %v1351 = vld [vmem:[#allocation6 + $0x2a0] sm:$0xff]
    %v1352 = vld [vmem:[#allocation6 + $0x2a8] sm:$0xff]
    %v1353 = vld [vmem:[#allocation6 + $0x2b0] sm:$0xff]
    %v1354 = vld [vmem:[#allocation6 + $0x2b8] sm:$0xff]
    %v1355 = vld [vmem:[#allocation6 + $0x2c0] sm:$0xff]
    %v1356 = vld [vmem:[#allocation6 + $0x2c8] sm:$0xff]
    %v1357 = vld [vmem:[#allocation6 + $0x2d0] sm:$0xff]
    %v1358 = vld [vmem:[#allocation6 + $0x2d8] sm:$0xff]
    %v1359 = vld [vmem:[#allocation6 + $0x2e0] sm:$0xff]
    %v1360 = vld [vmem:[#allocation6 + $0x2e8] sm:$0xff]
    %v1361 = vld [vmem:[#allocation6 + $0x2f0] sm:$0xff]
    %v1362 = vld [vmem:[#allocation6 + $0x2f8] sm:$0xff]
    %v1363 = vld [vmem:[#allocation6 + $0x300] sm:$0xff]
    %v1364 = vld [vmem:[#allocation6 + $0x308] sm:$0xff]
    %v1365 = vld [vmem:[#allocation6 + $0x310] sm:$0xff]
    %v1366 = vld [vmem:[#allocation6 + $0x318] sm:$0xff]
    %v1367 = vld [vmem:[#allocation6 + $0x320] sm:$0xff]
    %v1368 = vld [vmem:[#allocation6 + $0x328] sm:$0xff]
    %v1369 = vld [vmem:[#allocation6 + $0x330] sm:$0xff]
    %v1370 = vld [vmem:[#allocation6 + $0x338] sm:$0xff]
    %v1371 = vld [vmem:[#allocation6 + $0x340] sm:$0xff]
    %v1372 = vld [vmem:[#allocation6 + $0x348] sm:$0xff]
    %v1373 = vld [vmem:[#allocation6 + $0x350] sm:$0xff]
    %v1374 = vld [vmem:[#allocation6 + $0x358] sm:$0xff]
    %v1375 = vld [vmem:[#allocation6 + $0x360] sm:$0xff]
    %v1376 = vld [vmem:[#allocation6 + $0x368] sm:$0xff]
    %v1377 = vld [vmem:[#allocation6 + $0x370] sm:$0xff]
    %v1378 = vld [vmem:[#allocation6 + $0x378] sm:$0xff]
    %v1379 = vld [vmem:[#allocation6 + $0x380] sm:$0xff]
    %v1380 = vld [vmem:[#allocation6 + $0x388] sm:$0xff]
    %v1381 = vld [vmem:[#allocation6 + $0x390] sm:$0xff]
    %v1382 = vld [vmem:[#allocation6 + $0x398] sm:$0xff]
    %v1383 = vld [vmem:[#allocation6 + $0x3a0] sm:$0xff]
    %v1384 = vld [vmem:[#allocation6 + $0x3a8] sm:$0xff]
    %v1385 = vld [vmem:[#allocation6 + $0x3b0] sm:$0xff]
    %v1386 = vld [vmem:[#allocation6 + $0x3b8] sm:$0xff]
    %v1387 = vld [vmem:[#allocation6 + $0x3c0] sm:$0xff]
    %v1388 = vld [vmem:[#allocation6 + $0x3c8] sm:$0xff]
    %v1389 = vld [vmem:[#allocation6 + $0x3d0] sm:$0xff]
    %v1390 = vld [vmem:[#allocation6 + $0x3d8] sm:$0xff]
    %v1391 = vld [vmem:[#allocation6 + $0x3e0] sm:$0xff]
    %v1392 = vld [vmem:[#allocation6 + $0x3e8] sm:$0xff]
    %v1393 = vld [vmem:[#allocation6 + $0x3f0] sm:$0xff]
    %v1394 = vld [vmem:[#allocation6 + $0x3f8] sm:$0xff]
    %v1395 = vld [vmem:[#allocation6 + $0x400] sm:$0xff]
    %v1396 = vld [vmem:[#allocation6 + $0x408] sm:$0xff]
    %v1397 = vld [vmem:[#allocation6 + $0x410] sm:$0xff]
    %v1398 = vld [vmem:[#allocation6 + $0x418] sm:$0xff]
    %v1399 = vld [vmem:[#allocation6 + $0x420] sm:$0xff]
    %v1400 = vld [vmem:[#allocation6 + $0x428] sm:$0xff]
    %v1401 = vld [vmem:[#allocation6 + $0x430] sm:$0xff]
    %v1402 = vld [vmem:[#allocation6 + $0x438] sm:$0xff]
    %v1403 = vld [vmem:[#allocation6 + $0x440] sm:$0xff]
    %v1404 = vld [vmem:[#allocation6 + $0x448] sm:$0xff]
    %v1405 = vld [vmem:[#allocation6 + $0x450] sm:$0xff]
    %v1406 = vld [vmem:[#allocation6 + $0x458] sm:$0xff]
    %v1407 = vld [vmem:[#allocation6 + $0x460] sm:$0xff]
    %v1408 = vld [vmem:[#allocation6 + $0x468] sm:$0xff]
    %v1409 = vld [vmem:[#allocation6 + $0x470] sm:$0xff]
    %v1410 = vld [vmem:[#allocation6 + $0x478] sm:$0xff]
    %v1411 = vld [vmem:[#allocation6 + $0x480] sm:$0xff]
    %v1412 = vld [vmem:[#allocation6 + $0x488] sm:$0xff]
    %v1413 = vld [vmem:[#allocation6 + $0x490] sm:$0xff]
    %v1414 = vld [vmem:[#allocation6 + $0x498] sm:$0xff]
    %v1415 = vld [vmem:[#allocation6 + $0x4a0] sm:$0xff]
    %v1416 = vld [vmem:[#allocation6 + $0x4a8] sm:$0xff]
    %v1417 = vld [vmem:[#allocation6 + $0x4b0] sm:$0xff]
    %v1418 = vld [vmem:[#allocation6 + $0x4b8] sm:$0xff]
    %v1419 = vld [vmem:[#allocation6 + $0x4c0] sm:$0xff]
    %v1420 = vld [vmem:[#allocation6 + $0x4c8] sm:$0xff]
    %v1421 = vld [vmem:[#allocation6 + $0x4d0] sm:$0xff]
    %v1422 = vld [vmem:[#allocation6 + $0x4d8] sm:$0xff]
    %v1423 = vld [vmem:[#allocation6 + $0x4e0] sm:$0xff]
    %v1424 = vld [vmem:[#allocation6 + $0x4e8] sm:$0xff]
    %v1425 = vld [vmem:[#allocation6 + $0x4f0] sm:$0xff]
    %v1426 = vld [vmem:[#allocation6 + $0x4f8] sm:$0xff]
    %v1427 = vld [vmem:[#allocation6 + $0x500] sm:$0xff]
    %v1428 = vld [vmem:[#allocation6 + $0x508] sm:$0xff]
    %v1429 = vld [vmem:[#allocation6 + $0x510] sm:$0xff]
    %v1430 = vld [vmem:[#allocation6 + $0x518] sm:$0xff]
    %v1431 = vld [vmem:[#allocation6 + $0x520] sm:$0xff]
    %v1432 = vld [vmem:[#allocation6 + $0x528] sm:$0xff]
    %v1433 = vld [vmem:[#allocation6 + $0x530] sm:$0xff]
    %v1434 = vld [vmem:[#allocation6 + $0x538] sm:$0xff]
    %v1435 = vld [vmem:[#allocation6 + $0x540] sm:$0xff]
    %v1436 = vld [vmem:[#allocation6 + $0x548] sm:$0xff]
    %v1437 = vld [vmem:[#allocation6 + $0x550] sm:$0xff]
    %v1438 = vld [vmem:[#allocation6 + $0x558] sm:$0xff]
    %v1439 = vld [vmem:[#allocation6 + $0x560] sm:$0xff]
    %v1440 = vld [vmem:[#allocation6 + $0x568] sm:$0xff]
    %v1441 = vld [vmem:[#allocation6 + $0x570] sm:$0xff]
    %v1442 = vld [vmem:[#allocation6 + $0x578] sm:$0xff]
    %v1443 = vld [vmem:[#allocation6 + $0x580] sm:$0xff]
    %v1444 = vld [vmem:[#allocation6 + $0x588] sm:$0xff]
    %v1445 = vld [vmem:[#allocation6 + $0x590] sm:$0xff]
    %v1446 = vld [vmem:[#allocation6 + $0x598] sm:$0xff]
    %v1447 = vld [vmem:[#allocation6 + $0x5a0] sm:$0xff]
    %v1448 = vld [vmem:[#allocation6 + $0x5a8] sm:$0xff]
    %v1449 = vld [vmem:[#allocation6 + $0x5b0] sm:$0xff]
    %v1450 = vld [vmem:[#allocation6 + $0x5b8] sm:$0xff]
    %v1451 = vld [vmem:[#allocation6 + $0x5c0] sm:$0xff]
    %v1452 = vld [vmem:[#allocation6 + $0x5c8] sm:$0xff]
    %v1453 = vld [vmem:[#allocation6 + $0x5d0] sm:$0xff]
    %v1454 = vld [vmem:[#allocation6 + $0x5d8] sm:$0xff]
    %v1455 = vld [vmem:[#allocation6 + $0x5e0] sm:$0xff]
    %v1456 = vld [vmem:[#allocation6 + $0x5e8] sm:$0xff]
    %v1457 = vld [vmem:[#allocation6 + $0x5f0] sm:$0xff]
    %v1458 = vld [vmem:[#allocation6 + $0x5f8] sm:$0xff]
    %v1459 = vld [vmem:[#allocation6 + $0x600] sm:$0xff]
    %v1460 = vld [vmem:[#allocation6 + $0x608] sm:$0xff]
    %v1461 = vld [vmem:[#allocation6 + $0x610] sm:$0xff]
    %v1462 = vld [vmem:[#allocation6 + $0x618] sm:$0xff]
    %v1463 = vld [vmem:[#allocation6 + $0x620] sm:$0xff]
    %v1464 = vld [vmem:[#allocation6 + $0x628] sm:$0xff]
    %v1465 = vld [vmem:[#allocation6 + $0x630] sm:$0xff]
    %v1466 = vld [vmem:[#allocation6 + $0x638] sm:$0xff]
    %v1467 = vld [vmem:[#allocation6 + $0x640] sm:$0xff]
    %v1468 = vld [vmem:[#allocation6 + $0x648] sm:$0xff]
    %v1469 = vld [vmem:[#allocation6 + $0x650] sm:$0xff]
    %v1470 = vld [vmem:[#allocation6 + $0x658] sm:$0xff]
    %v1471 = vld [vmem:[#allocation6 + $0x660] sm:$0xff]
    %v1472 = vld [vmem:[#allocation6 + $0x668] sm:$0xff]
    %v1473 = vld [vmem:[#allocation6 + $0x670] sm:$0xff]
    %v1474 = vld [vmem:[#allocation6 + $0x678] sm:$0xff]
    %v1475 = vld [vmem:[#allocation6 + $0x680] sm:$0xff]
    %v1476 = vld [vmem:[#allocation6 + $0x688] sm:$0xff]
    %v1477 = vld [vmem:[#allocation6 + $0x690] sm:$0xff]
    %v1478 = vld [vmem:[#allocation6 + $0x698] sm:$0xff]
    %v1479 = vld [vmem:[#allocation6 + $0x6a0] sm:$0xff]
    %v1480 = vld [vmem:[#allocation6 + $0x6a8] sm:$0xff]
    %v1481 = vld [vmem:[#allocation6 + $0x6b0] sm:$0xff]
    %v1482 = vld [vmem:[#allocation6 + $0x6b8] sm:$0xff]
    %v1483 = vld [vmem:[#allocation6 + $0x6c0] sm:$0xff]
    %v1484 = vld [vmem:[#allocation6 + $0x6c8] sm:$0xff]
    %v1485 = vld [vmem:[#allocation6 + $0x6d0] sm:$0xff]
    %v1486 = vld [vmem:[#allocation6 + $0x6d8] sm:$0xff]
    %v1487 = vld [vmem:[#allocation6 + $0x6e0] sm:$0xff]
    %v1488 = vld [vmem:[#allocation6 + $0x6e8] sm:$0xff]
    %v1489 = vld [vmem:[#allocation6 + $0x6f0] sm:$0xff]
    %v1490 = vld [vmem:[#allocation6 + $0x6f8] sm:$0xff]
    %v1491 = vld [vmem:[#allocation6 + $0x700] sm:$0xff]
    %v1492 = vld [vmem:[#allocation6 + $0x708] sm:$0xff]
    %v1493 = vld [vmem:[#allocation6 + $0x710] sm:$0xff]
    %v1494 = vld [vmem:[#allocation6 + $0x718] sm:$0xff]
    %v1495 = vld [vmem:[#allocation6 + $0x720] sm:$0xff]
    %v1496 = vld [vmem:[#allocation6 + $0x728] sm:$0xff]
    %v1497 = vld [vmem:[#allocation6 + $0x730] sm:$0xff]
    %v1498 = vld [vmem:[#allocation6 + $0x738] sm:$0xff]
    %v1499 = vld [vmem:[#allocation6 + $0x740] sm:$0xff]
    %v1500 = vld [vmem:[#allocation6 + $0x748] sm:$0xff]
    %v1501 = vld [vmem:[#allocation6 + $0x750] sm:$0xff]
    %v1502 = vld [vmem:[#allocation6 + $0x758] sm:$0xff]
    %v1503 = vld [vmem:[#allocation6 + $0x760] sm:$0xff]
    %v1504 = vld [vmem:[#allocation6 + $0x768] sm:$0xff]
    %v1505 = vld [vmem:[#allocation6 + $0x770] sm:$0xff]
    %v1506 = vld [vmem:[#allocation6 + $0x778] sm:$0xff]
    %v1507 = vld [vmem:[#allocation6 + $0x780] sm:$0xff]
    %v1508 = vld [vmem:[#allocation6 + $0x788] sm:$0xff]
    %v1509 = vld [vmem:[#allocation6 + $0x790] sm:$0xff]
    %v1510 = vld [vmem:[#allocation6 + $0x798] sm:$0xff]
    %v1511 = vld [vmem:[#allocation6 + $0x7a0] sm:$0xff]
    %v1512 = vld [vmem:[#allocation6 + $0x7a8] sm:$0xff]
    %v1513 = vld [vmem:[#allocation6 + $0x7b0] sm:$0xff]
    %v1514 = vld [vmem:[#allocation6 + $0x7b8] sm:$0xff]
    %v1515 = vld [vmem:[#allocation6 + $0x7c0] sm:$0xff]
    %v1516 = vld [vmem:[#allocation6 + $0x7c8] sm:$0xff]
    %v1517 = vld [vmem:[#allocation6 + $0x7d0] sm:$0xff]
    %v1518 = vld [vmem:[#allocation6 + $0x7d8] sm:$0xff]
    %v1519 = vld [vmem:[#allocation6 + $0x7e0] sm:$0xff]
    %v1520 = vld [vmem:[#allocation6 + $0x7e8] sm:$0xff]
    %v1521 = vld [vmem:[#allocation6 + $0x7f0] sm:$0xff]
    %v1522 = vld [vmem:[#allocation6 + $0x7f8] sm:$0xff]
    %v1523 = vld [vmem:[#allocation6 + $0x800] sm:$0xff]
    %v1524 = vld [vmem:[#allocation6 + $0x808] sm:$0xff]
    %v1525 = vld [vmem:[#allocation6 + $0x810] sm:$0xff]
    %v1526 = vld [vmem:[#allocation6 + $0x818] sm:$0xff]
    %v1527 = vld [vmem:[#allocation6 + $0x820] sm:$0xff]
    %v1528 = vld [vmem:[#allocation6 + $0x828] sm:$0xff]
    %v1529 = vld [vmem:[#allocation6 + $0x830] sm:$0xff]
    %v1530 = vld [vmem:[#allocation6 + $0x838] sm:$0xff]
    %v1531 = vld [vmem:[#allocation6 + $0x840] sm:$0xff]
    %v1532 = vld [vmem:[#allocation6 + $0x848] sm:$0xff]
    %v1533 = vld [vmem:[#allocation6 + $0x850] sm:$0xff]
    %v1534 = vld [vmem:[#allocation6 + $0x858] sm:$0xff]
    %v1535 = vld [vmem:[#allocation6 + $0x860] sm:$0xff]
    %v1536 = vld [vmem:[#allocation6 + $0x868] sm:$0xff]
    %v1537 = vld [vmem:[#allocation6 + $0x870] sm:$0xff]
    %v1538 = vld [vmem:[#allocation6 + $0x878] sm:$0xff]
    %v1539 = vld [vmem:[#allocation6 + $0x880] sm:$0xff]
    %v1540 = vld [vmem:[#allocation6 + $0x888] sm:$0xff]
    %v1541 = vld [vmem:[#allocation6 + $0x890] sm:$0xff]
    %v1542 = vld [vmem:[#allocation6 + $0x898] sm:$0xff]
    %v1543 = vld [vmem:[#allocation6 + $0x8a0] sm:$0xff]
    %v1544 = vld [vmem:[#allocation6 + $0x8a8] sm:$0xff]
    %v1545 = vld [vmem:[#allocation6 + $0x8b0] sm:$0xff]
    %v1546 = vld [vmem:[#allocation6 + $0x8b8] sm:$0xff]
    %v1547 = vld [vmem:[#allocation6 + $0x8c0] sm:$0xff]
    %v1548 = vld [vmem:[#allocation6 + $0x8c8] sm:$0xff]
    %v1549 = vld [vmem:[#allocation6 + $0x8d0] sm:$0xff]
    %v1550 = vld [vmem:[#allocation6 + $0x8d8] sm:$0xff]
    %v1551 = vld [vmem:[#allocation6 + $0x8e0] sm:$0xff]
    %v1552 = vld [vmem:[#allocation6 + $0x8e8] sm:$0xff]
    %v1553 = vld [vmem:[#allocation6 + $0x8f0] sm:$0xff]
    %v1554 = vld [vmem:[#allocation6 + $0x8f8] sm:$0xff]
    %v1555 = vld [vmem:[#allocation6 + $0x900] sm:$0xff]
    %v1556 = vld [vmem:[#allocation6 + $0x908] sm:$0xff]
    %v1557 = vld [vmem:[#allocation6 + $0x910] sm:$0xff]
    %v1558 = vld [vmem:[#allocation6 + $0x918] sm:$0xff]
    %v1559 = vld [vmem:[#allocation6 + $0x920] sm:$0xff]
    %v1560 = vld [vmem:[#allocation6 + $0x928] sm:$0xff]
    %v1561 = vld [vmem:[#allocation6 + $0x930] sm:$0xff]
    %v1562 = vld [vmem:[#allocation6 + $0x938] sm:$0xff]
    %v1563 = vld [vmem:[#allocation6 + $0x940] sm:$0xff]
    %v1564 = vld [vmem:[#allocation6 + $0x948] sm:$0xff]
    %v1565 = vld [vmem:[#allocation6 + $0x950] sm:$0xff]
    %v1566 = vld [vmem:[#allocation6 + $0x958] sm:$0xff]
    %v1567 = vld [vmem:[#allocation6 + $0x960] sm:$0xff]
    %v1568 = vld [vmem:[#allocation6 + $0x968] sm:$0xff]
    %v1569 = vld [vmem:[#allocation6 + $0x970] sm:$0xff]
    %v1570 = vld [vmem:[#allocation6 + $0x978] sm:$0xff]
    %v1571 = vld [vmem:[#allocation6 + $0x980] sm:$0xff]
    %v1572 = vld [vmem:[#allocation6 + $0x988] sm:$0xff]
    %v1573 = vld [vmem:[#allocation6 + $0x990] sm:$0xff]
    %v1574 = vld [vmem:[#allocation6 + $0x998] sm:$0xff]
    %v1575 = vld [vmem:[#allocation6 + $0x9a0] sm:$0xff]
    %v1576 = vld [vmem:[#allocation6 + $0x9a8] sm:$0xff]
    %v1577 = vld [vmem:[#allocation6 + $0x9b0] sm:$0xff]
    %v1578 = vld [vmem:[#allocation6 + $0x9b8] sm:$0xff]
    %v1579 = vld [vmem:[#allocation6 + $0x9c0] sm:$0xff]
    %v1580 = vld [vmem:[#allocation6 + $0x9c8] sm:$0xff]
    %v1581 = vld [vmem:[#allocation6 + $0x9d0] sm:$0xff]
    %v1582 = vld [vmem:[#allocation6 + $0x9d8] sm:$0xff]
    %v1583 = vld [vmem:[#allocation6 + $0x9e0] sm:$0xff]
    %v1584 = vld [vmem:[#allocation6 + $0x9e8] sm:$0xff]
    %v1585 = vld [vmem:[#allocation6 + $0x9f0] sm:$0xff]
    %v1586 = vld [vmem:[#allocation6 + $0x9f8] sm:$0xff]
    %v1587 = vld [vmem:[#allocation6 + $0xa00] sm:$0xff]
    %v1588 = vld [vmem:[#allocation6 + $0xa08] sm:$0xff]
    %v1589 = vld [vmem:[#allocation6 + $0xa10] sm:$0xff]
    %v1590 = vld [vmem:[#allocation6 + $0xa18] sm:$0xff]
    %v1591 = vld [vmem:[#allocation6 + $0xa20] sm:$0xff]
    %v1592 = vld [vmem:[#allocation6 + $0xa28] sm:$0xff]
    %v1593 = vld [vmem:[#allocation6 + $0xa30] sm:$0xff]
    %v1594 = vld [vmem:[#allocation6 + $0xa38] sm:$0xff]
    %v1595 = vld [vmem:[#allocation6 + $0xa40] sm:$0xff]
    %v1596 = vld [vmem:[#allocation6 + $0xa48] sm:$0xff]
    %v1597 = vld [vmem:[#allocation6 + $0xa50] sm:$0xff]
    %v1598 = vld [vmem:[#allocation6 + $0xa58] sm:$0xff]
    %v1599 = vld [vmem:[#allocation6 + $0xa60] sm:$0xff]
    %v1600 = vld [vmem:[#allocation6 + $0xa68] sm:$0xff]
    %v1601 = vld [vmem:[#allocation6 + $0xa70] sm:$0xff]
    %v1602 = vld [vmem:[#allocation6 + $0xa78] sm:$0xff]
    %v1603 = vld [vmem:[#allocation6 + $0xa80] sm:$0xff]
    %v1604 = vld [vmem:[#allocation6 + $0xa88] sm:$0xff]
    %v1605 = vld [vmem:[#allocation6 + $0xa90] sm:$0xff]
    %v1606 = vld [vmem:[#allocation6 + $0xa98] sm:$0xff]
    %v1607 = vld [vmem:[#allocation6 + $0xaa0] sm:$0xff]
    %v1608 = vld [vmem:[#allocation6 + $0xaa8] sm:$0xff]
    %v1609 = vld [vmem:[#allocation6 + $0xab0] sm:$0xff]
    %v1610 = vld [vmem:[#allocation6 + $0xab8] sm:$0xff]
    %v1611 = vld [vmem:[#allocation6 + $0xac0] sm:$0xff]
    %v1612 = vld [vmem:[#allocation6 + $0xac8] sm:$0xff]
    %v1613 = vld [vmem:[#allocation6 + $0xad0] sm:$0xff]
    %v1614 = vld [vmem:[#allocation6 + $0xad8] sm:$0xff]
    %v1615 = vld [vmem:[#allocation6 + $0xae0] sm:$0xff]
    %v1616 = vld [vmem:[#allocation6 + $0xae8] sm:$0xff]
    %v1617 = vld [vmem:[#allocation6 + $0xaf0] sm:$0xff]
    %v1618 = vld [vmem:[#allocation6 + $0xaf8] sm:$0xff]
    %v1619 = vld [vmem:[#allocation6 + $0xb00] sm:$0xff]
    %v1620 = vld [vmem:[#allocation6 + $0xb08] sm:$0xff]
    %v1621 = vld [vmem:[#allocation6 + $0xb10] sm:$0xff]
    %v1622 = vld [vmem:[#allocation6 + $0xb18] sm:$0xff]
    %v1623 = vld [vmem:[#allocation6 + $0xb20] sm:$0xff]
    %v1624 = vld [vmem:[#allocation6 + $0xb28] sm:$0xff]
    %v1625 = vld [vmem:[#allocation6 + $0xb30] sm:$0xff]
    %v1626 = vld [vmem:[#allocation6 + $0xb38] sm:$0xff]
    %v1627 = vld [vmem:[#allocation6 + $0xb40] sm:$0xff]
    %v1628 = vld [vmem:[#allocation6 + $0xb48] sm:$0xff]
    %v1629 = vld [vmem:[#allocation6 + $0xb50] sm:$0xff]
    %v1630 = vld [vmem:[#allocation6 + $0xb58] sm:$0xff]
    %v1631 = vld [vmem:[#allocation6 + $0xb60] sm:$0xff]
    %v1632 = vld [vmem:[#allocation6 + $0xb68] sm:$0xff]
    %v1633 = vld [vmem:[#allocation6 + $0xb70] sm:$0xff]
    %v1634 = vld [vmem:[#allocation6 + $0xb78] sm:$0xff]
    %v1635 = vld [vmem:[#allocation6 + $0xb80] sm:$0xff]
    %v1636 = vld [vmem:[#allocation6 + $0xb88] sm:$0xff]
    %v1637 = vld [vmem:[#allocation6 + $0xb90] sm:$0xff]
    %v1638 = vld [vmem:[#allocation6 + $0xb98] sm:$0xff]
    %v1639 = vld [vmem:[#allocation6 + $0xba0] sm:$0xff]
    %v1640 = vld [vmem:[#allocation6 + $0xba8] sm:$0xff]
    %v1641 = vld [vmem:[#allocation6 + $0xbb0] sm:$0xff]
    %v1642 = vld [vmem:[#allocation6 + $0xbb8] sm:$0xff]
    %v1643 = vld [vmem:[#allocation6 + $0xbc0] sm:$0xff]
    %v1644 = vld [vmem:[#allocation6 + $0xbc8] sm:$0xff]
    %v1645 = vld [vmem:[#allocation6 + $0xbd0] sm:$0xff]
    %v1646 = vld [vmem:[#allocation6 + $0xbd8] sm:$0xff]
    %v1647 = vld [vmem:[#allocation6 + $0xbe0] sm:$0xff]
    %v1648 = vld [vmem:[#allocation6 + $0xbe8] sm:$0xff]
    %v1649 = vld [vmem:[#allocation6 + $0xbf0] sm:$0xff]
    %v1650 = vld [vmem:[#allocation6 + $0xbf8] sm:$0xff]
    %v1651 = vld [vmem:[#allocation6 + $0xc00] sm:$0xff]
    %v1652 = vld [vmem:[#allocation6 + $0xc08] sm:$0xff]
    %v1653 = vld [vmem:[#allocation6 + $0xc10] sm:$0xff]
    %v1654 = vld [vmem:[#allocation6 + $0xc18] sm:$0xff]
    %v1655 = vld [vmem:[#allocation6 + $0xc20] sm:$0xff]
    %v1656 = vld [vmem:[#allocation6 + $0xc28] sm:$0xff]
    %v1657 = vld [vmem:[#allocation6 + $0xc30] sm:$0xff]
    %v1658 = vld [vmem:[#allocation6 + $0xc38] sm:$0xff]
    %v1659 = vld [vmem:[#allocation6 + $0xc40] sm:$0xff]
    %v1660 = vld [vmem:[#allocation6 + $0xc48] sm:$0xff]
    %v1661 = vld [vmem:[#allocation6 + $0xc50] sm:$0xff]
    %v1662 = vld [vmem:[#allocation6 + $0xc58] sm:$0xff]
    %v1663 = vld [vmem:[#allocation6 + $0xc60] sm:$0xff]
    %v1664 = vld [vmem:[#allocation6 + $0xc68] sm:$0xff]
    %v1665 = vld [vmem:[#allocation6 + $0xc70] sm:$0xff]
    %v1666 = vld [vmem:[#allocation6 + $0xc78] sm:$0xff]
    %v1667 = vld [vmem:[#allocation6 + $0xc80] sm:$0xff]
    %v1668 = vld [vmem:[#allocation6 + $0xc88] sm:$0xff]
    %v1669 = vld [vmem:[#allocation6 + $0xc90] sm:$0xff]
    %v1670 = vld [vmem:[#allocation6 + $0xc98] sm:$0xff]
    %v1671 = vld [vmem:[#allocation6 + $0xca0] sm:$0xff]
    %v1672 = vld [vmem:[#allocation6 + $0xca8] sm:$0xff]
    %v1673 = vld [vmem:[#allocation6 + $0xcb0] sm:$0xff]
    %v1674 = vld [vmem:[#allocation6 + $0xcb8] sm:$0xff]
    %v1675 = vld [vmem:[#allocation6 + $0xcc0] sm:$0xff]
    %v1676 = vld [vmem:[#allocation6 + $0xcc8] sm:$0xff]
    %v1677 = vld [vmem:[#allocation6 + $0xcd0] sm:$0xff]
    %v1678 = vld [vmem:[#allocation6 + $0xcd8] sm:$0xff]
    %v1679 = vld [vmem:[#allocation6 + $0xce0] sm:$0xff]
    %v1680 = vld [vmem:[#allocation6 + $0xce8] sm:$0xff]
    %v1681 = vld [vmem:[#allocation6 + $0xcf0] sm:$0xff]
    %v1682 = vld [vmem:[#allocation6 + $0xcf8] sm:$0xff]
    %v1683 = vld [vmem:[#allocation6 + $0xd00] sm:$0xff]
    %v1684 = vld [vmem:[#allocation6 + $0xd08] sm:$0xff]
    %v1685 = vld [vmem:[#allocation6 + $0xd10] sm:$0xff]
    %v1686 = vld [vmem:[#allocation6 + $0xd18] sm:$0xff]
    %v1687 = vld [vmem:[#allocation6 + $0xd20] sm:$0xff]
    %v1688 = vld [vmem:[#allocation6 + $0xd28] sm:$0xff]
    %v1689 = vld [vmem:[#allocation6 + $0xd30] sm:$0xff]
    %v1690 = vld [vmem:[#allocation6 + $0xd38] sm:$0xff]
    %v1691 = vld [vmem:[#allocation6 + $0xd40] sm:$0xff]
    %v1692 = vld [vmem:[#allocation6 + $0xd48] sm:$0xff]
    %v1693 = vld [vmem:[#allocation6 + $0xd50] sm:$0xff]
    %v1694 = vld [vmem:[#allocation6 + $0xd58] sm:$0xff]
    %v1695 = vld [vmem:[#allocation6 + $0xd60] sm:$0xff]
    %v1696 = vld [vmem:[#allocation6 + $0xd68] sm:$0xff]
    %v1697 = vld [vmem:[#allocation6 + $0xd70] sm:$0xff]
    %v1698 = vld [vmem:[#allocation6 + $0xd78] sm:$0xff]
    %v1699 = vld [vmem:[#allocation6 + $0xd80] sm:$0xff]
    %v1700 = vld [vmem:[#allocation6 + $0xd88] sm:$0xff]
    %v1701 = vld [vmem:[#allocation6 + $0xd90] sm:$0xff]
    %v1702 = vld [vmem:[#allocation6 + $0xd98] sm:$0xff]
    %v1703 = vld [vmem:[#allocation6 + $0xda0] sm:$0xff]
    %v1704 = vld [vmem:[#allocation6 + $0xda8] sm:$0xff]
    %v1705 = vld [vmem:[#allocation6 + $0xdb0] sm:$0xff]
    %v1706 = vld [vmem:[#allocation6 + $0xdb8] sm:$0xff]
    %v1707 = vld [vmem:[#allocation6 + $0xdc0] sm:$0xff]
    %v1708 = vld [vmem:[#allocation6 + $0xdc8] sm:$0xff]
    %v1709 = vld [vmem:[#allocation6 + $0xdd0] sm:$0xff]
    %v1710 = vld [vmem:[#allocation6 + $0xdd8] sm:$0xff]
    %v1711 = vld [vmem:[#allocation6 + $0xde0] sm:$0xff]
    %v1712 = vld [vmem:[#allocation6 + $0xde8] sm:$0xff]
    %v1713 = vld [vmem:[#allocation6 + $0xdf0] sm:$0xff]
    %v1714 = vld [vmem:[#allocation6 + $0xdf8] sm:$0xff]
    %v1715 = vld [vmem:[#allocation6 + $0xe00] sm:$0xff]
    %v1716 = vld [vmem:[#allocation6 + $0xe08] sm:$0xff]
    %v1717 = vld [vmem:[#allocation6 + $0xe10] sm:$0xff]
    %v1718 = vld [vmem:[#allocation6 + $0xe18] sm:$0xff]
    %v1719 = vld [vmem:[#allocation6 + $0xe20] sm:$0xff]
    %v1720 = vld [vmem:[#allocation6 + $0xe28] sm:$0xff]
    %v1721 = vld [vmem:[#allocation6 + $0xe30] sm:$0xff]
    %v1722 = vld [vmem:[#allocation6 + $0xe38] sm:$0xff]
    %v1723 = vld [vmem:[#allocation6 + $0xe40] sm:$0xff]
    %v1724 = vld [vmem:[#allocation6 + $0xe48] sm:$0xff]
    %v1725 = vld [vmem:[#allocation6 + $0xe50] sm:$0xff]
    %v1726 = vld [vmem:[#allocation6 + $0xe58] sm:$0xff]
    %v1727 = vld [vmem:[#allocation6 + $0xe60] sm:$0xff]
    %v1728 = vld [vmem:[#allocation6 + $0xe68] sm:$0xff]
    %v1729 = vld [vmem:[#allocation6 + $0xe70] sm:$0xff]
    %v1730 = vld [vmem:[#allocation6 + $0xe78] sm:$0xff]
    %v1731 = vld [vmem:[#allocation6 + $0xe80] sm:$0xff]
    %v1732 = vld [vmem:[#allocation6 + $0xe88] sm:$0xff]
    %v1733 = vld [vmem:[#allocation6 + $0xe90] sm:$0xff]
    %v1734 = vld [vmem:[#allocation6 + $0xe98] sm:$0xff]
    %v1735 = vld [vmem:[#allocation6 + $0xea0] sm:$0xff]
    %v1736 = vld [vmem:[#allocation6 + $0xea8] sm:$0xff]
    %v1737 = vld [vmem:[#allocation6 + $0xeb0] sm:$0xff]
    %v1738 = vld [vmem:[#allocation6 + $0xeb8] sm:$0xff]
    %v1739 = vld [vmem:[#allocation6 + $0xec0] sm:$0xff]
    %v1740 = vld [vmem:[#allocation6 + $0xec8] sm:$0xff]
    %v1741 = vld [vmem:[#allocation6 + $0xed0] sm:$0xff]
    %v1742 = vld [vmem:[#allocation6 + $0xed8] sm:$0xff]
    %v1743 = vld [vmem:[#allocation6 + $0xee0] sm:$0xff]
    %v1744 = vld [vmem:[#allocation6 + $0xee8] sm:$0xff]
    %v1745 = vld [vmem:[#allocation6 + $0xef0] sm:$0xff]
    %v1746 = vld [vmem:[#allocation6 + $0xef8] sm:$0xff]
    %v1747 = vld [vmem:[#allocation6 + $0xf00] sm:$0xff]
    %v1748 = vld [vmem:[#allocation6 + $0xf08] sm:$0xff]
    %v1749 = vld [vmem:[#allocation6 + $0xf10] sm:$0xff]
    %v1750 = vld [vmem:[#allocation6 + $0xf18] sm:$0xff]
    %v1751 = vld [vmem:[#allocation6 + $0xf20] sm:$0xff]
    %v1752 = vld [vmem:[#allocation6 + $0xf28] sm:$0xff]
    %v1753 = vld [vmem:[#allocation6 + $0xf30] sm:$0xff]
    %v1754 = vld [vmem:[#allocation6 + $0xf38] sm:$0xff]
    %v1755 = vld [vmem:[#allocation6 + $0xf40] sm:$0xff]
    %v1756 = vld [vmem:[#allocation6 + $0xf48] sm:$0xff]
    %v1757 = vld [vmem:[#allocation6 + $0xf50] sm:$0xff]
    %v1758 = vld [vmem:[#allocation6 + $0xf58] sm:$0xff]
    %v1759 = vld [vmem:[#allocation6 + $0xf60] sm:$0xff]
    %v1760 = vld [vmem:[#allocation6 + $0xf68] sm:$0xff]
    %v1761 = vld [vmem:[#allocation6 + $0xf70] sm:$0xff]
    %v1762 = vld [vmem:[#allocation6 + $0xf78] sm:$0xff]
    %v1763 = vld [vmem:[#allocation6 + $0xf80] sm:$0xff]
    %v1764 = vld [vmem:[#allocation6 + $0xf88] sm:$0xff]
    %v1765 = vld [vmem:[#allocation6 + $0xf90] sm:$0xff]
    %v1766 = vld [vmem:[#allocation6 + $0xf98] sm:$0xff]
    %v1767 = vld [vmem:[#allocation6 + $0xfa0] sm:$0xff]
    %v1768 = vld [vmem:[#allocation6 + $0xfa8] sm:$0xff]
    %v1769 = vld [vmem:[#allocation6 + $0xfb0] sm:$0xff]
    %v1770 = vld [vmem:[#allocation6 + $0xfb8] sm:$0xff]
    %v1771 = vld [vmem:[#allocation6 + $0xfc0] sm:$0xff]
    %v1772 = vld [vmem:[#allocation6 + $0xfc8] sm:$0xff]
    %v1773 = vld [vmem:[#allocation6 + $0xfd0] sm:$0xff]
    %v1774 = vld [vmem:[#allocation6 + $0xfd8] sm:$0xff]
    %v1775 = vld [vmem:[#allocation6 + $0xfe0] sm:$0xff]
    %v1776 = vld [vmem:[#allocation6 + $0xfe8] sm:$0xff]
    %v1777 = vld [vmem:[#allocation6 + $0xff0] sm:$0xff]
    %v1778 = vld [vmem:[#allocation6 + $0xff8] sm:$0xff]
    %v1779 = vld [vmem:[#allocation7] sm:$0xf]
    %v1781 = vlaneseq
    %v1782 = vshrl.u32 %v1781, 7
    %v1783 = vsub.s32 0, %v1782
    %v1784 = vrot.slane %v1779, %v1783
    %v1785 = vlaneseq
    %v1786 = vshrl.u32 %v1785, 7
    %v1787 = vsub.s32 1, %v1786
    %v1788 = vrot.slane %v1779, %v1787
    %v1789 = vlaneseq
    %v1790 = vshrl.u32 %v1789, 7
    %v1791 = vsub.s32 2, %v1790
    %v1792 = vrot.slane %v1779, %v1791
    %v1793 = vlaneseq
    %v1794 = vshrl.u32 %v1793, 7
    %v1795 = vsub.s32 3, %v1794
    %v1796 = vrot.slane %v1779, %v1795
    %1801 = vmatprep.subr.mxu0 %v1268
    %1802 = vmatpush1.msra.mxu0 %v1267
    %1803 = vmatprep.subr.mxu0 %v1272
    %1804 = vmatpush1.msra.mxu0 %v1271
    %1805 = vmatprep.subr.mxu0 %v1276
    %1806 = vmatpush1.msra.mxu0 %v1275
    %1807 = vmatprep.subr.mxu0 %v1280
    %1808 = vmatpush1.msra.mxu0 %v1279
    %1809 = vmatprep.subr.mxu0 %v1284
    %1810 = vmatpush1.msra.mxu0 %v1283
    %1811 = vmatprep.subr.mxu0 %v1288
    %1812 = vmatpush1.msra.mxu0 %v1287
    %1813 = vmatprep.subr.mxu0 %v1292
    %1814 = vmatpush1.msra.mxu0 %v1291
    %1815 = vmatprep.subr.mxu0 %v1296
    %1816 = vmatpush1.msra.mxu0 %v1295
    %1817 = vmatprep.subr.mxu0 %v1300
    %1818 = vmatpush1.msra.mxu0 %v1299
    %1819 = vmatprep.subr.mxu0 %v1304
    %1820 = vmatpush1.msra.mxu0 %v1303
    %1821 = vmatprep.subr.mxu0 %v1308
    %1822 = vmatpush1.msra.mxu0 %v1307
    %1823 = vmatprep.subr.mxu0 %v1312
    %1824 = vmatpush1.msra.mxu0 %v1311
    %1825 = vmatprep.subr.mxu0 %v1316
    %1826 = vmatpush1.msra.mxu0 %v1315
    %1827 = vmatprep.subr.mxu0 %v1320
    %1828 = vmatpush1.msra.mxu0 %v1319
    %1829 = vmatprep.subr.mxu0 %v1324
    %1830 = vmatpush1.msra.mxu0 %v1323
    %1831 = vmatprep.subr.mxu0 %v1328
    %1832 = vmatpush1.msra.mxu0 %v1327
    %1833 = vmatprep.subr.mxu0 %v1332
    %1834 = vmatpush1.msra.mxu0 %v1331
    %1835 = vmatprep.subr.mxu0 %v1336
    %1836 = vmatpush1.msra.mxu0 %v1335
    %1837 = vmatprep.subr.mxu0 %v1340
    %1838 = vmatpush1.msra.mxu0 %v1339
    %1839 = vmatprep.subr.mxu0 %v1344
    %1840 = vmatpush1.msra.mxu0 %v1343
    %1841 = vmatprep.subr.mxu0 %v1348
    %1842 = vmatpush1.msra.mxu0 %v1347
    %1843 = vmatprep.subr.mxu0 %v1352
    %1844 = vmatpush1.msra.mxu0 %v1351
    %1845 = vmatprep.subr.mxu0 %v1356
    %1846 = vmatpush1.msra.mxu0 %v1355
    %1847 = vmatprep.subr.mxu0 %v1360
    %1848 = vmatpush1.msra.mxu0 %v1359
    %1849 = vmatprep.subr.mxu0 %v1364
    %1850 = vmatpush1.msra.mxu0 %v1363
    %1851 = vmatprep.subr.mxu0 %v1368
    %1852 = vmatpush1.msra.mxu0 %v1367
    %1853 = vmatprep.subr.mxu0 %v1372
    %1854 = vmatpush1.msra.mxu0 %v1371
    %1855 = vmatprep.subr.mxu0 %v1376
    %1856 = vmatpush1.msra.mxu0 %v1375
    %1857 = vmatprep.subr.mxu0 %v1380
    %1858 = vmatpush1.msra.mxu0 %v1379
    %1859 = vmatprep.subr.mxu0 %v1384
    %1860 = vmatpush1.msra.mxu0 %v1383
    %1861 = vmatprep.subr.mxu0 %v1388
    %1862 = vmatpush1.msra.mxu0 %v1387
    %1863 = vmatprep.subr.mxu0 %v1392
    %1864 = vmatpush1.msra.mxu0 %v1391
    %1865 = vmatprep.mubr.f32.mxu0 %v1260
    %1866 = vmatmul.mubr.f32.gmra.mrb[0].mxu0 %v1259
    %v1867 = vpop.f32.mrb[0].mxu0
    %v1868 = vadd.f32 %v1784, %v1867
    %v1869 = vpop.f32.mrb[0].mxu0
    %v1870 = vadd.f32 %v1788, %v1869
    %1871 = vdwg.mxu0
    %1872 = vmatprep.subr.mxu0 %v1396
    %1873 = vmatpush1.msra.mxu0 %v1395
    %1874 = vmatprep.subr.mxu0 %v1400
    %1875 = vmatpush1.msra.mxu0 %v1399
    %1876 = vmatprep.subr.mxu0 %v1404
    %1877 = vmatpush1.msra.mxu0 %v1403
    %1878 = vmatprep.subr.mxu0 %v1408
    %1879 = vmatpush1.msra.mxu0 %v1407
    %1880 = vmatprep.subr.mxu0 %v1412
    %1881 = vmatpush1.msra.mxu0 %v1411
    %1882 = vmatprep.subr.mxu0 %v1416
    %1883 = vmatpush1.msra.mxu0 %v1415
    %1884 = vmatprep.subr.mxu0 %v1420
    %1885 = vmatpush1.msra.mxu0 %v1419
    %1886 = vmatprep.subr.mxu0 %v1424
    %1887 = vmatpush1.msra.mxu0 %v1423
    %1888 = vmatprep.subr.mxu0 %v1428
    %1889 = vmatpush1.msra.mxu0 %v1427
    %1890 = vmatprep.subr.mxu0 %v1432
    %1891 = vmatpush1.msra.mxu0 %v1431
    %1892 = vmatprep.subr.mxu0 %v1436
    %1893 = vmatpush1.msra.mxu0 %v1435
    %1894 = vmatprep.subr.mxu0 %v1440
    %1895 = vmatpush1.msra.mxu0 %v1439
    %1896 = vmatprep.subr.mxu0 %v1444
    %1897 = vmatpush1.msra.mxu0 %v1443
    %1898 = vmatprep.subr.mxu0 %v1448
    %1899 = vmatpush1.msra.mxu0 %v1447
    %1900 = vmatprep.subr.mxu0 %v1452
    %1901 = vmatpush1.msra.mxu0 %v1451
    %1902 = vmatprep.subr.mxu0 %v1456
    %1903 = vmatpush1.msra.mxu0 %v1455
    %1904 = vmatprep.subr.mxu0 %v1460
    %1905 = vmatpush1.msra.mxu0 %v1459
    %1906 = vmatprep.subr.mxu0 %v1464
    %1907 = vmatpush1.msra.mxu0 %v1463
    %1908 = vmatprep.subr.mxu0 %v1468
    %1909 = vmatpush1.msra.mxu0 %v1467
    %1910 = vmatprep.subr.mxu0 %v1472
    %1911 = vmatpush1.msra.mxu0 %v1471
    %1912 = vmatprep.subr.mxu0 %v1476
    %1913 = vmatpush1.msra.mxu0 %v1475
    %1914 = vmatprep.subr.mxu0 %v1480
    %1915 = vmatpush1.msra.mxu0 %v1479
    %1916 = vmatprep.subr.mxu0 %v1484
    %1917 = vmatpush1.msra.mxu0 %v1483
    %1918 = vmatprep.subr.mxu0 %v1488
    %1919 = vmatpush1.msra.mxu0 %v1487
    %1920 = vmatprep.subr.mxu0 %v1492
    %1921 = vmatpush1.msra.mxu0 %v1491
    %1922 = vmatprep.subr.mxu0 %v1496
    %1923 = vmatpush1.msra.mxu0 %v1495
    %1924 = vmatprep.subr.mxu0 %v1500
    %1925 = vmatpush1.msra.mxu0 %v1499
    %1926 = vmatprep.subr.mxu0 %v1504
    %1927 = vmatpush1.msra.mxu0 %v1503
    %1928 = vmatprep.subr.mxu0 %v1508
    %1929 = vmatpush1.msra.mxu0 %v1507
    %1930 = vmatprep.subr.mxu0 %v1512
    %1931 = vmatpush1.msra.mxu0 %v1511
    %1932 = vmatprep.subr.mxu0 %v1516
    %1933 = vmatpush1.msra.mxu0 %v1515
    %1934 = vmatprep.subr.mxu0 %v1520
    %1935 = vmatpush1.msra.mxu0 %v1519
    %1936 = vmatprep.mubr.f32.mxu0 %v1262
    %1937 = vmatmul.mubr.f32.gmra.mrb[0].mxu0 %v1261
    %v1938 = vpop.f32.mrb[0].mxu0
    %v1939 = vadd.f32 %v1868, %v1938
    %v1940 = vpop.f32.mrb[0].mxu0
    %v1941 = vadd.f32 %v1870, %v1940
    %1942 = vdwg.mxu0
    %1943 = vmatprep.subr.mxu0 %v1524
    %1944 = vmatpush1.msra.mxu0 %v1523
    %1945 = vmatprep.subr.mxu0 %v1528
    %1946 = vmatpush1.msra.mxu0 %v1527
    %1947 = vmatprep.subr.mxu0 %v1532
    %1948 = vmatpush1.msra.mxu0 %v1531
    %1949 = vmatprep.subr.mxu0 %v1536
    %1950 = vmatpush1.msra.mxu0 %v1535
    %1951 = vmatprep.subr.mxu0 %v1540
    %1952 = vmatpush1.msra.mxu0 %v1539
    %1953 = vmatprep.subr.mxu0 %v1544
    %1954 = vmatpush1.msra.mxu0 %v1543
    %1955 = vmatprep.subr.mxu0 %v1548
    %1956 = vmatpush1.msra.mxu0 %v1547
    %1957 = vmatprep.subr.mxu0 %v1552
    %1958 = vmatpush1.msra.mxu0 %v1551
    %1959 = vmatprep.subr.mxu0 %v1556
    %1960 = vmatpush1.msra.mxu0 %v1555
    %1961 = vmatprep.subr.mxu0 %v1560
    %1962 = vmatpush1.msra.mxu0 %v1559
    %1963 = vmatprep.subr.mxu0 %v1564
    %1964 = vmatpush1.msra.mxu0 %v1563
    %1965 = vmatprep.subr.mxu0 %v1568
    %1966 = vmatpush1.msra.mxu0 %v1567
    %1967 = vmatprep.subr.mxu0 %v1572
    %1968 = vmatpush1.msra.mxu0 %v1571
    %1969 = vmatprep.subr.mxu0 %v1576
    %1970 = vmatpush1.msra.mxu0 %v1575
    %1971 = vmatprep.subr.mxu0 %v1580
    %1972 = vmatpush1.msra.mxu0 %v1579
    %1973 = vmatprep.subr.mxu0 %v1584
    %1974 = vmatpush1.msra.mxu0 %v1583
    %1975 = vmatprep.subr.mxu0 %v1588
    %1976 = vmatpush1.msra.mxu0 %v1587
    %1977 = vmatprep.subr.mxu0 %v1592
    %1978 = vmatpush1.msra.mxu0 %v1591
    %1979 = vmatprep.subr.mxu0 %v1596
    %1980 = vmatpush1.msra.mxu0 %v1595
    %1981 = vmatprep.subr.mxu0 %v1600
    %1982 = vmatpush1.msra.mxu0 %v1599
    %1983 = vmatprep.subr.mxu0 %v1604
    %1984 = vmatpush1.msra.mxu0 %v1603
    %1985 = vmatprep.subr.mxu0 %v1608
    %1986 = vmatpush1.msra.mxu0 %v1607
    %1987 = vmatprep.subr.mxu0 %v1612
    %1988 = vmatpush1.msra.mxu0 %v1611
    %1989 = vmatprep.subr.mxu0 %v1616
    %1990 = vmatpush1.msra.mxu0 %v1615
    %1991 = vmatprep.subr.mxu0 %v1620
    %1992 = vmatpush1.msra.mxu0 %v1619
    %1993 = vmatprep.subr.mxu0 %v1624
    %1994 = vmatpush1.msra.mxu0 %v1623
    %1995 = vmatprep.subr.mxu0 %v1628
    %1996 = vmatpush1.msra.mxu0 %v1627
    %1997 = vmatprep.subr.mxu0 %v1632
    %1998 = vmatpush1.msra.mxu0 %v1631
    %1999 = vmatprep.subr.mxu0 %v1636
    %2000 = vmatpush1.msra.mxu0 %v1635
    %2001 = vmatprep.subr.mxu0 %v1640
    %2002 = vmatpush1.msra.mxu0 %v1639
    %2003 = vmatprep.subr.mxu0 %v1644
    %2004 = vmatpush1.msra.mxu0 %v1643
    %2005 = vmatprep.subr.mxu0 %v1648
    %2006 = vmatpush1.msra.mxu0 %v1647
    %2007 = vmatprep.mubr.f32.mxu0 %v1264
    %2008 = vmatmul.mubr.f32.gmra.mrb[0].mxu0 %v1263
    %v2009 = vpop.f32.mrb[0].mxu0
    %v2010 = vadd.f32 %v1939, %v2009
    %v2011 = vpop.f32.mrb[0].mxu0
    %v2012 = vadd.f32 %v1941, %v2011
    %2013 = vdwg.mxu0
    %2014 = vmatprep.subr.mxu0 %v1652
    %2015 = vmatpush1.msra.mxu0 %v1651
    %2016 = vmatprep.subr.mxu0 %v1656
    %2017 = vmatpush1.msra.mxu0 %v1655
    %2018 = vmatprep.subr.mxu0 %v1660
    %2019 = vmatpush1.msra.mxu0 %v1659
    %2020 = vmatprep.subr.mxu0 %v1664
    %2021 = vmatpush1.msra.mxu0 %v1663
    %2022 = vmatprep.subr.mxu0 %v1668
    %2023 = vmatpush1.msra.mxu0 %v1667
    %2024 = vmatprep.subr.mxu0 %v1672
    %2025 = vmatpush1.msra.mxu0 %v1671
    %2026 = vmatprep.subr.mxu0 %v1676
    %2027 = vmatpush1.msra.mxu0 %v1675
    %2028 = vmatprep.subr.mxu0 %v1680
    %2029 = vmatpush1.msra.mxu0 %v1679
    %2030 = vmatprep.subr.mxu0 %v1684
    %2031 = vmatpush1.msra.mxu0 %v1683
    %2032 = vmatprep.subr.mxu0 %v1688
    %2033 = vmatpush1.msra.mxu0 %v1687
    %2034 = vmatprep.subr.mxu0 %v1692
    %2035 = vmatpush1.msra.mxu0 %v1691
    %2036 = vmatprep.subr.mxu0 %v1696
    %2037 = vmatpush1.msra.mxu0 %v1695
    %2038 = vmatprep.subr.mxu0 %v1700
    %2039 = vmatpush1.msra.mxu0 %v1699
    %2040 = vmatprep.subr.mxu0 %v1704
    %2041 = vmatpush1.msra.mxu0 %v1703
    %2042 = vmatprep.subr.mxu0 %v1708
    %2043 = vmatpush1.msra.mxu0 %v1707
    %2044 = vmatprep.subr.mxu0 %v1712
    %2045 = vmatpush1.msra.mxu0 %v1711
    %2046 = vmatprep.subr.mxu0 %v1716
    %2047 = vmatpush1.msra.mxu0 %v1715
    %2048 = vmatprep.subr.mxu0 %v1720
    %2049 = vmatpush1.msra.mxu0 %v1719
    %2050 = vmatprep.subr.mxu0 %v1724
    %2051 = vmatpush1.msra.mxu0 %v1723
    %2052 = vmatprep.subr.mxu0 %v1728
    %2053 = vmatpush1.msra.mxu0 %v1727
    %2054 = vmatprep.subr.mxu0 %v1732
    %2055 = vmatpush1.msra.mxu0 %v1731
    %2056 = vmatprep.subr.mxu0 %v1736
    %2057 = vmatpush1.msra.mxu0 %v1735
    %2058 = vmatprep.subr.mxu0 %v1740
    %2059 = vmatpush1.msra.mxu0 %v1739
    %2060 = vmatprep.subr.mxu0 %v1744
    %2061 = vmatpush1.msra.mxu0 %v1743
    %2062 = vmatprep.subr.mxu0 %v1748
    %2063 = vmatpush1.msra.mxu0 %v1747
    %2064 = vmatprep.subr.mxu0 %v1752
    %2065 = vmatpush1.msra.mxu0 %v1751
    %2066 = vmatprep.subr.mxu0 %v1756
    %2067 = vmatpush1.msra.mxu0 %v1755
    %2068 = vmatprep.subr.mxu0 %v1760
    %2069 = vmatpush1.msra.mxu0 %v1759
    %2070 = vmatprep.subr.mxu0 %v1764
    %2071 = vmatpush1.msra.mxu0 %v1763
    %2072 = vmatprep.subr.mxu0 %v1768
    %2073 = vmatpush1.msra.mxu0 %v1767
    %2074 = vmatprep.subr.mxu0 %v1772
    %2075 = vmatpush1.msra.mxu0 %v1771
    %2076 = vmatprep.subr.mxu0 %v1776
    %2077 = vmatpush1.msra.mxu0 %v1775
    %2078 = vmatprep.mubr.f32.mxu0 %v1266
    %2079 = vmatmul.mubr.f32.gmra.mrb[0].mxu0 %v1265
    %v2080 = vpop.f32.mrb[0].mxu0
    %v2081 = vadd.f32 %v2010, %v2080
    %v2082 = vpop.f32.mrb[0].mxu0
    %v2083 = vadd.f32 %v2012, %v2082
    %2084 = vdwg.mxu0
    %2085 = vmatprep.subr.mxu0 %v1270
    %2086 = vmatpush1.msra.mxu0 %v1269
    %2087 = vmatprep.subr.mxu0 %v1274
    %2088 = vmatpush1.msra.mxu0 %v1273
    %2089 = vmatprep.subr.mxu0 %v1278
    %2090 = vmatpush1.msra.mxu0 %v1277
    %2091 = vmatprep.subr.mxu0 %v1282
    %2092 = vmatpush1.msra.mxu0 %v1281
    %2093 = vmatprep.subr.mxu0 %v1286
    %2094 = vmatpush1.msra.mxu0 %v1285
    %2095 = vmatprep.subr.mxu0 %v1290
    %2096 = vmatpush1.msra.mxu0 %v1289
    %2097 = vmatprep.subr.mxu0 %v1294
    %2098 = vmatpush1.msra.mxu0 %v1293
    %2099 = vmatprep.subr.mxu0 %v1298
    %2100 = vmatpush1.msra.mxu0 %v1297
    %2101 = vmatprep.subr.mxu0 %v1302
    %2102 = vmatpush1.msra.mxu0 %v1301
    %2103 = vmatprep.subr.mxu0 %v1306
    %2104 = vmatpush1.msra.mxu0 %v1305
    %2105 = vmatprep.subr.mxu0 %v1310
    %2106 = vmatpush1.msra.mxu0 %v1309
    %2107 = vmatprep.subr.mxu0 %v1314
    %2108 = vmatpush1.msra.mxu0 %v1313
    %2109 = vmatprep.subr.mxu0 %v1318
    %2110 = vmatpush1.msra.mxu0 %v1317
    %2111 = vmatprep.subr.mxu0 %v1322
    %2112 = vmatpush1.msra.mxu0 %v1321
    %2113 = vmatprep.subr.mxu0 %v1326
    %2114 = vmatpush1.msra.mxu0 %v1325
    %2115 = vmatprep.subr.mxu0 %v1330
    %2116 = vmatpush1.msra.mxu0 %v1329
    %2117 = vmatprep.subr.mxu0 %v1334
    %2118 = vmatpush1.msra.mxu0 %v1333
    %2119 = vmatprep.subr.mxu0 %v1338
    %2120 = vmatpush1.msra.mxu0 %v1337
    %2121 = vmatprep.subr.mxu0 %v1342
    %2122 = vmatpush1.msra.mxu0 %v1341
    %2123 = vmatprep.subr.mxu0 %v1346
    %2124 = vmatpush1.msra.mxu0 %v1345
    %2125 = vmatprep.subr.mxu0 %v1350
    %2126 = vmatpush1.msra.mxu0 %v1349
    %2127 = vmatprep.subr.mxu0 %v1354
    %2128 = vmatpush1.msra.mxu0 %v1353
    %2129 = vmatprep.subr.mxu0 %v1358
    %2130 = vmatpush1.msra.mxu0 %v1357
    %2131 = vmatprep.subr.mxu0 %v1362
    %2132 = vmatpush1.msra.mxu0 %v1361
    %2133 = vmatprep.subr.mxu0 %v1366
    %2134 = vmatpush1.msra.mxu0 %v1365
    %2135 = vmatprep.subr.mxu0 %v1370
    %2136 = vmatpush1.msra.mxu0 %v1369
    %2137 = vmatprep.subr.mxu0 %v1374
    %2138 = vmatpush1.msra.mxu0 %v1373
    %2139 = vmatprep.subr.mxu0 %v1378
    %2140 = vmatpush1.msra.mxu0 %v1377
    %2141 = vmatprep.subr.mxu0 %v1382
    %2142 = vmatpush1.msra.mxu0 %v1381
    %2143 = vmatprep.subr.mxu0 %v1386
    %2144 = vmatpush1.msra.mxu0 %v1385
    %2145 = vmatprep.subr.mxu0 %v1390
    %2146 = vmatpush1.msra.mxu0 %v1389
    %2147 = vmatprep.subr.mxu0 %v1394
    %2148 = vmatpush1.msra.mxu0 %v1393
    %2149 = vmatprep.mubr.f32.mxu0 %v1260
    %2150 = vmatmul.mubr.f32.gmra.mrb[0].mxu0 %v1259
    %v2151 = vpop.f32.mrb[0].mxu0
    %v2152 = vadd.f32 %v1792, %v2151
    %v2153 = vpop.f32.mrb[0].mxu0
    %v2154 = vadd.f32 %v1796, %v2153
    %2155 = vdwg.mxu0
    %2156 = vmatprep.subr.mxu0 %v1398
    %2157 = vmatpush1.msra.mxu0 %v1397
    %2158 = vmatprep.subr.mxu0 %v1402
    %2159 = vmatpush1.msra.mxu0 %v1401
    %2160 = vmatprep.subr.mxu0 %v1406
    %2161 = vmatpush1.msra.mxu0 %v1405
    %2162 = vmatprep.subr.mxu0 %v1410
    %2163 = vmatpush1.msra.mxu0 %v1409
    %2164 = vmatprep.subr.mxu0 %v1414
    %2165 = vmatpush1.msra.mxu0 %v1413
    %2166 = vmatprep.subr.mxu0 %v1418
    %2167 = vmatpush1.msra.mxu0 %v1417
    %2168 = vmatprep.subr.mxu0 %v1422
    %2169 = vmatpush1.msra.mxu0 %v1421
    %2170 = vmatprep.subr.mxu0 %v1426
    %2171 = vmatpush1.msra.mxu0 %v1425
    %2172 = vmatprep.subr.mxu0 %v1430
    %2173 = vmatpush1.msra.mxu0 %v1429
    %2174 = vmatprep.subr.mxu0 %v1434
    %2175 = vmatpush1.msra.mxu0 %v1433
    %2176 = vmatprep.subr.mxu0 %v1438
    %2177 = vmatpush1.msra.mxu0 %v1437
    %2178 = vmatprep.subr.mxu0 %v1442
    %2179 = vmatpush1.msra.mxu0 %v1441
    %2180 = vmatprep.subr.mxu0 %v1446
    %2181 = vmatpush1.msra.mxu0 %v1445
    %2182 = vmatprep.subr.mxu0 %v1450
    %2183 = vmatpush1.msra.mxu0 %v1449
    %2184 = vmatprep.subr.mxu0 %v1454
    %2185 = vmatpush1.msra.mxu0 %v1453
    %2186 = vmatprep.subr.mxu0 %v1458
    %2187 = vmatpush1.msra.mxu0 %v1457
    %2188 = vmatprep.subr.mxu0 %v1462
    %2189 = vmatpush1.msra.mxu0 %v1461
    %2190 = vmatprep.subr.mxu0 %v1466
    %2191 = vmatpush1.msra.mxu0 %v1465
    %2192 = vmatprep.subr.mxu0 %v1470
    %2193 = vmatpush1.msra.mxu0 %v1469
    %2194 = vmatprep.subr.mxu0 %v1474
    %2195 = vmatpush1.msra.mxu0 %v1473
    %2196 = vmatprep.subr.mxu0 %v1478
    %2197 = vmatpush1.msra.mxu0 %v1477
    %2198 = vmatprep.subr.mxu0 %v1482
    %2199 = vmatpush1.msra.mxu0 %v1481
    %2200 = vmatprep.subr.mxu0 %v1486
    %2201 = vmatpush1.msra.mxu0 %v1485
    %2202 = vmatprep.subr.mxu0 %v1490
    %2203 = vmatpush1.msra.mxu0 %v1489
    %2204 = vmatprep.subr.mxu0 %v1494
    %2205 = vmatpush1.msra.mxu0 %v1493
    %2206 = vmatprep.subr.mxu0 %v1498
    %2207 = vmatpush1.msra.mxu0 %v1497
    %2208 = vmatprep.subr.mxu0 %v1502
    %2209 = vmatpush1.msra.mxu0 %v1501
    %2210 = vmatprep.subr.mxu0 %v1506
    %2211 = vmatpush1.msra.mxu0 %v1505
    %2212 = vmatprep.subr.mxu0 %v1510
    %2213 = vmatpush1.msra.mxu0 %v1509
    %2214 = vmatprep.subr.mxu0 %v1514
    %2215 = vmatpush1.msra.mxu0 %v1513
    %2216 = vmatprep.subr.mxu0 %v1518
    %2217 = vmatpush1.msra.mxu0 %v1517
    %2218 = vmatprep.subr.mxu0 %v1522
    %2219 = vmatpush1.msra.mxu0 %v1521
    %2220 = vmatprep.mubr.f32.mxu0 %v1262
    %2221 = vmatmul.mubr.f32.gmra.mrb[0].mxu0 %v1261
    %v2222 = vpop.f32.mrb[0].mxu0
    %v2223 = vadd.f32 %v2152, %v2222
    %v2224 = vpop.f32.mrb[0].mxu0
    %v2225 = vadd.f32 %v2154, %v2224
    %2226 = vdwg.mxu0
    %2227 = vmatprep.subr.mxu0 %v1526
    %2228 = vmatpush1.msra.mxu0 %v1525
    %2229 = vmatprep.subr.mxu0 %v1530
    %2230 = vmatpush1.msra.mxu0 %v1529
    %2231 = vmatprep.subr.mxu0 %v1534
    %2232 = vmatpush1.msra.mxu0 %v1533
    %2233 = vmatprep.subr.mxu0 %v1538
    %2234 = vmatpush1.msra.mxu0 %v1537
    %2235 = vmatprep.subr.mxu0 %v1542
    %2236 = vmatpush1.msra.mxu0 %v1541
    %2237 = vmatprep.subr.mxu0 %v1546
    %2238 = vmatpush1.msra.mxu0 %v1545
    %2239 = vmatprep.subr.mxu0 %v1550
    %2240 = vmatpush1.msra.mxu0 %v1549
    %2241 = vmatprep.subr.mxu0 %v1554
    %2242 = vmatpush1.msra.mxu0 %v1553
    %2243 = vmatprep.subr.mxu0 %v1558
    %2244 = vmatpush1.msra.mxu0 %v1557
    %2245 = vmatprep.subr.mxu0 %v1562
    %2246 = vmatpush1.msra.mxu0 %v1561
    %2247 = vmatprep.subr.mxu0 %v1566
    %2248 = vmatpush1.msra.mxu0 %v1565
    %2249 = vmatprep.subr.mxu0 %v1570
    %2250 = vmatpush1.msra.mxu0 %v1569
    %2251 = vmatprep.subr.mxu0 %v1574
    %2252 = vmatpush1.msra.mxu0 %v1573
    %2253 = vmatprep.subr.mxu0 %v1578
    %2254 = vmatpush1.msra.mxu0 %v1577
    %2255 = vmatprep.subr.mxu0 %v1582
    %2256 = vmatpush1.msra.mxu0 %v1581
    %2257 = vmatprep.subr.mxu0 %v1586
    %2258 = vmatpush1.msra.mxu0 %v1585
    %2259 = vmatprep.subr.mxu0 %v1590
    %2260 = vmatpush1.msra.mxu0 %v1589
    %2261 = vmatprep.subr.mxu0 %v1594
    %2262 = vmatpush1.msra.mxu0 %v1593
    %2263 = vmatprep.subr.mxu0 %v1598
    %2264 = vmatpush1.msra.mxu0 %v1597
    %2265 = vmatprep.subr.mxu0 %v1602
    %2266 = vmatpush1.msra.mxu0 %v1601
    %2267 = vmatprep.subr.mxu0 %v1606
    %2268 = vmatpush1.msra.mxu0 %v1605
    %2269 = vmatprep.subr.mxu0 %v1610
    %2270 = vmatpush1.msra.mxu0 %v1609
    %2271 = vmatprep.subr.mxu0 %v1614
    %2272 = vmatpush1.msra.mxu0 %v1613
    %2273 = vmatprep.subr.mxu0 %v1618
    %2274 = vmatpush1.msra.mxu0 %v1617
    %2275 = vmatprep.subr.mxu0 %v1622
    %2276 = vmatpush1.msra.mxu0 %v1621
    %2277 = vmatprep.subr.mxu0 %v1626
    %2278 = vmatpush1.msra.mxu0 %v1625
    %2279 = vmatprep.subr.mxu0 %v1630
    %2280 = vmatpush1.msra.mxu0 %v1629
    %2281 = vmatprep.subr.mxu0 %v1634
    %2282 = vmatpush1.msra.mxu0 %v1633
    %2283 = vmatprep.subr.mxu0 %v1638
    %2284 = vmatpush1.msra.mxu0 %v1637
    %2285 = vmatprep.subr.mxu0 %v1642
    %2286 = vmatpush1.msra.mxu0 %v1641
    %2287 = vmatprep.subr.mxu0 %v1646
    %2288 = vmatpush1.msra.mxu0 %v1645
    %2289 = vmatprep.subr.mxu0 %v1650
    %2290 = vmatpush1.msra.mxu0 %v1649
    %2291 = vmatprep.mubr.f32.mxu0 %v1264
    %2292 = vmatmul.mubr.f32.gmra.mrb[0].mxu0 %v1263
    %v2293 = vpop.f32.mrb[0].mxu0
    %v2294 = vadd.f32 %v2223, %v2293
    %v2295 = vpop.f32.mrb[0].mxu0
    %v2296 = vadd.f32 %v2225, %v2295
    %2297 = vdwg.mxu0
    %2298 = vmatprep.subr.mxu0 %v1654
    %2299 = vmatpush1.msra.mxu0 %v1653
    %2300 = vmatprep.subr.mxu0 %v1658
    %2301 = vmatpush1.msra.mxu0 %v1657
    %2302 = vmatprep.subr.mxu0 %v1662
    %2303 = vmatpush1.msra.mxu0 %v1661
    %2304 = vmatprep.subr.mxu0 %v1666
    %2305 = vmatpush1.msra.mxu0 %v1665
    %2306 = vmatprep.subr.mxu0 %v1670
    %2307 = vmatpush1.msra.mxu0 %v1669
    %2308 = vmatprep.subr.mxu0 %v1674
    %2309 = vmatpush1.msra.mxu0 %v1673
    %2310 = vmatprep.subr.mxu0 %v1678
    %2311 = vmatpush1.msra.mxu0 %v1677
    %2312 = vmatprep.subr.mxu0 %v1682
    %2313 = vmatpush1.msra.mxu0 %v1681
    %2314 = vmatprep.subr.mxu0 %v1686
    %2315 = vmatpush1.msra.mxu0 %v1685
    %2316 = vmatprep.subr.mxu0 %v1690
    %2317 = vmatpush1.msra.mxu0 %v1689
    %2318 = vmatprep.subr.mxu0 %v1694
    %2319 = vmatpush1.msra.mxu0 %v1693
    %2320 = vmatprep.subr.mxu0 %v1698
    %2321 = vmatpush1.msra.mxu0 %v1697
    %2322 = vmatprep.subr.mxu0 %v1702
    %2323 = vmatpush1.msra.mxu0 %v1701
    %2324 = vmatprep.subr.mxu0 %v1706
    %2325 = vmatpush1.msra.mxu0 %v1705
    %2326 = vmatprep.subr.mxu0 %v1710
    %2327 = vmatpush1.msra.mxu0 %v1709
    %2328 = vmatprep.subr.mxu0 %v1714
    %2329 = vmatpush1.msra.mxu0 %v1713
    %2330 = vmatprep.subr.mxu0 %v1718
    %2331 = vmatpush1.msra.mxu0 %v1717
    %2332 = vmatprep.subr.mxu0 %v1722
    %2333 = vmatpush1.msra.mxu0 %v1721
    %2334 = vmatprep.subr.mxu0 %v1726
    %2335 = vmatpush1.msra.mxu0 %v1725
    %2336 = vmatprep.subr.mxu0 %v1730
    %2337 = vmatpush1.msra.mxu0 %v1729
    %2338 = vmatprep.subr.mxu0 %v1734
    %2339 = vmatpush1.msra.mxu0 %v1733
    %2340 = vmatprep.subr.mxu0 %v1738
    %2341 = vmatpush1.msra.mxu0 %v1737
    %2342 = vmatprep.subr.mxu0 %v1742
    %2343 = vmatpush1.msra.mxu0 %v1741
    %2344 = vmatprep.subr.mxu0 %v1746
    %2345 = vmatpush1.msra.mxu0 %v1745
    %2346 = vmatprep.subr.mxu0 %v1750
    %2347 = vmatpush1.msra.mxu0 %v1749
    %2348 = vmatprep.subr.mxu0 %v1754
    %2349 = vmatpush1.msra.mxu0 %v1753
    %2350 = vmatprep.subr.mxu0 %v1758
    %2351 = vmatpush1.msra.mxu0 %v1757
    %2352 = vmatprep.subr.mxu0 %v1762
    %2353 = vmatpush1.msra.mxu0 %v1761
    %2354 = vmatprep.subr.mxu0 %v1766
    %2355 = vmatpush1.msra.mxu0 %v1765
    %2356 = vmatprep.subr.mxu0 %v1770
    %2357 = vmatpush1.msra.mxu0 %v1769
    %2358 = vmatprep.subr.mxu0 %v1774
    %2359 = vmatpush1.msra.mxu0 %v1773
    %2360 = vmatprep.subr.mxu0 %v1778
    %2361 = vmatpush1.msra.mxu0 %v1777
    %2362 = vmatprep.mubr.f32.mxu0 %v1266
    %2363 = vmatmul.mubr.f32.gmra.mrb[0].mxu0 %v1265
    %v2364 = vpop.f32.mrb[0].mxu0
    %v2365 = vadd.f32 %v2294, %v2364
    %v2366 = vpop.f32.mrb[0].mxu0
    %v2367 = vadd.f32 %v2296, %v2366
    %2368 = vdwg.mxu0
    %v2369 = vmax.f32 %v2081, 0.0
    %v2370 = vmax.f32 %v2083, 0.0
    %v2371 = vmax.f32 %v2365, 0.0
    %v2372 = vmax.f32 %v2367, 0.0
    %v2373 = vld [vmem:[#allocation9] sm:$0xff]
    %v2374 = vld [vmem:[#allocation9 + $0x8] sm:$0xff]
    %v2375 = vld [vmem:[#allocation9 + $0x10] sm:$0xff]
    %v2376 = vld [vmem:[#allocation9 + $0x18] sm:$0xff]
    %v2377 = vld [vmem:[#allocation9 + $0x20] sm:$0xff]
    %v2378 = vld [vmem:[#allocation9 + $0x28] sm:$0xff]
    %v2379 = vld [vmem:[#allocation9 + $0x30] sm:$0xff]
    %v2380 = vld [vmem:[#allocation9 + $0x38] sm:$0xff]
    %v2381 = vld [vmem:[#allocation9 + $0x40] sm:$0xff]
    %v2382 = vld [vmem:[#allocation9 + $0x48] sm:$0xff]
    %v2383 = vld [vmem:[#allocation9 + $0x50] sm:$0xff]
    %v2384 = vld [vmem:[#allocation9 + $0x58] sm:$0xff]
    %v2385 = vld [vmem:[#allocation9 + $0x60] sm:$0xff]
    %v2386 = vld [vmem:[#allocation9 + $0x68] sm:$0xff]
    %v2387 = vld [vmem:[#allocation9 + $0x70] sm:$0xff]
    %v2388 = vld [vmem:[#allocation9 + $0x78] sm:$0xff]
    %v2389 = vld [vmem:[#allocation9 + $0x80] sm:$0xff]
    %v2390 = vld [vmem:[#allocation9 + $0x88] sm:$0xff]
    %v2391 = vld [vmem:[#allocation9 + $0x90] sm:$0xff]
    %v2392 = vld [vmem:[#allocation9 + $0x98] sm:$0xff]
    %v2393 = vld [vmem:[#allocation9 + $0xa0] sm:$0xff]
    %v2394 = vld [vmem:[#allocation9 + $0xa8] sm:$0xff]
    %v2395 = vld [vmem:[#allocation9 + $0xb0] sm:$0xff]
    %v2396 = vld [vmem:[#allocation9 + $0xb8] sm:$0xff]
    %v2397 = vld [vmem:[#allocation9 + $0xc0] sm:$0xff]
    %v2398 = vld [vmem:[#allocation9 + $0xc8] sm:$0xff]
    %v2399 = vld [vmem:[#allocation9 + $0xd0] sm:$0xff]
    %v2400 = vld [vmem:[#allocation9 + $0xd8] sm:$0xff]
    %v2401 = vld [vmem:[#allocation9 + $0xe0] sm:$0xff]
    %v2402 = vld [vmem:[#allocation9 + $0xe8] sm:$0xff]
    %v2403 = vld [vmem:[#allocation9 + $0xf0] sm:$0xff]
    %v2404 = vld [vmem:[#allocation9 + $0xf8] sm:$0xff]
    %v2405 = vld [vmem:[#allocation9 + $0x100] sm:$0xff]
    %v2406 = vld [vmem:[#allocation9 + $0x108] sm:$0xff]
    %v2407 = vld [vmem:[#allocation9 + $0x110] sm:$0xff]
    %v2408 = vld [vmem:[#allocation9 + $0x118] sm:$0xff]
    %v2409 = vld [vmem:[#allocation9 + $0x120] sm:$0xff]
    %v2410 = vld [vmem:[#allocation9 + $0x128] sm:$0xff]
    %v2411 = vld [vmem:[#allocation9 + $0x130] sm:$0xff]
    %v2412 = vld [vmem:[#allocation9 + $0x138] sm:$0xff]
    %v2413 = vld [vmem:[#allocation9 + $0x140] sm:$0xff]
    %v2414 = vld [vmem:[#allocation9 + $0x148] sm:$0xff]
    %v2415 = vld [vmem:[#allocation9 + $0x150] sm:$0xff]
    %v2416 = vld [vmem:[#allocation9 + $0x158] sm:$0xff]
    %v2417 = vld [vmem:[#allocation9 + $0x160] sm:$0xff]
    %v2418 = vld [vmem:[#allocation9 + $0x168] sm:$0xff]
    %v2419 = vld [vmem:[#allocation9 + $0x170] sm:$0xff]
    %v2420 = vld [vmem:[#allocation9 + $0x178] sm:$0xff]
    %v2421 = vld [vmem:[#allocation9 + $0x180] sm:$0xff]
    %v2422 = vld [vmem:[#allocation9 + $0x188] sm:$0xff]
    %v2423 = vld [vmem:[#allocation9 + $0x190] sm:$0xff]
    %v2424 = vld [vmem:[#allocation9 + $0x198] sm:$0xff]
    %v2425 = vld [vmem:[#allocation9 + $0x1a0] sm:$0xff]
    %v2426 = vld [vmem:[#allocation9 + $0x1a8] sm:$0xff]
    %v2427 = vld [vmem:[#allocation9 + $0x1b0] sm:$0xff]
    %v2428 = vld [vmem:[#allocation9 + $0x1b8] sm:$0xff]
    %v2429 = vld [vmem:[#allocation9 + $0x1c0] sm:$0xff]
    %v2430 = vld [vmem:[#allocation9 + $0x1c8] sm:$0xff]
    %v2431 = vld [vmem:[#allocation9 + $0x1d0] sm:$0xff]
    %v2432 = vld [vmem:[#allocation9 + $0x1d8] sm:$0xff]
    %v2433 = vld [vmem:[#allocation9 + $0x1e0] sm:$0xff]
    %v2434 = vld [vmem:[#allocation9 + $0x1e8] sm:$0xff]
    %v2435 = vld [vmem:[#allocation9 + $0x1f0] sm:$0xff]
    %v2436 = vld [vmem:[#allocation9 + $0x1f8] sm:$0xff]
    %v2437 = vld [vmem:[#allocation9 + $0x200] sm:$0xff]
    %v2438 = vld [vmem:[#allocation9 + $0x208] sm:$0xff]
    %v2439 = vld [vmem:[#allocation9 + $0x210] sm:$0xff]
    %v2440 = vld [vmem:[#allocation9 + $0x218] sm:$0xff]
    %v2441 = vld [vmem:[#allocation9 + $0x220] sm:$0xff]
    %v2442 = vld [vmem:[#allocation9 + $0x228] sm:$0xff]
    %v2443 = vld [vmem:[#allocation9 + $0x230] sm:$0xff]
    %v2444 = vld [vmem:[#allocation9 + $0x238] sm:$0xff]
    %v2445 = vld [vmem:[#allocation9 + $0x240] sm:$0xff]
    %v2446 = vld [vmem:[#allocation9 + $0x248] sm:$0xff]
    %v2447 = vld [vmem:[#allocation9 + $0x250] sm:$0xff]
    %v2448 = vld [vmem:[#allocation9 + $0x258] sm:$0xff]
    %v2449 = vld [vmem:[#allocation9 + $0x260] sm:$0xff]
    %v2450 = vld [vmem:[#allocation9 + $0x268] sm:$0xff]
    %v2451 = vld [vmem:[#allocation9 + $0x270] sm:$0xff]
    %v2452 = vld [vmem:[#allocation9 + $0x278] sm:$0xff]
    %v2453 = vld [vmem:[#allocation9 + $0x280] sm:$0xff]
    %v2454 = vld [vmem:[#allocation9 + $0x288] sm:$0xff]
    %v2455 = vld [vmem:[#allocation9 + $0x290] sm:$0xff]
    %v2456 = vld [vmem:[#allocation9 + $0x298] sm:$0xff]
    %v2457 = vld [vmem:[#allocation9 + $0x2a0] sm:$0xff]
    %v2458 = vld [vmem:[#allocation9 + $0x2a8] sm:$0xff]
    %v2459 = vld [vmem:[#allocation9 + $0x2b0] sm:$0xff]
    %v2460 = vld [vmem:[#allocation9 + $0x2b8] sm:$0xff]
    %v2461 = vld [vmem:[#allocation9 + $0x2c0] sm:$0xff]
    %v2462 = vld [vmem:[#allocation9 + $0x2c8] sm:$0xff]
    %v2463 = vld [vmem:[#allocation9 + $0x2d0] sm:$0xff]
    %v2464 = vld [vmem:[#allocation9 + $0x2d8] sm:$0xff]
    %v2465 = vld [vmem:[#allocation9 + $0x2e0] sm:$0xff]
    %v2466 = vld [vmem:[#allocation9 + $0x2e8] sm:$0xff]
    %v2467 = vld [vmem:[#allocation9 + $0x2f0] sm:$0xff]
    %v2468 = vld [vmem:[#allocation9 + $0x2f8] sm:$0xff]
    %v2469 = vld [vmem:[#allocation9 + $0x300] sm:$0xff]
    %v2470 = vld [vmem:[#allocation9 + $0x308] sm:$0xff]
    %v2471 = vld [vmem:[#allocation9 + $0x310] sm:$0xff]
    %v2472 = vld [vmem:[#allocation9 + $0x318] sm:$0xff]
    %v2473 = vld [vmem:[#allocation9 + $0x320] sm:$0xff]
    %v2474 = vld [vmem:[#allocation9 + $0x328] sm:$0xff]
    %v2475 = vld [vmem:[#allocation9 + $0x330] sm:$0xff]
    %v2476 = vld [vmem:[#allocation9 + $0x338] sm:$0xff]
    %v2477 = vld [vmem:[#allocation9 + $0x340] sm:$0xff]
    %v2478 = vld [vmem:[#allocation9 + $0x348] sm:$0xff]
    %v2479 = vld [vmem:[#allocation9 + $0x350] sm:$0xff]
    %v2480 = vld [vmem:[#allocation9 + $0x358] sm:$0xff]
    %v2481 = vld [vmem:[#allocation9 + $0x360] sm:$0xff]
    %v2482 = vld [vmem:[#allocation9 + $0x368] sm:$0xff]
    %v2483 = vld [vmem:[#allocation9 + $0x370] sm:$0xff]
    %v2484 = vld [vmem:[#allocation9 + $0x378] sm:$0xff]
    %v2485 = vld [vmem:[#allocation9 + $0x380] sm:$0xff]
    %v2486 = vld [vmem:[#allocation9 + $0x388] sm:$0xff]
    %v2487 = vld [vmem:[#allocation9 + $0x390] sm:$0xff]
    %v2488 = vld [vmem:[#allocation9 + $0x398] sm:$0xff]
    %v2489 = vld [vmem:[#allocation9 + $0x3a0] sm:$0xff]
    %v2490 = vld [vmem:[#allocation9 + $0x3a8] sm:$0xff]
    %v2491 = vld [vmem:[#allocation9 + $0x3b0] sm:$0xff]
    %v2492 = vld [vmem:[#allocation9 + $0x3b8] sm:$0xff]
    %v2493 = vld [vmem:[#allocation9 + $0x3c0] sm:$0xff]
    %v2494 = vld [vmem:[#allocation9 + $0x3c8] sm:$0xff]
    %v2495 = vld [vmem:[#allocation9 + $0x3d0] sm:$0xff]
    %v2496 = vld [vmem:[#allocation9 + $0x3d8] sm:$0xff]
    %v2497 = vld [vmem:[#allocation9 + $0x3e0] sm:$0xff]
    %v2498 = vld [vmem:[#allocation9 + $0x3e8] sm:$0xff]
    %v2499 = vld [vmem:[#allocation9 + $0x3f0] sm:$0xff]
    %v2500 = vld [vmem:[#allocation9 + $0x3f8] sm:$0xff]
    %v2501 = vld [vmem:[#allocation9 + $0x400] sm:$0xff]
    %v2502 = vld [vmem:[#allocation9 + $0x408] sm:$0xff]
    %v2503 = vld [vmem:[#allocation9 + $0x410] sm:$0xff]
    %v2504 = vld [vmem:[#allocation9 + $0x418] sm:$0xff]
    %v2505 = vld [vmem:[#allocation9 + $0x420] sm:$0xff]
    %v2506 = vld [vmem:[#allocation9 + $0x428] sm:$0xff]
    %v2507 = vld [vmem:[#allocation9 + $0x430] sm:$0xff]
    %v2508 = vld [vmem:[#allocation9 + $0x438] sm:$0xff]
    %v2509 = vld [vmem:[#allocation9 + $0x440] sm:$0xff]
    %v2510 = vld [vmem:[#allocation9 + $0x448] sm:$0xff]
    %v2511 = vld [vmem:[#allocation9 + $0x450] sm:$0xff]
    %v2512 = vld [vmem:[#allocation9 + $0x458] sm:$0xff]
    %v2513 = vld [vmem:[#allocation9 + $0x460] sm:$0xff]
    %v2514 = vld [vmem:[#allocation9 + $0x468] sm:$0xff]
    %v2515 = vld [vmem:[#allocation9 + $0x470] sm:$0xff]
    %v2516 = vld [vmem:[#allocation9 + $0x478] sm:$0xff]
    %v2517 = vld [vmem:[#allocation9 + $0x480] sm:$0xff]
    %v2518 = vld [vmem:[#allocation9 + $0x488] sm:$0xff]
    %v2519 = vld [vmem:[#allocation9 + $0x490] sm:$0xff]
    %v2520 = vld [vmem:[#allocation9 + $0x498] sm:$0xff]
    %v2521 = vld [vmem:[#allocation9 + $0x4a0] sm:$0xff]
    %v2522 = vld [vmem:[#allocation9 + $0x4a8] sm:$0xff]
    %v2523 = vld [vmem:[#allocation9 + $0x4b0] sm:$0xff]
    %v2524 = vld [vmem:[#allocation9 + $0x4b8] sm:$0xff]
    %v2525 = vld [vmem:[#allocation9 + $0x4c0] sm:$0xff]
    %v2526 = vld [vmem:[#allocation9 + $0x4c8] sm:$0xff]
    %v2527 = vld [vmem:[#allocation9 + $0x4d0] sm:$0xff]
    %v2528 = vld [vmem:[#allocation9 + $0x4d8] sm:$0xff]
    %v2529 = vld [vmem:[#allocation9 + $0x4e0] sm:$0xff]
    %v2530 = vld [vmem:[#allocation9 + $0x4e8] sm:$0xff]
    %v2531 = vld [vmem:[#allocation9 + $0x4f0] sm:$0xff]
    %v2532 = vld [vmem:[#allocation9 + $0x4f8] sm:$0xff]
    %v2533 = vld [vmem:[#allocation9 + $0x500] sm:$0xff]
    %v2534 = vld [vmem:[#allocation9 + $0x508] sm:$0xff]
    %v2535 = vld [vmem:[#allocation9 + $0x510] sm:$0xff]
    %v2536 = vld [vmem:[#allocation9 + $0x518] sm:$0xff]
    %v2537 = vld [vmem:[#allocation9 + $0x520] sm:$0xff]
    %v2538 = vld [vmem:[#allocation9 + $0x528] sm:$0xff]
    %v2539 = vld [vmem:[#allocation9 + $0x530] sm:$0xff]
    %v2540 = vld [vmem:[#allocation9 + $0x538] sm:$0xff]
    %v2541 = vld [vmem:[#allocation9 + $0x540] sm:$0xff]
    %v2542 = vld [vmem:[#allocation9 + $0x548] sm:$0xff]
    %v2543 = vld [vmem:[#allocation9 + $0x550] sm:$0xff]
    %v2544 = vld [vmem:[#allocation9 + $0x558] sm:$0xff]
    %v2545 = vld [vmem:[#allocation9 + $0x560] sm:$0xff]
    %v2546 = vld [vmem:[#allocation9 + $0x568] sm:$0xff]
    %v2547 = vld [vmem:[#allocation9 + $0x570] sm:$0xff]
    %v2548 = vld [vmem:[#allocation9 + $0x578] sm:$0xff]
    %v2549 = vld [vmem:[#allocation9 + $0x580] sm:$0xff]
    %v2550 = vld [vmem:[#allocation9 + $0x588] sm:$0xff]
    %v2551 = vld [vmem:[#allocation9 + $0x590] sm:$0xff]
    %v2552 = vld [vmem:[#allocation9 + $0x598] sm:$0xff]
    %v2553 = vld [vmem:[#allocation9 + $0x5a0] sm:$0xff]
    %v2554 = vld [vmem:[#allocation9 + $0x5a8] sm:$0xff]
    %v2555 = vld [vmem:[#allocation9 + $0x5b0] sm:$0xff]
    %v2556 = vld [vmem:[#allocation9 + $0x5b8] sm:$0xff]
    %v2557 = vld [vmem:[#allocation9 + $0x5c0] sm:$0xff]
    %v2558 = vld [vmem:[#allocation9 + $0x5c8] sm:$0xff]
    %v2559 = vld [vmem:[#allocation9 + $0x5d0] sm:$0xff]
    %v2560 = vld [vmem:[#allocation9 + $0x5d8] sm:$0xff]
    %v2561 = vld [vmem:[#allocation9 + $0x5e0] sm:$0xff]
    %v2562 = vld [vmem:[#allocation9 + $0x5e8] sm:$0xff]
    %v2563 = vld [vmem:[#allocation9 + $0x5f0] sm:$0xff]
    %v2564 = vld [vmem:[#allocation9 + $0x5f8] sm:$0xff]
    %v2565 = vld [vmem:[#allocation9 + $0x600] sm:$0xff]
    %v2566 = vld [vmem:[#allocation9 + $0x608] sm:$0xff]
    %v2567 = vld [vmem:[#allocation9 + $0x610] sm:$0xff]
    %v2568 = vld [vmem:[#allocation9 + $0x618] sm:$0xff]
    %v2569 = vld [vmem:[#allocation9 + $0x620] sm:$0xff]
    %v2570 = vld [vmem:[#allocation9 + $0x628] sm:$0xff]
    %v2571 = vld [vmem:[#allocation9 + $0x630] sm:$0xff]
    %v2572 = vld [vmem:[#allocation9 + $0x638] sm:$0xff]
    %v2573 = vld [vmem:[#allocation9 + $0x640] sm:$0xff]
    %v2574 = vld [vmem:[#allocation9 + $0x648] sm:$0xff]
    %v2575 = vld [vmem:[#allocation9 + $0x650] sm:$0xff]
    %v2576 = vld [vmem:[#allocation9 + $0x658] sm:$0xff]
    %v2577 = vld [vmem:[#allocation9 + $0x660] sm:$0xff]
    %v2578 = vld [vmem:[#allocation9 + $0x668] sm:$0xff]
    %v2579 = vld [vmem:[#allocation9 + $0x670] sm:$0xff]
    %v2580 = vld [vmem:[#allocation9 + $0x678] sm:$0xff]
    %v2581 = vld [vmem:[#allocation9 + $0x680] sm:$0xff]
    %v2582 = vld [vmem:[#allocation9 + $0x688] sm:$0xff]
    %v2583 = vld [vmem:[#allocation9 + $0x690] sm:$0xff]
    %v2584 = vld [vmem:[#allocation9 + $0x698] sm:$0xff]
    %v2585 = vld [vmem:[#allocation9 + $0x6a0] sm:$0xff]
    %v2586 = vld [vmem:[#allocation9 + $0x6a8] sm:$0xff]
    %v2587 = vld [vmem:[#allocation9 + $0x6b0] sm:$0xff]
    %v2588 = vld [vmem:[#allocation9 + $0x6b8] sm:$0xff]
    %v2589 = vld [vmem:[#allocation9 + $0x6c0] sm:$0xff]
    %v2590 = vld [vmem:[#allocation9 + $0x6c8] sm:$0xff]
    %v2591 = vld [vmem:[#allocation9 + $0x6d0] sm:$0xff]
    %v2592 = vld [vmem:[#allocation9 + $0x6d8] sm:$0xff]
    %v2593 = vld [vmem:[#allocation9 + $0x6e0] sm:$0xff]
    %v2594 = vld [vmem:[#allocation9 + $0x6e8] sm:$0xff]
    %v2595 = vld [vmem:[#allocation9 + $0x6f0] sm:$0xff]
    %v2596 = vld [vmem:[#allocation9 + $0x6f8] sm:$0xff]
    %v2597 = vld [vmem:[#allocation9 + $0x700] sm:$0xff]
    %v2598 = vld [vmem:[#allocation9 + $0x708] sm:$0xff]
    %v2599 = vld [vmem:[#allocation9 + $0x710] sm:$0xff]
    %v2600 = vld [vmem:[#allocation9 + $0x718] sm:$0xff]
    %v2601 = vld [vmem:[#allocation9 + $0x720] sm:$0xff]
    %v2602 = vld [vmem:[#allocation9 + $0x728] sm:$0xff]
    %v2603 = vld [vmem:[#allocation9 + $0x730] sm:$0xff]
    %v2604 = vld [vmem:[#allocation9 + $0x738] sm:$0xff]
    %v2605 = vld [vmem:[#allocation9 + $0x740] sm:$0xff]
    %v2606 = vld [vmem:[#allocation9 + $0x748] sm:$0xff]
    %v2607 = vld [vmem:[#allocation9 + $0x750] sm:$0xff]
    %v2608 = vld [vmem:[#allocation9 + $0x758] sm:$0xff]
    %v2609 = vld [vmem:[#allocation9 + $0x760] sm:$0xff]
    %v2610 = vld [vmem:[#allocation9 + $0x768] sm:$0xff]
    %v2611 = vld [vmem:[#allocation9 + $0x770] sm:$0xff]
    %v2612 = vld [vmem:[#allocation9 + $0x778] sm:$0xff]
    %v2613 = vld [vmem:[#allocation9 + $0x780] sm:$0xff]
    %v2614 = vld [vmem:[#allocation9 + $0x788] sm:$0xff]
    %v2615 = vld [vmem:[#allocation9 + $0x790] sm:$0xff]
    %v2616 = vld [vmem:[#allocation9 + $0x798] sm:$0xff]
    %v2617 = vld [vmem:[#allocation9 + $0x7a0] sm:$0xff]
    %v2618 = vld [vmem:[#allocation9 + $0x7a8] sm:$0xff]
    %v2619 = vld [vmem:[#allocation9 + $0x7b0] sm:$0xff]
    %v2620 = vld [vmem:[#allocation9 + $0x7b8] sm:$0xff]
    %v2621 = vld [vmem:[#allocation9 + $0x7c0] sm:$0xff]
    %v2622 = vld [vmem:[#allocation9 + $0x7c8] sm:$0xff]
    %v2623 = vld [vmem:[#allocation9 + $0x7d0] sm:$0xff]
    %v2624 = vld [vmem:[#allocation9 + $0x7d8] sm:$0xff]
    %v2625 = vld [vmem:[#allocation9 + $0x7e0] sm:$0xff]
    %v2626 = vld [vmem:[#allocation9 + $0x7e8] sm:$0xff]
    %v2627 = vld [vmem:[#allocation9 + $0x7f0] sm:$0xff]
    %v2628 = vld [vmem:[#allocation9 + $0x7f8] sm:$0xff]
    %v2629 = vld [vmem:[#allocation9 + $0x800] sm:$0xff]
    %v2630 = vld [vmem:[#allocation9 + $0x808] sm:$0xff]
    %v2631 = vld [vmem:[#allocation9 + $0x810] sm:$0xff]
    %v2632 = vld [vmem:[#allocation9 + $0x818] sm:$0xff]
    %v2633 = vld [vmem:[#allocation9 + $0x820] sm:$0xff]
    %v2634 = vld [vmem:[#allocation9 + $0x828] sm:$0xff]
    %v2635 = vld [vmem:[#allocation9 + $0x830] sm:$0xff]
    %v2636 = vld [vmem:[#allocation9 + $0x838] sm:$0xff]
    %v2637 = vld [vmem:[#allocation9 + $0x840] sm:$0xff]
    %v2638 = vld [vmem:[#allocation9 + $0x848] sm:$0xff]
    %v2639 = vld [vmem:[#allocation9 + $0x850] sm:$0xff]
    %v2640 = vld [vmem:[#allocation9 + $0x858] sm:$0xff]
    %v2641 = vld [vmem:[#allocation9 + $0x860] sm:$0xff]
    %v2642 = vld [vmem:[#allocation9 + $0x868] sm:$0xff]
    %v2643 = vld [vmem:[#allocation9 + $0x870] sm:$0xff]
    %v2644 = vld [vmem:[#allocation9 + $0x878] sm:$0xff]
    %v2645 = vld [vmem:[#allocation9 + $0x880] sm:$0xff]
    %v2646 = vld [vmem:[#allocation9 + $0x888] sm:$0xff]
    %v2647 = vld [vmem:[#allocation9 + $0x890] sm:$0xff]
    %v2648 = vld [vmem:[#allocation9 + $0x898] sm:$0xff]
    %v2649 = vld [vmem:[#allocation9 + $0x8a0] sm:$0xff]
    %v2650 = vld [vmem:[#allocation9 + $0x8a8] sm:$0xff]
    %v2651 = vld [vmem:[#allocation9 + $0x8b0] sm:$0xff]
    %v2652 = vld [vmem:[#allocation9 + $0x8b8] sm:$0xff]
    %v2653 = vld [vmem:[#allocation9 + $0x8c0] sm:$0xff]
    %v2654 = vld [vmem:[#allocation9 + $0x8c8] sm:$0xff]
    %v2655 = vld [vmem:[#allocation9 + $0x8d0] sm:$0xff]
    %v2656 = vld [vmem:[#allocation9 + $0x8d8] sm:$0xff]
    %v2657 = vld [vmem:[#allocation9 + $0x8e0] sm:$0xff]
    %v2658 = vld [vmem:[#allocation9 + $0x8e8] sm:$0xff]
    %v2659 = vld [vmem:[#allocation9 + $0x8f0] sm:$0xff]
    %v2660 = vld [vmem:[#allocation9 + $0x8f8] sm:$0xff]
    %v2661 = vld [vmem:[#allocation9 + $0x900] sm:$0xff]
    %v2662 = vld [vmem:[#allocation9 + $0x908] sm:$0xff]
    %v2663 = vld [vmem:[#allocation9 + $0x910] sm:$0xff]
    %v2664 = vld [vmem:[#allocation9 + $0x918] sm:$0xff]
    %v2665 = vld [vmem:[#allocation9 + $0x920] sm:$0xff]
    %v2666 = vld [vmem:[#allocation9 + $0x928] sm:$0xff]
    %v2667 = vld [vmem:[#allocation9 + $0x930] sm:$0xff]
    %v2668 = vld [vmem:[#allocation9 + $0x938] sm:$0xff]
    %v2669 = vld [vmem:[#allocation9 + $0x940] sm:$0xff]
    %v2670 = vld [vmem:[#allocation9 + $0x948] sm:$0xff]
    %v2671 = vld [vmem:[#allocation9 + $0x950] sm:$0xff]
    %v2672 = vld [vmem:[#allocation9 + $0x958] sm:$0xff]
    %v2673 = vld [vmem:[#allocation9 + $0x960] sm:$0xff]
    %v2674 = vld [vmem:[#allocation9 + $0x968] sm:$0xff]
    %v2675 = vld [vmem:[#allocation9 + $0x970] sm:$0xff]
    %v2676 = vld [vmem:[#allocation9 + $0x978] sm:$0xff]
    %v2677 = vld [vmem:[#allocation9 + $0x980] sm:$0xff]
    %v2678 = vld [vmem:[#allocation9 + $0x988] sm:$0xff]
    %v2679 = vld [vmem:[#allocation9 + $0x990] sm:$0xff]
    %v2680 = vld [vmem:[#allocation9 + $0x998] sm:$0xff]
    %v2681 = vld [vmem:[#allocation9 + $0x9a0] sm:$0xff]
    %v2682 = vld [vmem:[#allocation9 + $0x9a8] sm:$0xff]
    %v2683 = vld [vmem:[#allocation9 + $0x9b0] sm:$0xff]
    %v2684 = vld [vmem:[#allocation9 + $0x9b8] sm:$0xff]
    %v2685 = vld [vmem:[#allocation9 + $0x9c0] sm:$0xff]
    %v2686 = vld [vmem:[#allocation9 + $0x9c8] sm:$0xff]
    %v2687 = vld [vmem:[#allocation9 + $0x9d0] sm:$0xff]
    %v2688 = vld [vmem:[#allocation9 + $0x9d8] sm:$0xff]
    %v2689 = vld [vmem:[#allocation9 + $0x9e0] sm:$0xff]
    %v2690 = vld [vmem:[#allocation9 + $0x9e8] sm:$0xff]
    %v2691 = vld [vmem:[#allocation9 + $0x9f0] sm:$0xff]
    %v2692 = vld [vmem:[#allocation9 + $0x9f8] sm:$0xff]
    %v2693 = vld [vmem:[#allocation9 + $0xa00] sm:$0xff]
    %v2694 = vld [vmem:[#allocation9 + $0xa08] sm:$0xff]
    %v2695 = vld [vmem:[#allocation9 + $0xa10] sm:$0xff]
    %v2696 = vld [vmem:[#allocation9 + $0xa18] sm:$0xff]
    %v2697 = vld [vmem:[#allocation9 + $0xa20] sm:$0xff]
    %v2698 = vld [vmem:[#allocation9 + $0xa28] sm:$0xff]
    %v2699 = vld [vmem:[#allocation9 + $0xa30] sm:$0xff]
    %v2700 = vld [vmem:[#allocation9 + $0xa38] sm:$0xff]
    %v2701 = vld [vmem:[#allocation9 + $0xa40] sm:$0xff]
    %v2702 = vld [vmem:[#allocation9 + $0xa48] sm:$0xff]
    %v2703 = vld [vmem:[#allocation9 + $0xa50] sm:$0xff]
    %v2704 = vld [vmem:[#allocation9 + $0xa58] sm:$0xff]
    %v2705 = vld [vmem:[#allocation9 + $0xa60] sm:$0xff]
    %v2706 = vld [vmem:[#allocation9 + $0xa68] sm:$0xff]
    %v2707 = vld [vmem:[#allocation9 + $0xa70] sm:$0xff]
    %v2708 = vld [vmem:[#allocation9 + $0xa78] sm:$0xff]
    %v2709 = vld [vmem:[#allocation9 + $0xa80] sm:$0xff]
    %v2710 = vld [vmem:[#allocation9 + $0xa88] sm:$0xff]
    %v2711 = vld [vmem:[#allocation9 + $0xa90] sm:$0xff]
    %v2712 = vld [vmem:[#allocation9 + $0xa98] sm:$0xff]
    %v2713 = vld [vmem:[#allocation9 + $0xaa0] sm:$0xff]
    %v2714 = vld [vmem:[#allocation9 + $0xaa8] sm:$0xff]
    %v2715 = vld [vmem:[#allocation9 + $0xab0] sm:$0xff]
    %v2716 = vld [vmem:[#allocation9 + $0xab8] sm:$0xff]
    %v2717 = vld [vmem:[#allocation9 + $0xac0] sm:$0xff]
    %v2718 = vld [vmem:[#allocation9 + $0xac8] sm:$0xff]
    %v2719 = vld [vmem:[#allocation9 + $0xad0] sm:$0xff]
    %v2720 = vld [vmem:[#allocation9 + $0xad8] sm:$0xff]
    %v2721 = vld [vmem:[#allocation9 + $0xae0] sm:$0xff]
    %v2722 = vld [vmem:[#allocation9 + $0xae8] sm:$0xff]
    %v2723 = vld [vmem:[#allocation9 + $0xaf0] sm:$0xff]
    %v2724 = vld [vmem:[#allocation9 + $0xaf8] sm:$0xff]
    %v2725 = vld [vmem:[#allocation9 + $0xb00] sm:$0xff]
    %v2726 = vld [vmem:[#allocation9 + $0xb08] sm:$0xff]
    %v2727 = vld [vmem:[#allocation9 + $0xb10] sm:$0xff]
    %v2728 = vld [vmem:[#allocation9 + $0xb18] sm:$0xff]
    %v2729 = vld [vmem:[#allocation9 + $0xb20] sm:$0xff]
    %v2730 = vld [vmem:[#allocation9 + $0xb28] sm:$0xff]
    %v2731 = vld [vmem:[#allocation9 + $0xb30] sm:$0xff]
    %v2732 = vld [vmem:[#allocation9 + $0xb38] sm:$0xff]
    %v2733 = vld [vmem:[#allocation9 + $0xb40] sm:$0xff]
    %v2734 = vld [vmem:[#allocation9 + $0xb48] sm:$0xff]
    %v2735 = vld [vmem:[#allocation9 + $0xb50] sm:$0xff]
    %v2736 = vld [vmem:[#allocation9 + $0xb58] sm:$0xff]
    %v2737 = vld [vmem:[#allocation9 + $0xb60] sm:$0xff]
    %v2738 = vld [vmem:[#allocation9 + $0xb68] sm:$0xff]
    %v2739 = vld [vmem:[#allocation9 + $0xb70] sm:$0xff]
    %v2740 = vld [vmem:[#allocation9 + $0xb78] sm:$0xff]
    %v2741 = vld [vmem:[#allocation9 + $0xb80] sm:$0xff]
    %v2742 = vld [vmem:[#allocation9 + $0xb88] sm:$0xff]
    %v2743 = vld [vmem:[#allocation9 + $0xb90] sm:$0xff]
    %v2744 = vld [vmem:[#allocation9 + $0xb98] sm:$0xff]
    %v2745 = vld [vmem:[#allocation9 + $0xba0] sm:$0xff]
    %v2746 = vld [vmem:[#allocation9 + $0xba8] sm:$0xff]
    %v2747 = vld [vmem:[#allocation9 + $0xbb0] sm:$0xff]
    %v2748 = vld [vmem:[#allocation9 + $0xbb8] sm:$0xff]
    %v2749 = vld [vmem:[#allocation9 + $0xbc0] sm:$0xff]
    %v2750 = vld [vmem:[#allocation9 + $0xbc8] sm:$0xff]
    %v2751 = vld [vmem:[#allocation9 + $0xbd0] sm:$0xff]
    %v2752 = vld [vmem:[#allocation9 + $0xbd8] sm:$0xff]
    %v2753 = vld [vmem:[#allocation9 + $0xbe0] sm:$0xff]
    %v2754 = vld [vmem:[#allocation9 + $0xbe8] sm:$0xff]
    %v2755 = vld [vmem:[#allocation9 + $0xbf0] sm:$0xff]
    %v2756 = vld [vmem:[#allocation9 + $0xbf8] sm:$0xff]
    %v2757 = vld [vmem:[#allocation9 + $0xc00] sm:$0xff]
    %v2758 = vld [vmem:[#allocation9 + $0xc08] sm:$0xff]
    %v2759 = vld [vmem:[#allocation9 + $0xc10] sm:$0xff]
    %v2760 = vld [vmem:[#allocation9 + $0xc18] sm:$0xff]
    %v2761 = vld [vmem:[#allocation9 + $0xc20] sm:$0xff]
    %v2762 = vld [vmem:[#allocation9 + $0xc28] sm:$0xff]
    %v2763 = vld [vmem:[#allocation9 + $0xc30] sm:$0xff]
    %v2764 = vld [vmem:[#allocation9 + $0xc38] sm:$0xff]
    %v2765 = vld [vmem:[#allocation9 + $0xc40] sm:$0xff]
    %v2766 = vld [vmem:[#allocation9 + $0xc48] sm:$0xff]
    %v2767 = vld [vmem:[#allocation9 + $0xc50] sm:$0xff]
    %v2768 = vld [vmem:[#allocation9 + $0xc58] sm:$0xff]
    %v2769 = vld [vmem:[#allocation9 + $0xc60] sm:$0xff]
    %v2770 = vld [vmem:[#allocation9 + $0xc68] sm:$0xff]
    %v2771 = vld [vmem:[#allocation9 + $0xc70] sm:$0xff]
    %v2772 = vld [vmem:[#allocation9 + $0xc78] sm:$0xff]
    %v2773 = vld [vmem:[#allocation9 + $0xc80] sm:$0xff]
    %v2774 = vld [vmem:[#allocation9 + $0xc88] sm:$0xff]
    %v2775 = vld [vmem:[#allocation9 + $0xc90] sm:$0xff]
    %v2776 = vld [vmem:[#allocation9 + $0xc98] sm:$0xff]
    %v2777 = vld [vmem:[#allocation9 + $0xca0] sm:$0xff]
    %v2778 = vld [vmem:[#allocation9 + $0xca8] sm:$0xff]
    %v2779 = vld [vmem:[#allocation9 + $0xcb0] sm:$0xff]
    %v2780 = vld [vmem:[#allocation9 + $0xcb8] sm:$0xff]
    %v2781 = vld [vmem:[#allocation9 + $0xcc0] sm:$0xff]
    %v2782 = vld [vmem:[#allocation9 + $0xcc8] sm:$0xff]
    %v2783 = vld [vmem:[#allocation9 + $0xcd0] sm:$0xff]
    %v2784 = vld [vmem:[#allocation9 + $0xcd8] sm:$0xff]
    %v2785 = vld [vmem:[#allocation9 + $0xce0] sm:$0xff]
    %v2786 = vld [vmem:[#allocation9 + $0xce8] sm:$0xff]
    %v2787 = vld [vmem:[#allocation9 + $0xcf0] sm:$0xff]
    %v2788 = vld [vmem:[#allocation9 + $0xcf8] sm:$0xff]
    %v2789 = vld [vmem:[#allocation9 + $0xd00] sm:$0xff]
    %v2790 = vld [vmem:[#allocation9 + $0xd08] sm:$0xff]
    %v2791 = vld [vmem:[#allocation9 + $0xd10] sm:$0xff]
    %v2792 = vld [vmem:[#allocation9 + $0xd18] sm:$0xff]
    %v2793 = vld [vmem:[#allocation9 + $0xd20] sm:$0xff]
    %v2794 = vld [vmem:[#allocation9 + $0xd28] sm:$0xff]
    %v2795 = vld [vmem:[#allocation9 + $0xd30] sm:$0xff]
    %v2796 = vld [vmem:[#allocation9 + $0xd38] sm:$0xff]
    %v2797 = vld [vmem:[#allocation9 + $0xd40] sm:$0xff]
    %v2798 = vld [vmem:[#allocation9 + $0xd48] sm:$0xff]
    %v2799 = vld [vmem:[#allocation9 + $0xd50] sm:$0xff]
    %v2800 = vld [vmem:[#allocation9 + $0xd58] sm:$0xff]
    %v2801 = vld [vmem:[#allocation9 + $0xd60] sm:$0xff]
    %v2802 = vld [vmem:[#allocation9 + $0xd68] sm:$0xff]
    %v2803 = vld [vmem:[#allocation9 + $0xd70] sm:$0xff]
    %v2804 = vld [vmem:[#allocation9 + $0xd78] sm:$0xff]
    %v2805 = vld [vmem:[#allocation9 + $0xd80] sm:$0xff]
    %v2806 = vld [vmem:[#allocation9 + $0xd88] sm:$0xff]
    %v2807 = vld [vmem:[#allocation9 + $0xd90] sm:$0xff]
    %v2808 = vld [vmem:[#allocation9 + $0xd98] sm:$0xff]
    %v2809 = vld [vmem:[#allocation9 + $0xda0] sm:$0xff]
    %v2810 = vld [vmem:[#allocation9 + $0xda8] sm:$0xff]
    %v2811 = vld [vmem:[#allocation9 + $0xdb0] sm:$0xff]
    %v2812 = vld [vmem:[#allocation9 + $0xdb8] sm:$0xff]
    %v2813 = vld [vmem:[#allocation9 + $0xdc0] sm:$0xff]
    %v2814 = vld [vmem:[#allocation9 + $0xdc8] sm:$0xff]
    %v2815 = vld [vmem:[#allocation9 + $0xdd0] sm:$0xff]
    %v2816 = vld [vmem:[#allocation9 + $0xdd8] sm:$0xff]
    %v2817 = vld [vmem:[#allocation9 + $0xde0] sm:$0xff]
    %v2818 = vld [vmem:[#allocation9 + $0xde8] sm:$0xff]
    %v2819 = vld [vmem:[#allocation9 + $0xdf0] sm:$0xff]
    %v2820 = vld [vmem:[#allocation9 + $0xdf8] sm:$0xff]
    %v2821 = vld [vmem:[#allocation9 + $0xe00] sm:$0xff]
    %v2822 = vld [vmem:[#allocation9 + $0xe08] sm:$0xff]
    %v2823 = vld [vmem:[#allocation9 + $0xe10] sm:$0xff]
    %v2824 = vld [vmem:[#allocation9 + $0xe18] sm:$0xff]
    %v2825 = vld [vmem:[#allocation9 + $0xe20] sm:$0xff]
    %v2826 = vld [vmem:[#allocation9 + $0xe28] sm:$0xff]
    %v2827 = vld [vmem:[#allocation9 + $0xe30] sm:$0xff]
    %v2828 = vld [vmem:[#allocation9 + $0xe38] sm:$0xff]
    %v2829 = vld [vmem:[#allocation9 + $0xe40] sm:$0xff]
    %v2830 = vld [vmem:[#allocation9 + $0xe48] sm:$0xff]
    %v2831 = vld [vmem:[#allocation9 + $0xe50] sm:$0xff]
    %v2832 = vld [vmem:[#allocation9 + $0xe58] sm:$0xff]
    %v2833 = vld [vmem:[#allocation9 + $0xe60] sm:$0xff]
    %v2834 = vld [vmem:[#allocation9 + $0xe68] sm:$0xff]
    %v2835 = vld [vmem:[#allocation9 + $0xe70] sm:$0xff]
    %v2836 = vld [vmem:[#allocation9 + $0xe78] sm:$0xff]
    %v2837 = vld [vmem:[#allocation9 + $0xe80] sm:$0xff]
    %v2838 = vld [vmem:[#allocation9 + $0xe88] sm:$0xff]
    %v2839 = vld [vmem:[#allocation9 + $0xe90] sm:$0xff]
    %v2840 = vld [vmem:[#allocation9 + $0xe98] sm:$0xff]
    %v2841 = vld [vmem:[#allocation9 + $0xea0] sm:$0xff]
    %v2842 = vld [vmem:[#allocation9 + $0xea8] sm:$0xff]
    %v2843 = vld [vmem:[#allocation9 + $0xeb0] sm:$0xff]
    %v2844 = vld [vmem:[#allocation9 + $0xeb8] sm:$0xff]
    %v2845 = vld [vmem:[#allocation9 + $0xec0] sm:$0xff]
    %v2846 = vld [vmem:[#allocation9 + $0xec8] sm:$0xff]
    %v2847 = vld [vmem:[#allocation9 + $0xed0] sm:$0xff]
    %v2848 = vld [vmem:[#allocation9 + $0xed8] sm:$0xff]
    %v2849 = vld [vmem:[#allocation9 + $0xee0] sm:$0xff]
    %v2850 = vld [vmem:[#allocation9 + $0xee8] sm:$0xff]
    %v2851 = vld [vmem:[#allocation9 + $0xef0] sm:$0xff]
    %v2852 = vld [vmem:[#allocation9 + $0xef8] sm:$0xff]
    %v2853 = vld [vmem:[#allocation9 + $0xf00] sm:$0xff]
    %v2854 = vld [vmem:[#allocation9 + $0xf08] sm:$0xff]
    %v2855 = vld [vmem:[#allocation9 + $0xf10] sm:$0xff]
    %v2856 = vld [vmem:[#allocation9 + $0xf18] sm:$0xff]
    %v2857 = vld [vmem:[#allocation9 + $0xf20] sm:$0xff]
    %v2858 = vld [vmem:[#allocation9 + $0xf28] sm:$0xff]
    %v2859 = vld [vmem:[#allocation9 + $0xf30] sm:$0xff]
    %v2860 = vld [vmem:[#allocation9 + $0xf38] sm:$0xff]
    %v2861 = vld [vmem:[#allocation9 + $0xf40] sm:$0xff]
    %v2862 = vld [vmem:[#allocation9 + $0xf48] sm:$0xff]
    %v2863 = vld [vmem:[#allocation9 + $0xf50] sm:$0xff]
    %v2864 = vld [vmem:[#allocation9 + $0xf58] sm:$0xff]
    %v2865 = vld [vmem:[#allocation9 + $0xf60] sm:$0xff]
    %v2866 = vld [vmem:[#allocation9 + $0xf68] sm:$0xff]
    %v2867 = vld [vmem:[#allocation9 + $0xf70] sm:$0xff]
    %v2868 = vld [vmem:[#allocation9 + $0xf78] sm:$0xff]
    %v2869 = vld [vmem:[#allocation9 + $0xf80] sm:$0xff]
    %v2870 = vld [vmem:[#allocation9 + $0xf88] sm:$0xff]
    %v2871 = vld [vmem:[#allocation9 + $0xf90] sm:$0xff]
    %v2872 = vld [vmem:[#allocation9 + $0xf98] sm:$0xff]
    %v2873 = vld [vmem:[#allocation9 + $0xfa0] sm:$0xff]
    %v2874 = vld [vmem:[#allocation9 + $0xfa8] sm:$0xff]
    %v2875 = vld [vmem:[#allocation9 + $0xfb0] sm:$0xff]
    %v2876 = vld [vmem:[#allocation9 + $0xfb8] sm:$0xff]
    %v2877 = vld [vmem:[#allocation9 + $0xfc0] sm:$0xff]
    %v2878 = vld [vmem:[#allocation9 + $0xfc8] sm:$0xff]
    %v2879 = vld [vmem:[#allocation9 + $0xfd0] sm:$0xff]
    %v2880 = vld [vmem:[#allocation9 + $0xfd8] sm:$0xff]
    %v2881 = vld [vmem:[#allocation9 + $0xfe0] sm:$0xff]
    %v2882 = vld [vmem:[#allocation9 + $0xfe8] sm:$0xff]
    %v2883 = vld [vmem:[#allocation9 + $0xff0] sm:$0xff]
    %v2884 = vld [vmem:[#allocation9 + $0xff8] sm:$0xff]
    %v2885 = vld [vmem:[#allocation10] sm:$0xff]
    %v2887 = vlaneseq
    %v2888 = vshrl.u32 %v2887, 7
    %v2889 = vsub.s32 0, %v2888
    %v2890 = vrot.slane %v2885, %v2889
    %v2891 = vlaneseq
    %v2892 = vshrl.u32 %v2891, 7
    %v2893 = vsub.s32 1, %v2892
    %v2894 = vrot.slane %v2885, %v2893
    %v2895 = vlaneseq
    %v2896 = vshrl.u32 %v2895, 7
    %v2897 = vsub.s32 2, %v2896
    %v2898 = vrot.slane %v2885, %v2897
    %v2899 = vlaneseq
    %v2900 = vshrl.u32 %v2899, 7
    %v2901 = vsub.s32 3, %v2900
    %v2902 = vrot.slane %v2885, %v2901
    %v2903 = vlaneseq
    %v2904 = vshrl.u32 %v2903, 7
    %v2905 = vsub.s32 4, %v2904
    %v2906 = vrot.slane %v2885, %v2905
    %v2907 = vlaneseq
    %v2908 = vshrl.u32 %v2907, 7
    %v2909 = vsub.s32 5, %v2908
    %v2910 = vrot.slane %v2885, %v2909
    %v2911 = vlaneseq
    %v2912 = vshrl.u32 %v2911, 7
    %v2913 = vsub.s32 6, %v2912
    %v2914 = vrot.slane %v2885, %v2913
    %v2915 = vlaneseq
    %v2916 = vshrl.u32 %v2915, 7
    %v2917 = vsub.s32 7, %v2916
    %v2918 = vrot.slane %v2885, %v2917
    %2927 = vmatprep.subr.mxu0 %v2374
    %2928 = vmatpush1.msra.mxu0 %v2373
    %2929 = vmatprep.subr.mxu0 %v2382
    %2930 = vmatpush1.msra.mxu0 %v2381
    %2931 = vmatprep.subr.mxu0 %v2390
    %2932 = vmatpush1.msra.mxu0 %v2389
    %2933 = vmatprep.subr.mxu0 %v2398
    %2934 = vmatpush1.msra.mxu0 %v2397
    %2935 = vmatprep.subr.mxu0 %v2406
    %2936 = vmatpush1.msra.mxu0 %v2405
    %2937 = vmatprep.subr.mxu0 %v2414
    %2938 = vmatpush1.msra.mxu0 %v2413
    %2939 = vmatprep.subr.mxu0 %v2422
    %2940 = vmatpush1.msra.mxu0 %v2421
    %2941 = vmatprep.subr.mxu0 %v2430
    %2942 = vmatpush1.msra.mxu0 %v2429
    %2943 = vmatprep.subr.mxu0 %v2438
    %2944 = vmatpush1.msra.mxu0 %v2437
    %2945 = vmatprep.subr.mxu0 %v2446
    %2946 = vmatpush1.msra.mxu0 %v2445
    %2947 = vmatprep.subr.mxu0 %v2454
    %2948 = vmatpush1.msra.mxu0 %v2453
    %2949 = vmatprep.subr.mxu0 %v2462
    %2950 = vmatpush1.msra.mxu0 %v2461
    %2951 = vmatprep.subr.mxu0 %v2470
    %2952 = vmatpush1.msra.mxu0 %v2469
    %2953 = vmatprep.subr.mxu0 %v2478
    %2954 = vmatpush1.msra.mxu0 %v2477
    %2955 = vmatprep.subr.mxu0 %v2486
    %2956 = vmatpush1.msra.mxu0 %v2485
    %2957 = vmatprep.subr.mxu0 %v2494
    %2958 = vmatpush1.msra.mxu0 %v2493
    %2959 = vmatprep.subr.mxu0 %v2502
    %2960 = vmatpush1.msra.mxu0 %v2501
    %2961 = vmatprep.subr.mxu0 %v2510
    %2962 = vmatpush1.msra.mxu0 %v2509
    %2963 = vmatprep.subr.mxu0 %v2518
    %2964 = vmatpush1.msra.mxu0 %v2517
    %2965 = vmatprep.subr.mxu0 %v2526
    %2966 = vmatpush1.msra.mxu0 %v2525
    %2967 = vmatprep.subr.mxu0 %v2534
    %2968 = vmatpush1.msra.mxu0 %v2533
    %2969 = vmatprep.subr.mxu0 %v2542
    %2970 = vmatpush1.msra.mxu0 %v2541
    %2971 = vmatprep.subr.mxu0 %v2550
    %2972 = vmatpush1.msra.mxu0 %v2549
    %2973 = vmatprep.subr.mxu0 %v2558
    %2974 = vmatpush1.msra.mxu0 %v2557
    %2975 = vmatprep.subr.mxu0 %v2566
    %2976 = vmatpush1.msra.mxu0 %v2565
    %2977 = vmatprep.subr.mxu0 %v2574
    %2978 = vmatpush1.msra.mxu0 %v2573
    %2979 = vmatprep.subr.mxu0 %v2582
    %2980 = vmatpush1.msra.mxu0 %v2581
    %2981 = vmatprep.subr.mxu0 %v2590
    %2982 = vmatpush1.msra.mxu0 %v2589
    %2983 = vmatprep.subr.mxu0 %v2598
    %2984 = vmatpush1.msra.mxu0 %v2597
    %2985 = vmatprep.subr.mxu0 %v2606
    %2986 = vmatpush1.msra.mxu0 %v2605
    %2987 = vmatprep.subr.mxu0 %v2614
    %2988 = vmatpush1.msra.mxu0 %v2613
    %2989 = vmatprep.subr.mxu0 %v2622
    %2990 = vmatpush1.msra.mxu0 %v2621
    %2991 = vmatprep.mubr.f32.mxu0 %v2370
    %2992 = vmatmul.mubr.f32.gmra.mrb[0].mxu0 %v2369
    %v2993 = vpop.f32.mrb[0].mxu0
    %v2994 = vadd.f32 %v2890, %v2993
    %v2995 = vpop.f32.mrb[0].mxu0
    %v2996 = vadd.f32 %v2894, %v2995
    %2997 = vdwg.mxu0
    %2998 = vmatprep.subr.mxu0 %v2630
    %2999 = vmatpush1.msra.mxu0 %v2629
    %3000 = vmatprep.subr.mxu0 %v2638
    %3001 = vmatpush1.msra.mxu0 %v2637
    %3002 = vmatprep.subr.mxu0 %v2646
    %3003 = vmatpush1.msra.mxu0 %v2645
    %3004 = vmatprep.subr.mxu0 %v2654
    %3005 = vmatpush1.msra.mxu0 %v2653
    %3006 = vmatprep.subr.mxu0 %v2662
    %3007 = vmatpush1.msra.mxu0 %v2661
    %3008 = vmatprep.subr.mxu0 %v2670
    %3009 = vmatpush1.msra.mxu0 %v2669
    %3010 = vmatprep.subr.mxu0 %v2678
    %3011 = vmatpush1.msra.mxu0 %v2677
    %3012 = vmatprep.subr.mxu0 %v2686
    %3013 = vmatpush1.msra.mxu0 %v2685
    %3014 = vmatprep.subr.mxu0 %v2694
    %3015 = vmatpush1.msra.mxu0 %v2693
    %3016 = vmatprep.subr.mxu0 %v2702
    %3017 = vmatpush1.msra.mxu0 %v2701
    %3018 = vmatprep.subr.mxu0 %v2710
    %3019 = vmatpush1.msra.mxu0 %v2709
    %3020 = vmatprep.subr.mxu0 %v2718
    %3021 = vmatpush1.msra.mxu0 %v2717
    %3022 = vmatprep.subr.mxu0 %v2726
    %3023 = vmatpush1.msra.mxu0 %v2725
    %3024 = vmatprep.subr.mxu0 %v2734
    %3025 = vmatpush1.msra.mxu0 %v2733
    %3026 = vmatprep.subr.mxu0 %v2742
    %3027 = vmatpush1.msra.mxu0 %v2741
    %3028 = vmatprep.subr.mxu0 %v2750
    %3029 = vmatpush1.msra.mxu0 %v2749
    %3030 = vmatprep.subr.mxu0 %v2758
    %3031 = vmatpush1.msra.mxu0 %v2757
    %3032 = vmatprep.subr.mxu0 %v2766
    %3033 = vmatpush1.msra.mxu0 %v2765
    %3034 = vmatprep.subr.mxu0 %v2774
    %3035 = vmatpush1.msra.mxu0 %v2773
    %3036 = vmatprep.subr.mxu0 %v2782
    %3037 = vmatpush1.msra.mxu0 %v2781
    %3038 = vmatprep.subr.mxu0 %v2790
    %3039 = vmatpush1.msra.mxu0 %v2789
    %3040 = vmatprep.subr.mxu0 %v2798
    %3041 = vmatpush1.msra.mxu0 %v2797
    %3042 = vmatprep.subr.mxu0 %v2806
    %3043 = vmatpush1.msra.mxu0 %v2805
    %3044 = vmatprep.subr.mxu0 %v2814
    %3045 = vmatpush1.msra.mxu0 %v2813
    %3046 = vmatprep.subr.mxu0 %v2822
    %3047 = vmatpush1.msra.mxu0 %v2821
    %3048 = vmatprep.subr.mxu0 %v2830
    %3049 = vmatpush1.msra.mxu0 %v2829
    %3050 = vmatprep.subr.mxu0 %v2838
    %3051 = vmatpush1.msra.mxu0 %v2837
    %3052 = vmatprep.subr.mxu0 %v2846
    %3053 = vmatpush1.msra.mxu0 %v2845
    %3054 = vmatprep.subr.mxu0 %v2854
    %3055 = vmatpush1.msra.mxu0 %v2853
    %3056 = vmatprep.subr.mxu0 %v2862
    %3057 = vmatpush1.msra.mxu0 %v2861
    %3058 = vmatprep.subr.mxu0 %v2870
    %3059 = vmatpush1.msra.mxu0 %v2869
    %3060 = vmatprep.subr.mxu0 %v2878
    %3061 = vmatpush1.msra.mxu0 %v2877
    %3062 = vmatprep.mubr.f32.mxu0 %v2372
    %3063 = vmatmul.mubr.f32.gmra.mrb[0].mxu0 %v2371
    %v3064 = vpop.f32.mrb[0].mxu0
    %v3065 = vadd.f32 %v2994, %v3064
    %v3066 = vpop.f32.mrb[0].mxu0
    %v3067 = vadd.f32 %v2996, %v3066
    %3068 = vdwg.mxu0
    %3069 = vmatprep.subr.mxu0 %v2376
    %3070 = vmatpush1.msra.mxu0 %v2375
    %3071 = vmatprep.subr.mxu0 %v2384
    %3072 = vmatpush1.msra.mxu0 %v2383
    %3073 = vmatprep.subr.mxu0 %v2392
    %3074 = vmatpush1.msra.mxu0 %v2391
    %3075 = vmatprep.subr.mxu0 %v2400
    %3076 = vmatpush1.msra.mxu0 %v2399
    %3077 = vmatprep.subr.mxu0 %v2408
    %3078 = vmatpush1.msra.mxu0 %v2407
    %3079 = vmatprep.subr.mxu0 %v2416
    %3080 = vmatpush1.msra.mxu0 %v2415
    %3081 = vmatprep.subr.mxu0 %v2424
    %3082 = vmatpush1.msra.mxu0 %v2423
    %3083 = vmatprep.subr.mxu0 %v2432
    %3084 = vmatpush1.msra.mxu0 %v2431
    %3085 = vmatprep.subr.mxu0 %v2440
    %3086 = vmatpush1.msra.mxu0 %v2439
    %3087 = vmatprep.subr.mxu0 %v2448
    %3088 = vmatpush1.msra.mxu0 %v2447
    %3089 = vmatprep.subr.mxu0 %v2456
    %3090 = vmatpush1.msra.mxu0 %v2455
    %3091 = vmatprep.subr.mxu0 %v2464
    %3092 = vmatpush1.msra.mxu0 %v2463
    %3093 = vmatprep.subr.mxu0 %v2472
    %3094 = vmatpush1.msra.mxu0 %v2471
    %3095 = vmatprep.subr.mxu0 %v2480
    %3096 = vmatpush1.msra.mxu0 %v2479
    %3097 = vmatprep.subr.mxu0 %v2488
    %3098 = vmatpush1.msra.mxu0 %v2487
    %3099 = vmatprep.subr.mxu0 %v2496
    %3100 = vmatpush1.msra.mxu0 %v2495
    %3101 = vmatprep.subr.mxu0 %v2504
    %3102 = vmatpush1.msra.mxu0 %v2503
    %3103 = vmatprep.subr.mxu0 %v2512
    %3104 = vmatpush1.msra.mxu0 %v2511
    %3105 = vmatprep.subr.mxu0 %v2520
    %3106 = vmatpush1.msra.mxu0 %v2519
    %3107 = vmatprep.subr.mxu0 %v2528
    %3108 = vmatpush1.msra.mxu0 %v2527
    %3109 = vmatprep.subr.mxu0 %v2536
    %3110 = vmatpush1.msra.mxu0 %v2535
    %3111 = vmatprep.subr.mxu0 %v2544
    %3112 = vmatpush1.msra.mxu0 %v2543
    %3113 = vmatprep.subr.mxu0 %v2552
    %3114 = vmatpush1.msra.mxu0 %v2551
    %3115 = vmatprep.subr.mxu0 %v2560
    %3116 = vmatpush1.msra.mxu0 %v2559
    %3117 = vmatprep.subr.mxu0 %v2568
    %3118 = vmatpush1.msra.mxu0 %v2567
    %3119 = vmatprep.subr.mxu0 %v2576
    %3120 = vmatpush1.msra.mxu0 %v2575
    %3121 = vmatprep.subr.mxu0 %v2584
    %3122 = vmatpush1.msra.mxu0 %v2583
    %3123 = vmatprep.subr.mxu0 %v2592
    %3124 = vmatpush1.msra.mxu0 %v2591
    %3125 = vmatprep.subr.mxu0 %v2600
    %3126 = vmatpush1.msra.mxu0 %v2599
    %3127 = vmatprep.subr.mxu0 %v2608
    %3128 = vmatpush1.msra.mxu0 %v2607
    %3129 = vmatprep.subr.mxu0 %v2616
    %3130 = vmatpush1.msra.mxu0 %v2615
    %3131 = vmatprep.subr.mxu0 %v2624
    %3132 = vmatpush1.msra.mxu0 %v2623
    %3133 = vmatprep.mubr.f32.mxu0 %v2370
    %3134 = vmatmul.mubr.f32.gmra.mrb[0].mxu0 %v2369
    %v3135 = vpop.f32.mrb[0].mxu0
    %v3136 = vadd.f32 %v2898, %v3135
    %v3137 = vpop.f32.mrb[0].mxu0
    %v3138 = vadd.f32 %v2902, %v3137
    %3139 = vdwg.mxu0
    %3140 = vmatprep.subr.mxu0 %v2632
    %3141 = vmatpush1.msra.mxu0 %v2631
    %3142 = vmatprep.subr.mxu0 %v2640
    %3143 = vmatpush1.msra.mxu0 %v2639
    %3144 = vmatprep.subr.mxu0 %v2648
    %3145 = vmatpush1.msra.mxu0 %v2647
    %3146 = vmatprep.subr.mxu0 %v2656
    %3147 = vmatpush1.msra.mxu0 %v2655
    %3148 = vmatprep.subr.mxu0 %v2664
    %3149 = vmatpush1.msra.mxu0 %v2663
    %3150 = vmatprep.subr.mxu0 %v2672
    %3151 = vmatpush1.msra.mxu0 %v2671
    %3152 = vmatprep.subr.mxu0 %v2680
    %3153 = vmatpush1.msra.mxu0 %v2679
    %3154 = vmatprep.subr.mxu0 %v2688
    %3155 = vmatpush1.msra.mxu0 %v2687
    %3156 = vmatprep.subr.mxu0 %v2696
    %3157 = vmatpush1.msra.mxu0 %v2695
    %3158 = vmatprep.subr.mxu0 %v2704
    %3159 = vmatpush1.msra.mxu0 %v2703
    %3160 = vmatprep.subr.mxu0 %v2712
    %3161 = vmatpush1.msra.mxu0 %v2711
    %3162 = vmatprep.subr.mxu0 %v2720
    %3163 = vmatpush1.msra.mxu0 %v2719
    %3164 = vmatprep.subr.mxu0 %v2728
    %3165 = vmatpush1.msra.mxu0 %v2727
    %3166 = vmatprep.subr.mxu0 %v2736
    %3167 = vmatpush1.msra.mxu0 %v2735
    %3168 = vmatprep.subr.mxu0 %v2744
    %3169 = vmatpush1.msra.mxu0 %v2743
    %3170 = vmatprep.subr.mxu0 %v2752
    %3171 = vmatpush1.msra.mxu0 %v2751
    %3172 = vmatprep.subr.mxu0 %v2760
    %3173 = vmatpush1.msra.mxu0 %v2759
    %3174 = vmatprep.subr.mxu0 %v2768
    %3175 = vmatpush1.msra.mxu0 %v2767
    %3176 = vmatprep.subr.mxu0 %v2776
    %3177 = vmatpush1.msra.mxu0 %v2775
    %3178 = vmatprep.subr.mxu0 %v2784
    %3179 = vmatpush1.msra.mxu0 %v2783
    %3180 = vmatprep.subr.mxu0 %v2792
    %3181 = vmatpush1.msra.mxu0 %v2791
    %3182 = vmatprep.subr.mxu0 %v2800
    %3183 = vmatpush1.msra.mxu0 %v2799
    %3184 = vmatprep.subr.mxu0 %v2808
    %3185 = vmatpush1.msra.mxu0 %v2807
    %3186 = vmatprep.subr.mxu0 %v2816
    %3187 = vmatpush1.msra.mxu0 %v2815
    %3188 = vmatprep.subr.mxu0 %v2824
    %3189 = vmatpush1.msra.mxu0 %v2823
    %3190 = vmatprep.subr.mxu0 %v2832
    %3191 = vmatpush1.msra.mxu0 %v2831
    %3192 = vmatprep.subr.mxu0 %v2840
    %3193 = vmatpush1.msra.mxu0 %v2839
    %3194 = vmatprep.subr.mxu0 %v2848
    %3195 = vmatpush1.msra.mxu0 %v2847
    %3196 = vmatprep.subr.mxu0 %v2856
    %3197 = vmatpush1.msra.mxu0 %v2855
    %3198 = vmatprep.subr.mxu0 %v2864
    %3199 = vmatpush1.msra.mxu0 %v2863
    %3200 = vmatprep.subr.mxu0 %v2872
    %3201 = vmatpush1.msra.mxu0 %v2871
    %3202 = vmatprep.subr.mxu0 %v2880
    %3203 = vmatpush1.msra.mxu0 %v2879
    %3204 = vmatprep.mubr.f32.mxu0 %v2372
    %3205 = vmatmul.mubr.f32.gmra.mrb[0].mxu0 %v2371
    %v3206 = vpop.f32.mrb[0].mxu0
    %v3207 = vadd.f32 %v3136, %v3206
    %v3208 = vpop.f32.mrb[0].mxu0
    %v3209 = vadd.f32 %v3138, %v3208
    %3210 = vdwg.mxu0
    %3211 = vmatprep.subr.mxu0 %v2378
    %3212 = vmatpush1.msra.mxu0 %v2377
    %3213 = vmatprep.subr.mxu0 %v2386
    %3214 = vmatpush1.msra.mxu0 %v2385
    %3215 = vmatprep.subr.mxu0 %v2394
    %3216 = vmatpush1.msra.mxu0 %v2393
    %3217 = vmatprep.subr.mxu0 %v2402
    %3218 = vmatpush1.msra.mxu0 %v2401
    %3219 = vmatprep.subr.mxu0 %v2410
    %3220 = vmatpush1.msra.mxu0 %v2409
    %3221 = vmatprep.subr.mxu0 %v2418
    %3222 = vmatpush1.msra.mxu0 %v2417
    %3223 = vmatprep.subr.mxu0 %v2426
    %3224 = vmatpush1.msra.mxu0 %v2425
    %3225 = vmatprep.subr.mxu0 %v2434
    %3226 = vmatpush1.msra.mxu0 %v2433
    %3227 = vmatprep.subr.mxu0 %v2442
    %3228 = vmatpush1.msra.mxu0 %v2441
    %3229 = vmatprep.subr.mxu0 %v2450
    %3230 = vmatpush1.msra.mxu0 %v2449
    %3231 = vmatprep.subr.mxu0 %v2458
    %3232 = vmatpush1.msra.mxu0 %v2457
    %3233 = vmatprep.subr.mxu0 %v2466
    %3234 = vmatpush1.msra.mxu0 %v2465
    %3235 = vmatprep.subr.mxu0 %v2474
    %3236 = vmatpush1.msra.mxu0 %v2473
    %3237 = vmatprep.subr.mxu0 %v2482
    %3238 = vmatpush1.msra.mxu0 %v2481
    %3239 = vmatprep.subr.mxu0 %v2490
    %3240 = vmatpush1.msra.mxu0 %v2489
    %3241 = vmatprep.subr.mxu0 %v2498
    %3242 = vmatpush1.msra.mxu0 %v2497
    %3243 = vmatprep.subr.mxu0 %v2506
    %3244 = vmatpush1.msra.mxu0 %v2505
    %3245 = vmatprep.subr.mxu0 %v2514
    %3246 = vmatpush1.msra.mxu0 %v2513
    %3247 = vmatprep.subr.mxu0 %v2522
    %3248 = vmatpush1.msra.mxu0 %v2521
    %3249 = vmatprep.subr.mxu0 %v2530
    %3250 = vmatpush1.msra.mxu0 %v2529
    %3251 = vmatprep.subr.mxu0 %v2538
    %3252 = vmatpush1.msra.mxu0 %v2537
    %3253 = vmatprep.subr.mxu0 %v2546
    %3254 = vmatpush1.msra.mxu0 %v2545
    %3255 = vmatprep.subr.mxu0 %v2554
    %3256 = vmatpush1.msra.mxu0 %v2553
    %3257 = vmatprep.subr.mxu0 %v2562
    %3258 = vmatpush1.msra.mxu0 %v2561
    %3259 = vmatprep.subr.mxu0 %v2570
    %3260 = vmatpush1.msra.mxu0 %v2569
    %3261 = vmatprep.subr.mxu0 %v2578
    %3262 = vmatpush1.msra.mxu0 %v2577
    %3263 = vmatprep.subr.mxu0 %v2586
    %3264 = vmatpush1.msra.mxu0 %v2585
    %3265 = vmatprep.subr.mxu0 %v2594
    %3266 = vmatpush1.msra.mxu0 %v2593
    %3267 = vmatprep.subr.mxu0 %v2602
    %3268 = vmatpush1.msra.mxu0 %v2601
    %3269 = vmatprep.subr.mxu0 %v2610
    %3270 = vmatpush1.msra.mxu0 %v2609
    %3271 = vmatprep.subr.mxu0 %v2618
    %3272 = vmatpush1.msra.mxu0 %v2617
    %3273 = vmatprep.subr.mxu0 %v2626
    %3274 = vmatpush1.msra.mxu0 %v2625
    %3275 = vmatprep.mubr.f32.mxu0 %v2370
    %3276 = vmatmul.mubr.f32.gmra.mrb[0].mxu0 %v2369
    %v3277 = vpop.f32.mrb[0].mxu0
    %v3278 = vadd.f32 %v2906, %v3277
    %v3279 = vpop.f32.mrb[0].mxu0
    %v3280 = vadd.f32 %v2910, %v3279
    %3281 = vdwg.mxu0
    %3282 = vmatprep.subr.mxu0 %v2634
    %3283 = vmatpush1.msra.mxu0 %v2633
    %3284 = vmatprep.subr.mxu0 %v2642
    %3285 = vmatpush1.msra.mxu0 %v2641
    %3286 = vmatprep.subr.mxu0 %v2650
    %3287 = vmatpush1.msra.mxu0 %v2649
    %3288 = vmatprep.subr.mxu0 %v2658
    %3289 = vmatpush1.msra.mxu0 %v2657
    %3290 = vmatprep.subr.mxu0 %v2666
    %3291 = vmatpush1.msra.mxu0 %v2665
    %3292 = vmatprep.subr.mxu0 %v2674
    %3293 = vmatpush1.msra.mxu0 %v2673
    %3294 = vmatprep.subr.mxu0 %v2682
    %3295 = vmatpush1.msra.mxu0 %v2681
    %3296 = vmatprep.subr.mxu0 %v2690
    %3297 = vmatpush1.msra.mxu0 %v2689
    %3298 = vmatprep.subr.mxu0 %v2698
    %3299 = vmatpush1.msra.mxu0 %v2697
    %3300 = vmatprep.subr.mxu0 %v2706
    %3301 = vmatpush1.msra.mxu0 %v2705
    %3302 = vmatprep.subr.mxu0 %v2714
    %3303 = vmatpush1.msra.mxu0 %v2713
    %3304 = vmatprep.subr.mxu0 %v2722
    %3305 = vmatpush1.msra.mxu0 %v2721
    %3306 = vmatprep.subr.mxu0 %v2730
    %3307 = vmatpush1.msra.mxu0 %v2729
    %3308 = vmatprep.subr.mxu0 %v2738
    %3309 = vmatpush1.msra.mxu0 %v2737
    %3310 = vmatprep.subr.mxu0 %v2746
    %3311 = vmatpush1.msra.mxu0 %v2745
    %3312 = vmatprep.subr.mxu0 %v2754
    %3313 = vmatpush1.msra.mxu0 %v2753
    %3314 = vmatprep.subr.mxu0 %v2762
    %3315 = vmatpush1.msra.mxu0 %v2761
    %3316 = vmatprep.subr.mxu0 %v2770
    %3317 = vmatpush1.msra.mxu0 %v2769
    %3318 = vmatprep.subr.mxu0 %v2778
    %3319 = vmatpush1.msra.mxu0 %v2777
    %3320 = vmatprep.subr.mxu0 %v2786
    %3321 = vmatpush1.msra.mxu0 %v2785
    %3322 = vmatprep.subr.mxu0 %v2794
    %3323 = vmatpush1.msra.mxu0 %v2793
    %3324 = vmatprep.subr.mxu0 %v2802
    %3325 = vmatpush1.msra.mxu0 %v2801
    %3326 = vmatprep.subr.mxu0 %v2810
    %3327 = vmatpush1.msra.mxu0 %v2809
    %3328 = vmatprep.subr.mxu0 %v2818
    %3329 = vmatpush1.msra.mxu0 %v2817
    %3330 = vmatprep.subr.mxu0 %v2826
    %3331 = vmatpush1.msra.mxu0 %v2825
    %3332 = vmatprep.subr.mxu0 %v2834
    %3333 = vmatpush1.msra.mxu0 %v2833
    %3334 = vmatprep.subr.mxu0 %v2842
    %3335 = vmatpush1.msra.mxu0 %v2841
    %3336 = vmatprep.subr.mxu0 %v2850
    %3337 = vmatpush1.msra.mxu0 %v2849
    %3338 = vmatprep.subr.mxu0 %v2858
    %3339 = vmatpush1.msra.mxu0 %v2857
    %3340 = vmatprep.subr.mxu0 %v2866
    %3341 = vmatpush1.msra.mxu0 %v2865
    %3342 = vmatprep.subr.mxu0 %v2874
    %3343 = vmatpush1.msra.mxu0 %v2873
    %3344 = vmatprep.subr.mxu0 %v2882
    %3345 = vmatpush1.msra.mxu0 %v2881
    %3346 = vmatprep.mubr.f32.mxu0 %v2372
    %3347 = vmatmul.mubr.f32.gmra.mrb[0].mxu0 %v2371
    %v3348 = vpop.f32.mrb[0].mxu0
    %v3349 = vadd.f32 %v3278, %v3348
    %v3350 = vpop.f32.mrb[0].mxu0
    %v3351 = vadd.f32 %v3280, %v3350
    %3352 = vdwg.mxu0
    %3353 = vmatprep.subr.mxu0 %v2380
    %3354 = vmatpush1.msra.mxu0 %v2379
    %3355 = vmatprep.subr.mxu0 %v2388
    %3356 = vmatpush1.msra.mxu0 %v2387
    %3357 = vmatprep.subr.mxu0 %v2396
    %3358 = vmatpush1.msra.mxu0 %v2395
    %3359 = vmatprep.subr.mxu0 %v2404
    %3360 = vmatpush1.msra.mxu0 %v2403
    %3361 = vmatprep.subr.mxu0 %v2412
    %3362 = vmatpush1.msra.mxu0 %v2411
    %3363 = vmatprep.subr.mxu0 %v2420
    %3364 = vmatpush1.msra.mxu0 %v2419
    %3365 = vmatprep.subr.mxu0 %v2428
    %3366 = vmatpush1.msra.mxu0 %v2427
    %3367 = vmatprep.subr.mxu0 %v2436
    %3368 = vmatpush1.msra.mxu0 %v2435
    %3369 = vmatprep.subr.mxu0 %v2444
    %3370 = vmatpush1.msra.mxu0 %v2443
    %3371 = vmatprep.subr.mxu0 %v2452
    %3372 = vmatpush1.msra.mxu0 %v2451
    %3373 = vmatprep.subr.mxu0 %v2460
    %3374 = vmatpush1.msra.mxu0 %v2459
    %3375 = vmatprep.subr.mxu0 %v2468
    %3376 = vmatpush1.msra.mxu0 %v2467
    %3377 = vmatprep.subr.mxu0 %v2476
    %3378 = vmatpush1.msra.mxu0 %v2475
    %3379 = vmatprep.subr.mxu0 %v2484
    %3380 = vmatpush1.msra.mxu0 %v2483
    %3381 = vmatprep.subr.mxu0 %v2492
    %3382 = vmatpush1.msra.mxu0 %v2491
    %3383 = vmatprep.subr.mxu0 %v2500
    %3384 = vmatpush1.msra.mxu0 %v2499
    %3385 = vmatprep.subr.mxu0 %v2508
    %3386 = vmatpush1.msra.mxu0 %v2507
    %3387 = vmatprep.subr.mxu0 %v2516
    %3388 = vmatpush1.msra.mxu0 %v2515
    %3389 = vmatprep.subr.mxu0 %v2524
    %3390 = vmatpush1.msra.mxu0 %v2523
    %3391 = vmatprep.subr.mxu0 %v2532
    %3392 = vmatpush1.msra.mxu0 %v2531
    %3393 = vmatprep.subr.mxu0 %v2540
    %3394 = vmatpush1.msra.mxu0 %v2539
    %3395 = vmatprep.subr.mxu0 %v2548
    %3396 = vmatpush1.msra.mxu0 %v2547
    %3397 = vmatprep.subr.mxu0 %v2556
    %3398 = vmatpush1.msra.mxu0 %v2555
    %3399 = vmatprep.subr.mxu0 %v2564
    %3400 = vmatpush1.msra.mxu0 %v2563
    %3401 = vmatprep.subr.mxu0 %v2572
    %3402 = vmatpush1.msra.mxu0 %v2571
    %3403 = vmatprep.subr.mxu0 %v2580
    %3404 = vmatpush1.msra.mxu0 %v2579
    %3405 = vmatprep.subr.mxu0 %v2588
    %3406 = vmatpush1.msra.mxu0 %v2587
    %3407 = vmatprep.subr.mxu0 %v2596
    %3408 = vmatpush1.msra.mxu0 %v2595
    %3409 = vmatprep.subr.mxu0 %v2604
    %3410 = vmatpush1.msra.mxu0 %v2603
    %3411 = vmatprep.subr.mxu0 %v2612
    %3412 = vmatpush1.msra.mxu0 %v2611
    %3413 = vmatprep.subr.mxu0 %v2620
    %3414 = vmatpush1.msra.mxu0 %v2619
    %3415 = vmatprep.subr.mxu0 %v2628
    %3416 = vmatpush1.msra.mxu0 %v2627
    %3417 = vmatprep.mubr.f32.mxu0 %v2370
    %3418 = vmatmul.mubr.f32.gmra.mrb[0].mxu0 %v2369
    %v3419 = vpop.f32.mrb[0].mxu0
    %v3420 = vadd.f32 %v2914, %v3419
    %v3421 = vpop.f32.mrb[0].mxu0
    %v3422 = vadd.f32 %v2918, %v3421
    %3423 = vdwg.mxu0
    %3424 = vmatprep.subr.mxu0 %v2636
    %3425 = vmatpush1.msra.mxu0 %v2635
    %3426 = vmatprep.subr.mxu0 %v2644
    %3427 = vmatpush1.msra.mxu0 %v2643
    %3428 = vmatprep.subr.mxu0 %v2652
    %3429 = vmatpush1.msra.mxu0 %v2651
    %3430 = vmatprep.subr.mxu0 %v2660
    %3431 = vmatpush1.msra.mxu0 %v2659
    %3432 = vmatprep.subr.mxu0 %v2668
    %3433 = vmatpush1.msra.mxu0 %v2667
    %3434 = vmatprep.subr.mxu0 %v2676
    %3435 = vmatpush1.msra.mxu0 %v2675
    %3436 = vmatprep.subr.mxu0 %v2684
    %3437 = vmatpush1.msra.mxu0 %v2683
    %3438 = vmatprep.subr.mxu0 %v2692
    %3439 = vmatpush1.msra.mxu0 %v2691
    %3440 = vmatprep.subr.mxu0 %v2700
    %3441 = vmatpush1.msra.mxu0 %v2699
    %3442 = vmatprep.subr.mxu0 %v2708
    %3443 = vmatpush1.msra.mxu0 %v2707
    %3444 = vmatprep.subr.mxu0 %v2716
    %3445 = vmatpush1.msra.mxu0 %v2715
    %3446 = vmatprep.subr.mxu0 %v2724
    %3447 = vmatpush1.msra.mxu0 %v2723
    %3448 = vmatprep.subr.mxu0 %v2732
    %3449 = vmatpush1.msra.mxu0 %v2731
    %3450 = vmatprep.subr.mxu0 %v2740
    %3451 = vmatpush1.msra.mxu0 %v2739
    %3452 = vmatprep.subr.mxu0 %v2748
    %3453 = vmatpush1.msra.mxu0 %v2747
    %3454 = vmatprep.subr.mxu0 %v2756
    %3455 = vmatpush1.msra.mxu0 %v2755
    %3456 = vmatprep.subr.mxu0 %v2764
    %3457 = vmatpush1.msra.mxu0 %v2763
    %3458 = vmatprep.subr.mxu0 %v2772
    %3459 = vmatpush1.msra.mxu0 %v2771
    %3460 = vmatprep.subr.mxu0 %v2780
    %3461 = vmatpush1.msra.mxu0 %v2779
    %3462 = vmatprep.subr.mxu0 %v2788
    %3463 = vmatpush1.msra.mxu0 %v2787
    %3464 = vmatprep.subr.mxu0 %v2796
    %3465 = vmatpush1.msra.mxu0 %v2795
    %3466 = vmatprep.subr.mxu0 %v2804
    %3467 = vmatpush1.msra.mxu0 %v2803
    %3468 = vmatprep.subr.mxu0 %v2812
    %3469 = vmatpush1.msra.mxu0 %v2811
    %3470 = vmatprep.subr.mxu0 %v2820
    %3471 = vmatpush1.msra.mxu0 %v2819
    %3472 = vmatprep.subr.mxu0 %v2828
    %3473 = vmatpush1.msra.mxu0 %v2827
    %3474 = vmatprep.subr.mxu0 %v2836
    %3475 = vmatpush1.msra.mxu0 %v2835
    %3476 = vmatprep.subr.mxu0 %v2844
    %3477 = vmatpush1.msra.mxu0 %v2843
    %3478 = vmatprep.subr.mxu0 %v2852
    %3479 = vmatpush1.msra.mxu0 %v2851
    %3480 = vmatprep.subr.mxu0 %v2860
    %3481 = vmatpush1.msra.mxu0 %v2859
    %3482 = vmatprep.subr.mxu0 %v2868
    %3483 = vmatpush1.msra.mxu0 %v2867
    %3484 = vmatprep.subr.mxu0 %v2876
    %3485 = vmatpush1.msra.mxu0 %v2875
    %3486 = vmatprep.subr.mxu0 %v2884
    %3487 = vmatpush1.msra.mxu0 %v2883
    %3488 = vmatprep.mubr.f32.mxu0 %v2372
    %3489 = vmatmul.mubr.f32.gmra.mrb[0].mxu0 %v2371
    %v3490 = vpop.f32.mrb[0].mxu0
    %v3491 = vadd.f32 %v3420, %v3490
    %v3492 = vpop.f32.mrb[0].mxu0
    %v3493 = vadd.f32 %v3422, %v3492
    %3494 = vdwg.mxu0
    %v3495 = vmax.f32 %v3065, 0.0
    %v3496 = vmax.f32 %v3067, 0.0
    %v3497 = vmax.f32 %v3207, 0.0
    %v3498 = vmax.f32 %v3209, 0.0
    %v3499 = vmax.f32 %v3349, 0.0
    %v3500 = vmax.f32 %v3351, 0.0
    %v3501 = vmax.f32 %v3491, 0.0
    %v3502 = vmax.f32 %v3493, 0.0
    %v3503 = vld [vmem:[#allocation12] sm:$0xff]
    %v3504 = vld [vmem:[#allocation12 + $0x8] sm:$0xff]
    %v3505 = vld [vmem:[#allocation12 + $0x10] sm:$0xff]
    %v3506 = vld [vmem:[#allocation12 + $0x18] sm:$0xff]
    %v3507 = vld [vmem:[#allocation12 + $0x20] sm:$0xff]
    %v3508 = vld [vmem:[#allocation12 + $0x28] sm:$0xff]
    %v3509 = vld [vmem:[#allocation12 + $0x30] sm:$0xff]
    %v3510 = vld [vmem:[#allocation12 + $0x38] sm:$0xff]
    %v3511 = vld [vmem:[#allocation12 + $0x40] sm:$0xff]
    %v3512 = vld [vmem:[#allocation12 + $0x48] sm:$0xff]
    %v3513 = vld [vmem:[#allocation12 + $0x50] sm:$0xff]
    %v3514 = vld [vmem:[#allocation12 + $0x58] sm:$0xff]
    %v3515 = vld [vmem:[#allocation12 + $0x60] sm:$0xff]
    %v3516 = vld [vmem:[#allocation12 + $0x68] sm:$0xff]
    %v3517 = vld [vmem:[#allocation12 + $0x70] sm:$0xff]
    %v3518 = vld [vmem:[#allocation12 + $0x78] sm:$0xff]
    %v3519 = vld [vmem:[#allocation12 + $0x80] sm:$0xff]
    %v3520 = vld [vmem:[#allocation12 + $0x88] sm:$0xff]
    %v3521 = vld [vmem:[#allocation12 + $0x90] sm:$0xff]
    %v3522 = vld [vmem:[#allocation12 + $0x98] sm:$0xff]
    %v3523 = vld [vmem:[#allocation12 + $0xa0] sm:$0xff]
    %v3524 = vld [vmem:[#allocation12 + $0xa8] sm:$0xff]
    %v3525 = vld [vmem:[#allocation12 + $0xb0] sm:$0xff]
    %v3526 = vld [vmem:[#allocation12 + $0xb8] sm:$0xff]
    %v3527 = vld [vmem:[#allocation12 + $0xc0] sm:$0xff]
    %v3528 = vld [vmem:[#allocation12 + $0xc8] sm:$0xff]
    %v3529 = vld [vmem:[#allocation12 + $0xd0] sm:$0xff]
    %v3530 = vld [vmem:[#allocation12 + $0xd8] sm:$0xff]
    %v3531 = vld [vmem:[#allocation12 + $0xe0] sm:$0xff]
    %v3532 = vld [vmem:[#allocation12 + $0xe8] sm:$0xff]
    %v3533 = vld [vmem:[#allocation12 + $0xf0] sm:$0xff]
    %v3534 = vld [vmem:[#allocation12 + $0xf8] sm:$0xff]
    %v3535 = vld [vmem:[#allocation12 + $0x100] sm:$0xff]
    %v3536 = vld [vmem:[#allocation12 + $0x108] sm:$0xff]
    %v3537 = vld [vmem:[#allocation12 + $0x110] sm:$0xff]
    %v3538 = vld [vmem:[#allocation12 + $0x118] sm:$0xff]
    %v3539 = vld [vmem:[#allocation12 + $0x120] sm:$0xff]
    %v3540 = vld [vmem:[#allocation12 + $0x128] sm:$0xff]
    %v3541 = vld [vmem:[#allocation12 + $0x130] sm:$0xff]
    %v3542 = vld [vmem:[#allocation12 + $0x138] sm:$0xff]
    %v3543 = vld [vmem:[#allocation12 + $0x140] sm:$0xff]
    %v3544 = vld [vmem:[#allocation12 + $0x148] sm:$0xff]
    %v3545 = vld [vmem:[#allocation12 + $0x150] sm:$0xff]
    %v3546 = vld [vmem:[#allocation12 + $0x158] sm:$0xff]
    %v3547 = vld [vmem:[#allocation12 + $0x160] sm:$0xff]
    %v3548 = vld [vmem:[#allocation12 + $0x168] sm:$0xff]
    %v3549 = vld [vmem:[#allocation12 + $0x170] sm:$0xff]
    %v3550 = vld [vmem:[#allocation12 + $0x178] sm:$0xff]
    %v3551 = vld [vmem:[#allocation12 + $0x180] sm:$0xff]
    %v3552 = vld [vmem:[#allocation12 + $0x188] sm:$0xff]
    %v3553 = vld [vmem:[#allocation12 + $0x190] sm:$0xff]
    %v3554 = vld [vmem:[#allocation12 + $0x198] sm:$0xff]
    %v3555 = vld [vmem:[#allocation12 + $0x1a0] sm:$0xff]
    %v3556 = vld [vmem:[#allocation12 + $0x1a8] sm:$0xff]
    %v3557 = vld [vmem:[#allocation12 + $0x1b0] sm:$0xff]
    %v3558 = vld [vmem:[#allocation12 + $0x1b8] sm:$0xff]
    %v3559 = vld [vmem:[#allocation12 + $0x1c0] sm:$0xff]
    %v3560 = vld [vmem:[#allocation12 + $0x1c8] sm:$0xff]
    %v3561 = vld [vmem:[#allocation12 + $0x1d0] sm:$0xff]
    %v3562 = vld [vmem:[#allocation12 + $0x1d8] sm:$0xff]
    %v3563 = vld [vmem:[#allocation12 + $0x1e0] sm:$0xff]
    %v3564 = vld [vmem:[#allocation12 + $0x1e8] sm:$0xff]
    %v3565 = vld [vmem:[#allocation12 + $0x1f0] sm:$0xff]
    %v3566 = vld [vmem:[#allocation12 + $0x1f8] sm:$0xff]
    %v3567 = vld [vmem:[#allocation12 + $0x200] sm:$0xff]
    %v3568 = vld [vmem:[#allocation12 + $0x208] sm:$0xff]
    %v3569 = vld [vmem:[#allocation12 + $0x210] sm:$0xff]
    %v3570 = vld [vmem:[#allocation12 + $0x218] sm:$0xff]
    %v3571 = vld [vmem:[#allocation12 + $0x220] sm:$0xff]
    %v3572 = vld [vmem:[#allocation12 + $0x228] sm:$0xff]
    %v3573 = vld [vmem:[#allocation12 + $0x230] sm:$0xff]
    %v3574 = vld [vmem:[#allocation12 + $0x238] sm:$0xff]
    %v3575 = vld [vmem:[#allocation12 + $0x240] sm:$0xff]
    %v3576 = vld [vmem:[#allocation12 + $0x248] sm:$0xff]
    %v3577 = vld [vmem:[#allocation12 + $0x250] sm:$0xff]
    %v3578 = vld [vmem:[#allocation12 + $0x258] sm:$0xff]
    %v3579 = vld [vmem:[#allocation12 + $0x260] sm:$0xff]
    %v3580 = vld [vmem:[#allocation12 + $0x268] sm:$0xff]
    %v3581 = vld [vmem:[#allocation12 + $0x270] sm:$0xff]
    %v3582 = vld [vmem:[#allocation12 + $0x278] sm:$0xff]
    %v3583 = vld [vmem:[#allocation12 + $0x280] sm:$0xff]
    %v3584 = vld [vmem:[#allocation12 + $0x288] sm:$0xff]
    %v3585 = vld [vmem:[#allocation12 + $0x290] sm:$0xff]
    %v3586 = vld [vmem:[#allocation12 + $0x298] sm:$0xff]
    %v3587 = vld [vmem:[#allocation12 + $0x2a0] sm:$0xff]
    %v3588 = vld [vmem:[#allocation12 + $0x2a8] sm:$0xff]
    %v3589 = vld [vmem:[#allocation12 + $0x2b0] sm:$0xff]
    %v3590 = vld [vmem:[#allocation12 + $0x2b8] sm:$0xff]
    %v3591 = vld [vmem:[#allocation12 + $0x2c0] sm:$0xff]
    %v3592 = vld [vmem:[#allocation12 + $0x2c8] sm:$0xff]
    %v3593 = vld [vmem:[#allocation12 + $0x2d0] sm:$0xff]
    %v3594 = vld [vmem:[#allocation12 + $0x2d8] sm:$0xff]
    %v3595 = vld [vmem:[#allocation12 + $0x2e0] sm:$0xff]
    %v3596 = vld [vmem:[#allocation12 + $0x2e8] sm:$0xff]
    %v3597 = vld [vmem:[#allocation12 + $0x2f0] sm:$0xff]
    %v3598 = vld [vmem:[#allocation12 + $0x2f8] sm:$0xff]
    %v3599 = vld [vmem:[#allocation12 + $0x300] sm:$0xff]
    %v3600 = vld [vmem:[#allocation12 + $0x308] sm:$0xff]
    %v3601 = vld [vmem:[#allocation12 + $0x310] sm:$0xff]
    %v3602 = vld [vmem:[#allocation12 + $0x318] sm:$0xff]
    %v3603 = vld [vmem:[#allocation12 + $0x320] sm:$0xff]
    %v3604 = vld [vmem:[#allocation12 + $0x328] sm:$0xff]
    %v3605 = vld [vmem:[#allocation12 + $0x330] sm:$0xff]
    %v3606 = vld [vmem:[#allocation12 + $0x338] sm:$0xff]
    %v3607 = vld [vmem:[#allocation12 + $0x340] sm:$0xff]
    %v3608 = vld [vmem:[#allocation12 + $0x348] sm:$0xff]
    %v3609 = vld [vmem:[#allocation12 + $0x350] sm:$0xff]
    %v3610 = vld [vmem:[#allocation12 + $0x358] sm:$0xff]
    %v3611 = vld [vmem:[#allocation12 + $0x360] sm:$0xff]
    %v3612 = vld [vmem:[#allocation12 + $0x368] sm:$0xff]
    %v3613 = vld [vmem:[#allocation12 + $0x370] sm:$0xff]
    %v3614 = vld [vmem:[#allocation12 + $0x378] sm:$0xff]
    %v3615 = vld [vmem:[#allocation12 + $0x380] sm:$0xff]
    %v3616 = vld [vmem:[#allocation12 + $0x388] sm:$0xff]
    %v3617 = vld [vmem:[#allocation12 + $0x390] sm:$0xff]
    %v3618 = vld [vmem:[#allocation12 + $0x398] sm:$0xff]
    %v3619 = vld [vmem:[#allocation12 + $0x3a0] sm:$0xff]
    %v3620 = vld [vmem:[#allocation12 + $0x3a8] sm:$0xff]
    %v3621 = vld [vmem:[#allocation12 + $0x3b0] sm:$0xff]
    %v3622 = vld [vmem:[#allocation12 + $0x3b8] sm:$0xff]
    %v3623 = vld [vmem:[#allocation12 + $0x3c0] sm:$0xff]
    %v3624 = vld [vmem:[#allocation12 + $0x3c8] sm:$0xff]
    %v3625 = vld [vmem:[#allocation12 + $0x3d0] sm:$0xff]
    %v3626 = vld [vmem:[#allocation12 + $0x3d8] sm:$0xff]
    %v3627 = vld [vmem:[#allocation12 + $0x3e0] sm:$0xff]
    %v3628 = vld [vmem:[#allocation12 + $0x3e8] sm:$0xff]
    %v3629 = vld [vmem:[#allocation12 + $0x3f0] sm:$0xff]
    %v3630 = vld [vmem:[#allocation12 + $0x3f8] sm:$0xff]
    %v3631 = vld [vmem:[#allocation12 + $0x400] sm:$0xff]
    %v3632 = vld [vmem:[#allocation12 + $0x408] sm:$0xff]
    %v3633 = vld [vmem:[#allocation12 + $0x410] sm:$0xff]
    %v3634 = vld [vmem:[#allocation12 + $0x418] sm:$0xff]
    %v3635 = vld [vmem:[#allocation12 + $0x420] sm:$0xff]
    %v3636 = vld [vmem:[#allocation12 + $0x428] sm:$0xff]
    %v3637 = vld [vmem:[#allocation12 + $0x430] sm:$0xff]
    %v3638 = vld [vmem:[#allocation12 + $0x438] sm:$0xff]
    %v3639 = vld [vmem:[#allocation12 + $0x440] sm:$0xff]
    %v3640 = vld [vmem:[#allocation12 + $0x448] sm:$0xff]
    %v3641 = vld [vmem:[#allocation12 + $0x450] sm:$0xff]
    %v3642 = vld [vmem:[#allocation12 + $0x458] sm:$0xff]
    %v3643 = vld [vmem:[#allocation12 + $0x460] sm:$0xff]
    %v3644 = vld [vmem:[#allocation12 + $0x468] sm:$0xff]
    %v3645 = vld [vmem:[#allocation12 + $0x470] sm:$0xff]
    %v3646 = vld [vmem:[#allocation12 + $0x478] sm:$0xff]
    %v3647 = vld [vmem:[#allocation12 + $0x480] sm:$0xff]
    %v3648 = vld [vmem:[#allocation12 + $0x488] sm:$0xff]
    %v3649 = vld [vmem:[#allocation12 + $0x490] sm:$0xff]
    %v3650 = vld [vmem:[#allocation12 + $0x498] sm:$0xff]
    %v3651 = vld [vmem:[#allocation12 + $0x4a0] sm:$0xff]
    %v3652 = vld [vmem:[#allocation12 + $0x4a8] sm:$0xff]
    %v3653 = vld [vmem:[#allocation12 + $0x4b0] sm:$0xff]
    %v3654 = vld [vmem:[#allocation12 + $0x4b8] sm:$0xff]
    %v3655 = vld [vmem:[#allocation12 + $0x4c0] sm:$0xff]
    %v3656 = vld [vmem:[#allocation12 + $0x4c8] sm:$0xff]
    %v3657 = vld [vmem:[#allocation12 + $0x4d0] sm:$0xff]
    %v3658 = vld [vmem:[#allocation12 + $0x4d8] sm:$0xff]
    %v3659 = vld [vmem:[#allocation12 + $0x4e0] sm:$0xff]
    %v3660 = vld [vmem:[#allocation12 + $0x4e8] sm:$0xff]
    %v3661 = vld [vmem:[#allocation12 + $0x4f0] sm:$0xff]
    %v3662 = vld [vmem:[#allocation12 + $0x4f8] sm:$0xff]
    %v3663 = vld [vmem:[#allocation12 + $0x500] sm:$0xff]
    %v3664 = vld [vmem:[#allocation12 + $0x508] sm:$0xff]
    %v3665 = vld [vmem:[#allocation12 + $0x510] sm:$0xff]
    %v3666 = vld [vmem:[#allocation12 + $0x518] sm:$0xff]
    %v3667 = vld [vmem:[#allocation12 + $0x520] sm:$0xff]
    %v3668 = vld [vmem:[#allocation12 + $0x528] sm:$0xff]
    %v3669 = vld [vmem:[#allocation12 + $0x530] sm:$0xff]
    %v3670 = vld [vmem:[#allocation12 + $0x538] sm:$0xff]
    %v3671 = vld [vmem:[#allocation12 + $0x540] sm:$0xff]
    %v3672 = vld [vmem:[#allocation12 + $0x548] sm:$0xff]
    %v3673 = vld [vmem:[#allocation12 + $0x550] sm:$0xff]
    %v3674 = vld [vmem:[#allocation12 + $0x558] sm:$0xff]
    %v3675 = vld [vmem:[#allocation12 + $0x560] sm:$0xff]
    %v3676 = vld [vmem:[#allocation12 + $0x568] sm:$0xff]
    %v3677 = vld [vmem:[#allocation12 + $0x570] sm:$0xff]
    %v3678 = vld [vmem:[#allocation12 + $0x578] sm:$0xff]
    %v3679 = vld [vmem:[#allocation12 + $0x580] sm:$0xff]
    %v3680 = vld [vmem:[#allocation12 + $0x588] sm:$0xff]
    %v3681 = vld [vmem:[#allocation12 + $0x590] sm:$0xff]
    %v3682 = vld [vmem:[#allocation12 + $0x598] sm:$0xff]
    %v3683 = vld [vmem:[#allocation12 + $0x5a0] sm:$0xff]
    %v3684 = vld [vmem:[#allocation12 + $0x5a8] sm:$0xff]
    %v3685 = vld [vmem:[#allocation12 + $0x5b0] sm:$0xff]
    %v3686 = vld [vmem:[#allocation12 + $0x5b8] sm:$0xff]
    %v3687 = vld [vmem:[#allocation12 + $0x5c0] sm:$0xff]
    %v3688 = vld [vmem:[#allocation12 + $0x5c8] sm:$0xff]
    %v3689 = vld [vmem:[#allocation12 + $0x5d0] sm:$0xff]
    %v3690 = vld [vmem:[#allocation12 + $0x5d8] sm:$0xff]
    %v3691 = vld [vmem:[#allocation12 + $0x5e0] sm:$0xff]
    %v3692 = vld [vmem:[#allocation12 + $0x5e8] sm:$0xff]
    %v3693 = vld [vmem:[#allocation12 + $0x5f0] sm:$0xff]
    %v3694 = vld [vmem:[#allocation12 + $0x5f8] sm:$0xff]
    %v3695 = vld [vmem:[#allocation12 + $0x600] sm:$0xff]
    %v3696 = vld [vmem:[#allocation12 + $0x608] sm:$0xff]
    %v3697 = vld [vmem:[#allocation12 + $0x610] sm:$0xff]
    %v3698 = vld [vmem:[#allocation12 + $0x618] sm:$0xff]
    %v3699 = vld [vmem:[#allocation12 + $0x620] sm:$0xff]
    %v3700 = vld [vmem:[#allocation12 + $0x628] sm:$0xff]
    %v3701 = vld [vmem:[#allocation12 + $0x630] sm:$0xff]
    %v3702 = vld [vmem:[#allocation12 + $0x638] sm:$0xff]
    %v3703 = vld [vmem:[#allocation12 + $0x640] sm:$0xff]
    %v3704 = vld [vmem:[#allocation12 + $0x648] sm:$0xff]
    %v3705 = vld [vmem:[#allocation12 + $0x650] sm:$0xff]
    %v3706 = vld [vmem:[#allocation12 + $0x658] sm:$0xff]
    %v3707 = vld [vmem:[#allocation12 + $0x660] sm:$0xff]
    %v3708 = vld [vmem:[#allocation12 + $0x668] sm:$0xff]
    %v3709 = vld [vmem:[#allocation12 + $0x670] sm:$0xff]
    %v3710 = vld [vmem:[#allocation12 + $0x678] sm:$0xff]
    %v3711 = vld [vmem:[#allocation12 + $0x680] sm:$0xff]
    %v3712 = vld [vmem:[#allocation12 + $0x688] sm:$0xff]
    %v3713 = vld [vmem:[#allocation12 + $0x690] sm:$0xff]
    %v3714 = vld [vmem:[#allocation12 + $0x698] sm:$0xff]
    %v3715 = vld [vmem:[#allocation12 + $0x6a0] sm:$0xff]
    %v3716 = vld [vmem:[#allocation12 + $0x6a8] sm:$0xff]
    %v3717 = vld [vmem:[#allocation12 + $0x6b0] sm:$0xff]
    %v3718 = vld [vmem:[#allocation12 + $0x6b8] sm:$0xff]
    %v3719 = vld [vmem:[#allocation12 + $0x6c0] sm:$0xff]
    %v3720 = vld [vmem:[#allocation12 + $0x6c8] sm:$0xff]
    %v3721 = vld [vmem:[#allocation12 + $0x6d0] sm:$0xff]
    %v3722 = vld [vmem:[#allocation12 + $0x6d8] sm:$0xff]
    %v3723 = vld [vmem:[#allocation12 + $0x6e0] sm:$0xff]
    %v3724 = vld [vmem:[#allocation12 + $0x6e8] sm:$0xff]
    %v3725 = vld [vmem:[#allocation12 + $0x6f0] sm:$0xff]
    %v3726 = vld [vmem:[#allocation12 + $0x6f8] sm:$0xff]
    %v3727 = vld [vmem:[#allocation12 + $0x700] sm:$0xff]
    %v3728 = vld [vmem:[#allocation12 + $0x708] sm:$0xff]
    %v3729 = vld [vmem:[#allocation12 + $0x710] sm:$0xff]
    %v3730 = vld [vmem:[#allocation12 + $0x718] sm:$0xff]
    %v3731 = vld [vmem:[#allocation12 + $0x720] sm:$0xff]
    %v3732 = vld [vmem:[#allocation12 + $0x728] sm:$0xff]
    %v3733 = vld [vmem:[#allocation12 + $0x730] sm:$0xff]
    %v3734 = vld [vmem:[#allocation12 + $0x738] sm:$0xff]
    %v3735 = vld [vmem:[#allocation12 + $0x740] sm:$0xff]
    %v3736 = vld [vmem:[#allocation12 + $0x748] sm:$0xff]
    %v3737 = vld [vmem:[#allocation12 + $0x750] sm:$0xff]
    %v3738 = vld [vmem:[#allocation12 + $0x758] sm:$0xff]
    %v3739 = vld [vmem:[#allocation12 + $0x760] sm:$0xff]
    %v3740 = vld [vmem:[#allocation12 + $0x768] sm:$0xff]
    %v3741 = vld [vmem:[#allocation12 + $0x770] sm:$0xff]
    %v3742 = vld [vmem:[#allocation12 + $0x778] sm:$0xff]
    %v3743 = vld [vmem:[#allocation12 + $0x780] sm:$0xff]
    %v3744 = vld [vmem:[#allocation12 + $0x788] sm:$0xff]
    %v3745 = vld [vmem:[#allocation12 + $0x790] sm:$0xff]
    %v3746 = vld [vmem:[#allocation12 + $0x798] sm:$0xff]
    %v3747 = vld [vmem:[#allocation12 + $0x7a0] sm:$0xff]
    %v3748 = vld [vmem:[#allocation12 + $0x7a8] sm:$0xff]
    %v3749 = vld [vmem:[#allocation12 + $0x7b0] sm:$0xff]
    %v3750 = vld [vmem:[#allocation12 + $0x7b8] sm:$0xff]
    %v3751 = vld [vmem:[#allocation12 + $0x7c0] sm:$0xff]
    %v3752 = vld [vmem:[#allocation12 + $0x7c8] sm:$0xff]
    %v3753 = vld [vmem:[#allocation12 + $0x7d0] sm:$0xff]
    %v3754 = vld [vmem:[#allocation12 + $0x7d8] sm:$0xff]
    %v3755 = vld [vmem:[#allocation12 + $0x7e0] sm:$0xff]
    %v3756 = vld [vmem:[#allocation12 + $0x7e8] sm:$0xff]
    %v3757 = vld [vmem:[#allocation12 + $0x7f0] sm:$0xff]
    %v3758 = vld [vmem:[#allocation12 + $0x7f8] sm:$0xff]
    %v3759 = vld [vmem:[#allocation12 + $0x800] sm:$0xff]
    %v3760 = vld [vmem:[#allocation12 + $0x808] sm:$0xff]
    %v3761 = vld [vmem:[#allocation12 + $0x810] sm:$0xff]
    %v3762 = vld [vmem:[#allocation12 + $0x818] sm:$0xff]
    %v3763 = vld [vmem:[#allocation12 + $0x820] sm:$0xff]
    %v3764 = vld [vmem:[#allocation12 + $0x828] sm:$0xff]
    %v3765 = vld [vmem:[#allocation12 + $0x830] sm:$0xff]
    %v3766 = vld [vmem:[#allocation12 + $0x838] sm:$0xff]
    %v3767 = vld [vmem:[#allocation12 + $0x840] sm:$0xff]
    %v3768 = vld [vmem:[#allocation12 + $0x848] sm:$0xff]
    %v3769 = vld [vmem:[#allocation12 + $0x850] sm:$0xff]
    %v3770 = vld [vmem:[#allocation12 + $0x858] sm:$0xff]
    %v3771 = vld [vmem:[#allocation12 + $0x860] sm:$0xff]
    %v3772 = vld [vmem:[#allocation12 + $0x868] sm:$0xff]
    %v3773 = vld [vmem:[#allocation12 + $0x870] sm:$0xff]
    %v3774 = vld [vmem:[#allocation12 + $0x878] sm:$0xff]
    %v3775 = vld [vmem:[#allocation12 + $0x880] sm:$0xff]
    %v3776 = vld [vmem:[#allocation12 + $0x888] sm:$0xff]
    %v3777 = vld [vmem:[#allocation12 + $0x890] sm:$0xff]
    %v3778 = vld [vmem:[#allocation12 + $0x898] sm:$0xff]
    %v3779 = vld [vmem:[#allocation12 + $0x8a0] sm:$0xff]
    %v3780 = vld [vmem:[#allocation12 + $0x8a8] sm:$0xff]
    %v3781 = vld [vmem:[#allocation12 + $0x8b0] sm:$0xff]
    %v3782 = vld [vmem:[#allocation12 + $0x8b8] sm:$0xff]
    %v3783 = vld [vmem:[#allocation12 + $0x8c0] sm:$0xff]
    %v3784 = vld [vmem:[#allocation12 + $0x8c8] sm:$0xff]
    %v3785 = vld [vmem:[#allocation12 + $0x8d0] sm:$0xff]
    %v3786 = vld [vmem:[#allocation12 + $0x8d8] sm:$0xff]
    %v3787 = vld [vmem:[#allocation12 + $0x8e0] sm:$0xff]
    %v3788 = vld [vmem:[#allocation12 + $0x8e8] sm:$0xff]
    %v3789 = vld [vmem:[#allocation12 + $0x8f0] sm:$0xff]
    %v3790 = vld [vmem:[#allocation12 + $0x8f8] sm:$0xff]
    %v3791 = vld [vmem:[#allocation12 + $0x900] sm:$0xff]
    %v3792 = vld [vmem:[#allocation12 + $0x908] sm:$0xff]
    %v3793 = vld [vmem:[#allocation12 + $0x910] sm:$0xff]
    %v3794 = vld [vmem:[#allocation12 + $0x918] sm:$0xff]
    %v3795 = vld [vmem:[#allocation12 + $0x920] sm:$0xff]
    %v3796 = vld [vmem:[#allocation12 + $0x928] sm:$0xff]
    %v3797 = vld [vmem:[#allocation12 + $0x930] sm:$0xff]
    %v3798 = vld [vmem:[#allocation12 + $0x938] sm:$0xff]
    %v3799 = vld [vmem:[#allocation12 + $0x940] sm:$0xff]
    %v3800 = vld [vmem:[#allocation12 + $0x948] sm:$0xff]
    %v3801 = vld [vmem:[#allocation12 + $0x950] sm:$0xff]
    %v3802 = vld [vmem:[#allocation12 + $0x958] sm:$0xff]
    %v3803 = vld [vmem:[#allocation12 + $0x960] sm:$0xff]
    %v3804 = vld [vmem:[#allocation12 + $0x968] sm:$0xff]
    %v3805 = vld [vmem:[#allocation12 + $0x970] sm:$0xff]
    %v3806 = vld [vmem:[#allocation12 + $0x978] sm:$0xff]
    %v3807 = vld [vmem:[#allocation12 + $0x980] sm:$0xff]
    %v3808 = vld [vmem:[#allocation12 + $0x988] sm:$0xff]
    %v3809 = vld [vmem:[#allocation12 + $0x990] sm:$0xff]
    %v3810 = vld [vmem:[#allocation12 + $0x998] sm:$0xff]
    %v3811 = vld [vmem:[#allocation12 + $0x9a0] sm:$0xff]
    %v3812 = vld [vmem:[#allocation12 + $0x9a8] sm:$0xff]
    %v3813 = vld [vmem:[#allocation12 + $0x9b0] sm:$0xff]
    %v3814 = vld [vmem:[#allocation12 + $0x9b8] sm:$0xff]
    %v3815 = vld [vmem:[#allocation12 + $0x9c0] sm:$0xff]
    %v3816 = vld [vmem:[#allocation12 + $0x9c8] sm:$0xff]
    %v3817 = vld [vmem:[#allocation12 + $0x9d0] sm:$0xff]
    %v3818 = vld [vmem:[#allocation12 + $0x9d8] sm:$0xff]
    %v3819 = vld [vmem:[#allocation12 + $0x9e0] sm:$0xff]
    %v3820 = vld [vmem:[#allocation12 + $0x9e8] sm:$0xff]
    %v3821 = vld [vmem:[#allocation12 + $0x9f0] sm:$0xff]
    %v3822 = vld [vmem:[#allocation12 + $0x9f8] sm:$0xff]
    %v3823 = vld [vmem:[#allocation12 + $0xa00] sm:$0xff]
    %v3824 = vld [vmem:[#allocation12 + $0xa08] sm:$0xff]
    %v3825 = vld [vmem:[#allocation12 + $0xa10] sm:$0xff]
    %v3826 = vld [vmem:[#allocation12 + $0xa18] sm:$0xff]
    %v3827 = vld [vmem:[#allocation12 + $0xa20] sm:$0xff]
    %v3828 = vld [vmem:[#allocation12 + $0xa28] sm:$0xff]
    %v3829 = vld [vmem:[#allocation12 + $0xa30] sm:$0xff]
    %v3830 = vld [vmem:[#allocation12 + $0xa38] sm:$0xff]
    %v3831 = vld [vmem:[#allocation12 + $0xa40] sm:$0xff]
    %v3832 = vld [vmem:[#allocation12 + $0xa48] sm:$0xff]
    %v3833 = vld [vmem:[#allocation12 + $0xa50] sm:$0xff]
    %v3834 = vld [vmem:[#allocation12 + $0xa58] sm:$0xff]
    %v3835 = vld [vmem:[#allocation12 + $0xa60] sm:$0xff]
    %v3836 = vld [vmem:[#allocation12 + $0xa68] sm:$0xff]
    %v3837 = vld [vmem:[#allocation12 + $0xa70] sm:$0xff]
    %v3838 = vld [vmem:[#allocation12 + $0xa78] sm:$0xff]
    %v3839 = vld [vmem:[#allocation12 + $0xa80] sm:$0xff]
    %v3840 = vld [vmem:[#allocation12 + $0xa88] sm:$0xff]
    %v3841 = vld [vmem:[#allocation12 + $0xa90] sm:$0xff]
    %v3842 = vld [vmem:[#allocation12 + $0xa98] sm:$0xff]
    %v3843 = vld [vmem:[#allocation12 + $0xaa0] sm:$0xff]
    %v3844 = vld [vmem:[#allocation12 + $0xaa8] sm:$0xff]
    %v3845 = vld [vmem:[#allocation12 + $0xab0] sm:$0xff]
    %v3846 = vld [vmem:[#allocation12 + $0xab8] sm:$0xff]
    %v3847 = vld [vmem:[#allocation12 + $0xac0] sm:$0xff]
    %v3848 = vld [vmem:[#allocation12 + $0xac8] sm:$0xff]
    %v3849 = vld [vmem:[#allocation12 + $0xad0] sm:$0xff]
    %v3850 = vld [vmem:[#allocation12 + $0xad8] sm:$0xff]
    %v3851 = vld [vmem:[#allocation12 + $0xae0] sm:$0xff]
    %v3852 = vld [vmem:[#allocation12 + $0xae8] sm:$0xff]
    %v3853 = vld [vmem:[#allocation12 + $0xaf0] sm:$0xff]
    %v3854 = vld [vmem:[#allocation12 + $0xaf8] sm:$0xff]
    %v3855 = vld [vmem:[#allocation12 + $0xb00] sm:$0xff]
    %v3856 = vld [vmem:[#allocation12 + $0xb08] sm:$0xff]
    %v3857 = vld [vmem:[#allocation12 + $0xb10] sm:$0xff]
    %v3858 = vld [vmem:[#allocation12 + $0xb18] sm:$0xff]
    %v3859 = vld [vmem:[#allocation12 + $0xb20] sm:$0xff]
    %v3860 = vld [vmem:[#allocation12 + $0xb28] sm:$0xff]
    %v3861 = vld [vmem:[#allocation12 + $0xb30] sm:$0xff]
    %v3862 = vld [vmem:[#allocation12 + $0xb38] sm:$0xff]
    %v3863 = vld [vmem:[#allocation12 + $0xb40] sm:$0xff]
    %v3864 = vld [vmem:[#allocation12 + $0xb48] sm:$0xff]
    %v3865 = vld [vmem:[#allocation12 + $0xb50] sm:$0xff]
    %v3866 = vld [vmem:[#allocation12 + $0xb58] sm:$0xff]
    %v3867 = vld [vmem:[#allocation12 + $0xb60] sm:$0xff]
    %v3868 = vld [vmem:[#allocation12 + $0xb68] sm:$0xff]
    %v3869 = vld [vmem:[#allocation12 + $0xb70] sm:$0xff]
    %v3870 = vld [vmem:[#allocation12 + $0xb78] sm:$0xff]
    %v3871 = vld [vmem:[#allocation12 + $0xb80] sm:$0xff]
    %v3872 = vld [vmem:[#allocation12 + $0xb88] sm:$0xff]
    %v3873 = vld [vmem:[#allocation12 + $0xb90] sm:$0xff]
    %v3874 = vld [vmem:[#allocation12 + $0xb98] sm:$0xff]
    %v3875 = vld [vmem:[#allocation12 + $0xba0] sm:$0xff]
    %v3876 = vld [vmem:[#allocation12 + $0xba8] sm:$0xff]
    %v3877 = vld [vmem:[#allocation12 + $0xbb0] sm:$0xff]
    %v3878 = vld [vmem:[#allocation12 + $0xbb8] sm:$0xff]
    %v3879 = vld [vmem:[#allocation12 + $0xbc0] sm:$0xff]
    %v3880 = vld [vmem:[#allocation12 + $0xbc8] sm:$0xff]
    %v3881 = vld [vmem:[#allocation12 + $0xbd0] sm:$0xff]
    %v3882 = vld [vmem:[#allocation12 + $0xbd8] sm:$0xff]
    %v3883 = vld [vmem:[#allocation12 + $0xbe0] sm:$0xff]
    %v3884 = vld [vmem:[#allocation12 + $0xbe8] sm:$0xff]
    %v3885 = vld [vmem:[#allocation12 + $0xbf0] sm:$0xff]
    %v3886 = vld [vmem:[#allocation12 + $0xbf8] sm:$0xff]
    %v3887 = vld [vmem:[#allocation12 + $0xc00] sm:$0xff]
    %v3888 = vld [vmem:[#allocation12 + $0xc08] sm:$0xff]
    %v3889 = vld [vmem:[#allocation12 + $0xc10] sm:$0xff]
    %v3890 = vld [vmem:[#allocation12 + $0xc18] sm:$0xff]
    %v3891 = vld [vmem:[#allocation12 + $0xc20] sm:$0xff]
    %v3892 = vld [vmem:[#allocation12 + $0xc28] sm:$0xff]
    %v3893 = vld [vmem:[#allocation12 + $0xc30] sm:$0xff]
    %v3894 = vld [vmem:[#allocation12 + $0xc38] sm:$0xff]
    %v3895 = vld [vmem:[#allocation12 + $0xc40] sm:$0xff]
    %v3896 = vld [vmem:[#allocation12 + $0xc48] sm:$0xff]
    %v3897 = vld [vmem:[#allocation12 + $0xc50] sm:$0xff]
    %v3898 = vld [vmem:[#allocation12 + $0xc58] sm:$0xff]
    %v3899 = vld [vmem:[#allocation12 + $0xc60] sm:$0xff]
    %v3900 = vld [vmem:[#allocation12 + $0xc68] sm:$0xff]
    %v3901 = vld [vmem:[#allocation12 + $0xc70] sm:$0xff]
    %v3902 = vld [vmem:[#allocation12 + $0xc78] sm:$0xff]
    %v3903 = vld [vmem:[#allocation12 + $0xc80] sm:$0xff]
    %v3904 = vld [vmem:[#allocation12 + $0xc88] sm:$0xff]
    %v3905 = vld [vmem:[#allocation12 + $0xc90] sm:$0xff]
    %v3906 = vld [vmem:[#allocation12 + $0xc98] sm:$0xff]
    %v3907 = vld [vmem:[#allocation12 + $0xca0] sm:$0xff]
    %v3908 = vld [vmem:[#allocation12 + $0xca8] sm:$0xff]
    %v3909 = vld [vmem:[#allocation12 + $0xcb0] sm:$0xff]
    %v3910 = vld [vmem:[#allocation12 + $0xcb8] sm:$0xff]
    %v3911 = vld [vmem:[#allocation12 + $0xcc0] sm:$0xff]
    %v3912 = vld [vmem:[#allocation12 + $0xcc8] sm:$0xff]
    %v3913 = vld [vmem:[#allocation12 + $0xcd0] sm:$0xff]
    %v3914 = vld [vmem:[#allocation12 + $0xcd8] sm:$0xff]
    %v3915 = vld [vmem:[#allocation12 + $0xce0] sm:$0xff]
    %v3916 = vld [vmem:[#allocation12 + $0xce8] sm:$0xff]
    %v3917 = vld [vmem:[#allocation12 + $0xcf0] sm:$0xff]
    %v3918 = vld [vmem:[#allocation12 + $0xcf8] sm:$0xff]
    %v3919 = vld [vmem:[#allocation12 + $0xd00] sm:$0xff]
    %v3920 = vld [vmem:[#allocation12 + $0xd08] sm:$0xff]
    %v3921 = vld [vmem:[#allocation12 + $0xd10] sm:$0xff]
    %v3922 = vld [vmem:[#allocation12 + $0xd18] sm:$0xff]
    %v3923 = vld [vmem:[#allocation12 + $0xd20] sm:$0xff]
    %v3924 = vld [vmem:[#allocation12 + $0xd28] sm:$0xff]
    %v3925 = vld [vmem:[#allocation12 + $0xd30] sm:$0xff]
    %v3926 = vld [vmem:[#allocation12 + $0xd38] sm:$0xff]
    %v3927 = vld [vmem:[#allocation12 + $0xd40] sm:$0xff]
    %v3928 = vld [vmem:[#allocation12 + $0xd48] sm:$0xff]
    %v3929 = vld [vmem:[#allocation12 + $0xd50] sm:$0xff]
    %v3930 = vld [vmem:[#allocation12 + $0xd58] sm:$0xff]
    %v3931 = vld [vmem:[#allocation12 + $0xd60] sm:$0xff]
    %v3932 = vld [vmem:[#allocation12 + $0xd68] sm:$0xff]
    %v3933 = vld [vmem:[#allocation12 + $0xd70] sm:$0xff]
    %v3934 = vld [vmem:[#allocation12 + $0xd78] sm:$0xff]
    %v3935 = vld [vmem:[#allocation12 + $0xd80] sm:$0xff]
    %v3936 = vld [vmem:[#allocation12 + $0xd88] sm:$0xff]
    %v3937 = vld [vmem:[#allocation12 + $0xd90] sm:$0xff]
    %v3938 = vld [vmem:[#allocation12 + $0xd98] sm:$0xff]
    %v3939 = vld [vmem:[#allocation12 + $0xda0] sm:$0xff]
    %v3940 = vld [vmem:[#allocation12 + $0xda8] sm:$0xff]
    %v3941 = vld [vmem:[#allocation12 + $0xdb0] sm:$0xff]
    %v3942 = vld [vmem:[#allocation12 + $0xdb8] sm:$0xff]
    %v3943 = vld [vmem:[#allocation12 + $0xdc0] sm:$0xff]
    %v3944 = vld [vmem:[#allocation12 + $0xdc8] sm:$0xff]
    %v3945 = vld [vmem:[#allocation12 + $0xdd0] sm:$0xff]
    %v3946 = vld [vmem:[#allocation12 + $0xdd8] sm:$0xff]
    %v3947 = vld [vmem:[#allocation12 + $0xde0] sm:$0xff]
    %v3948 = vld [vmem:[#allocation12 + $0xde8] sm:$0xff]
    %v3949 = vld [vmem:[#allocation12 + $0xdf0] sm:$0xff]
    %v3950 = vld [vmem:[#allocation12 + $0xdf8] sm:$0xff]
    %v3951 = vld [vmem:[#allocation12 + $0xe00] sm:$0xff]
    %v3952 = vld [vmem:[#allocation12 + $0xe08] sm:$0xff]
    %v3953 = vld [vmem:[#allocation12 + $0xe10] sm:$0xff]
    %v3954 = vld [vmem:[#allocation12 + $0xe18] sm:$0xff]
    %v3955 = vld [vmem:[#allocation12 + $0xe20] sm:$0xff]
    %v3956 = vld [vmem:[#allocation12 + $0xe28] sm:$0xff]
    %v3957 = vld [vmem:[#allocation12 + $0xe30] sm:$0xff]
    %v3958 = vld [vmem:[#allocation12 + $0xe38] sm:$0xff]
    %v3959 = vld [vmem:[#allocation12 + $0xe40] sm:$0xff]
    %v3960 = vld [vmem:[#allocation12 + $0xe48] sm:$0xff]
    %v3961 = vld [vmem:[#allocation12 + $0xe50] sm:$0xff]
    %v3962 = vld [vmem:[#allocation12 + $0xe58] sm:$0xff]
    %v3963 = vld [vmem:[#allocation12 + $0xe60] sm:$0xff]
    %v3964 = vld [vmem:[#allocation12 + $0xe68] sm:$0xff]
    %v3965 = vld [vmem:[#allocation12 + $0xe70] sm:$0xff]
    %v3966 = vld [vmem:[#allocation12 + $0xe78] sm:$0xff]
    %v3967 = vld [vmem:[#allocation12 + $0xe80] sm:$0xff]
    %v3968 = vld [vmem:[#allocation12 + $0xe88] sm:$0xff]
    %v3969 = vld [vmem:[#allocation12 + $0xe90] sm:$0xff]
    %v3970 = vld [vmem:[#allocation12 + $0xe98] sm:$0xff]
    %v3971 = vld [vmem:[#allocation12 + $0xea0] sm:$0xff]
    %v3972 = vld [vmem:[#allocation12 + $0xea8] sm:$0xff]
    %v3973 = vld [vmem:[#allocation12 + $0xeb0] sm:$0xff]
    %v3974 = vld [vmem:[#allocation12 + $0xeb8] sm:$0xff]
    %v3975 = vld [vmem:[#allocation12 + $0xec0] sm:$0xff]
    %v3976 = vld [vmem:[#allocation12 + $0xec8] sm:$0xff]
    %v3977 = vld [vmem:[#allocation12 + $0xed0] sm:$0xff]
    %v3978 = vld [vmem:[#allocation12 + $0xed8] sm:$0xff]
    %v3979 = vld [vmem:[#allocation12 + $0xee0] sm:$0xff]
    %v3980 = vld [vmem:[#allocation12 + $0xee8] sm:$0xff]
    %v3981 = vld [vmem:[#allocation12 + $0xef0] sm:$0xff]
    %v3982 = vld [vmem:[#allocation12 + $0xef8] sm:$0xff]
    %v3983 = vld [vmem:[#allocation12 + $0xf00] sm:$0xff]
    %v3984 = vld [vmem:[#allocation12 + $0xf08] sm:$0xff]
    %v3985 = vld [vmem:[#allocation12 + $0xf10] sm:$0xff]
    %v3986 = vld [vmem:[#allocation12 + $0xf18] sm:$0xff]
    %v3987 = vld [vmem:[#allocation12 + $0xf20] sm:$0xff]
    %v3988 = vld [vmem:[#allocation12 + $0xf28] sm:$0xff]
    %v3989 = vld [vmem:[#allocation12 + $0xf30] sm:$0xff]
    %v3990 = vld [vmem:[#allocation12 + $0xf38] sm:$0xff]
    %v3991 = vld [vmem:[#allocation12 + $0xf40] sm:$0xff]
    %v3992 = vld [vmem:[#allocation12 + $0xf48] sm:$0xff]
    %v3993 = vld [vmem:[#allocation12 + $0xf50] sm:$0xff]
    %v3994 = vld [vmem:[#allocation12 + $0xf58] sm:$0xff]
    %v3995 = vld [vmem:[#allocation12 + $0xf60] sm:$0xff]
    %v3996 = vld [vmem:[#allocation12 + $0xf68] sm:$0xff]
    %v3997 = vld [vmem:[#allocation12 + $0xf70] sm:$0xff]
    %v3998 = vld [vmem:[#allocation12 + $0xf78] sm:$0xff]
    %v3999 = vld [vmem:[#allocation12 + $0xf80] sm:$0xff]
    %v4000 = vld [vmem:[#allocation12 + $0xf88] sm:$0xff]
    %v4001 = vld [vmem:[#allocation12 + $0xf90] sm:$0xff]
    %v4002 = vld [vmem:[#allocation12 + $0xf98] sm:$0xff]
    %v4003 = vld [vmem:[#allocation12 + $0xfa0] sm:$0xff]
    %v4004 = vld [vmem:[#allocation12 + $0xfa8] sm:$0xff]
    %v4005 = vld [vmem:[#allocation12 + $0xfb0] sm:$0xff]
    %v4006 = vld [vmem:[#allocation12 + $0xfb8] sm:$0xff]
    %v4007 = vld [vmem:[#allocation12 + $0xfc0] sm:$0xff]
    %v4008 = vld [vmem:[#allocation12 + $0xfc8] sm:$0xff]
    %v4009 = vld [vmem:[#allocation12 + $0xfd0] sm:$0xff]
    %v4010 = vld [vmem:[#allocation12 + $0xfd8] sm:$0xff]
    %v4011 = vld [vmem:[#allocation12 + $0xfe0] sm:$0xff]
    %v4012 = vld [vmem:[#allocation12 + $0xfe8] sm:$0xff]
    %v4013 = vld [vmem:[#allocation12 + $0xff0] sm:$0xff]
    %v4014 = vld [vmem:[#allocation12 + $0xff8] sm:$0xff]
    %v4015 = vld [vmem:[#allocation13] sm:$0xf]
    %v4017 = vlaneseq
    %v4018 = vshrl.u32 %v4017, 7
    %v4019 = vsub.s32 0, %v4018
    %v4020 = vrot.slane %v4015, %v4019
    %v4021 = vlaneseq
    %v4022 = vshrl.u32 %v4021, 7
    %v4023 = vsub.s32 1, %v4022
    %v4024 = vrot.slane %v4015, %v4023
    %v4025 = vlaneseq
    %v4026 = vshrl.u32 %v4025, 7
    %v4027 = vsub.s32 2, %v4026
    %v4028 = vrot.slane %v4015, %v4027
    %v4029 = vlaneseq
    %v4030 = vshrl.u32 %v4029, 7
    %v4031 = vsub.s32 3, %v4030
    %v4032 = vrot.slane %v4015, %v4031
    %4037 = vmatprep.subr.mxu0 %v3504
    %4038 = vmatpush1.msra.mxu0 %v3503
    %4039 = vmatprep.subr.mxu0 %v3508
    %4040 = vmatpush1.msra.mxu0 %v3507
    %4041 = vmatprep.subr.mxu0 %v3512
    %4042 = vmatpush1.msra.mxu0 %v3511
    %4043 = vmatprep.subr.mxu0 %v3516
    %4044 = vmatpush1.msra.mxu0 %v3515
    %4045 = vmatprep.subr.mxu0 %v3520
    %4046 = vmatpush1.msra.mxu0 %v3519
    %4047 = vmatprep.subr.mxu0 %v3524
    %4048 = vmatpush1.msra.mxu0 %v3523
    %4049 = vmatprep.subr.mxu0 %v3528
    %4050 = vmatpush1.msra.mxu0 %v3527
    %4051 = vmatprep.subr.mxu0 %v3532
    %4052 = vmatpush1.msra.mxu0 %v3531
    %4053 = vmatprep.subr.mxu0 %v3536
    %4054 = vmatpush1.msra.mxu0 %v3535
    %4055 = vmatprep.subr.mxu0 %v3540
    %4056 = vmatpush1.msra.mxu0 %v3539
    %4057 = vmatprep.subr.mxu0 %v3544
    %4058 = vmatpush1.msra.mxu0 %v3543
    %4059 = vmatprep.subr.mxu0 %v3548
    %4060 = vmatpush1.msra.mxu0 %v3547
    %4061 = vmatprep.subr.mxu0 %v3552
    %4062 = vmatpush1.msra.mxu0 %v3551
    %4063 = vmatprep.subr.mxu0 %v3556
    %4064 = vmatpush1.msra.mxu0 %v3555
    %4065 = vmatprep.subr.mxu0 %v3560
    %4066 = vmatpush1.msra.mxu0 %v3559
    %4067 = vmatprep.subr.mxu0 %v3564
    %4068 = vmatpush1.msra.mxu0 %v3563
    %4069 = vmatprep.subr.mxu0 %v3568
    %4070 = vmatpush1.msra.mxu0 %v3567
    %4071 = vmatprep.subr.mxu0 %v3572
    %4072 = vmatpush1.msra.mxu0 %v3571
    %4073 = vmatprep.subr.mxu0 %v3576
    %4074 = vmatpush1.msra.mxu0 %v3575
    %4075 = vmatprep.subr.mxu0 %v3580
    %4076 = vmatpush1.msra.mxu0 %v3579
    %4077 = vmatprep.subr.mxu0 %v3584
    %4078 = vmatpush1.msra.mxu0 %v3583
    %4079 = vmatprep.subr.mxu0 %v3588
    %4080 = vmatpush1.msra.mxu0 %v3587
    %4081 = vmatprep.subr.mxu0 %v3592
    %4082 = vmatpush1.msra.mxu0 %v3591
    %4083 = vmatprep.subr.mxu0 %v3596
    %4084 = vmatpush1.msra.mxu0 %v3595
    %4085 = vmatprep.subr.mxu0 %v3600
    %4086 = vmatpush1.msra.mxu0 %v3599
    %4087 = vmatprep.subr.mxu0 %v3604
    %4088 = vmatpush1.msra.mxu0 %v3603
    %4089 = vmatprep.subr.mxu0 %v3608
    %4090 = vmatpush1.msra.mxu0 %v3607
    %4091 = vmatprep.subr.mxu0 %v3612
    %4092 = vmatpush1.msra.mxu0 %v3611
    %4093 = vmatprep.subr.mxu0 %v3616
    %4094 = vmatpush1.msra.mxu0 %v3615
    %4095 = vmatprep.subr.mxu0 %v3620
    %4096 = vmatpush1.msra.mxu0 %v3619
    %4097 = vmatprep.subr.mxu0 %v3624
    %4098 = vmatpush1.msra.mxu0 %v3623
    %4099 = vmatprep.subr.mxu0 %v3628
    %4100 = vmatpush1.msra.mxu0 %v3627
    %4101 = vmatprep.mubr.f32.mxu0 %v3496
    %4102 = vmatmul.mubr.f32.gmra.mrb[0].mxu0 %v3495
    %v4103 = vpop.f32.mrb[0].mxu0
    %v4104 = vadd.f32 %v4020, %v4103
    %v4105 = vpop.f32.mrb[0].mxu0
    %v4106 = vadd.f32 %v4024, %v4105
    %4107 = vdwg.mxu0
    %4108 = vmatprep.subr.mxu0 %v3632
    %4109 = vmatpush1.msra.mxu0 %v3631
    %4110 = vmatprep.subr.mxu0 %v3636
    %4111 = vmatpush1.msra.mxu0 %v3635
    %4112 = vmatprep.subr.mxu0 %v3640
    %4113 = vmatpush1.msra.mxu0 %v3639
    %4114 = vmatprep.subr.mxu0 %v3644
    %4115 = vmatpush1.msra.mxu0 %v3643
    %4116 = vmatprep.subr.mxu0 %v3648
    %4117 = vmatpush1.msra.mxu0 %v3647
    %4118 = vmatprep.subr.mxu0 %v3652
    %4119 = vmatpush1.msra.mxu0 %v3651
    %4120 = vmatprep.subr.mxu0 %v3656
    %4121 = vmatpush1.msra.mxu0 %v3655
    %4122 = vmatprep.subr.mxu0 %v3660
    %4123 = vmatpush1.msra.mxu0 %v3659
    %4124 = vmatprep.subr.mxu0 %v3664
    %4125 = vmatpush1.msra.mxu0 %v3663
    %4126 = vmatprep.subr.mxu0 %v3668
    %4127 = vmatpush1.msra.mxu0 %v3667
    %4128 = vmatprep.subr.mxu0 %v3672
    %4129 = vmatpush1.msra.mxu0 %v3671
    %4130 = vmatprep.subr.mxu0 %v3676
    %4131 = vmatpush1.msra.mxu0 %v3675
    %4132 = vmatprep.subr.mxu0 %v3680
    %4133 = vmatpush1.msra.mxu0 %v3679
    %4134 = vmatprep.subr.mxu0 %v3684
    %4135 = vmatpush1.msra.mxu0 %v3683
    %4136 = vmatprep.subr.mxu0 %v3688
    %4137 = vmatpush1.msra.mxu0 %v3687
    %4138 = vmatprep.subr.mxu0 %v3692
    %4139 = vmatpush1.msra.mxu0 %v3691
    %4140 = vmatprep.subr.mxu0 %v3696
    %4141 = vmatpush1.msra.mxu0 %v3695
    %4142 = vmatprep.subr.mxu0 %v3700
    %4143 = vmatpush1.msra.mxu0 %v3699
    %4144 = vmatprep.subr.mxu0 %v3704
    %4145 = vmatpush1.msra.mxu0 %v3703
    %4146 = vmatprep.subr.mxu0 %v3708
    %4147 = vmatpush1.msra.mxu0 %v3707
    %4148 = vmatprep.subr.mxu0 %v3712
    %4149 = vmatpush1.msra.mxu0 %v3711
    %4150 = vmatprep.subr.mxu0 %v3716
    %4151 = vmatpush1.msra.mxu0 %v3715
    %4152 = vmatprep.subr.mxu0 %v3720
    %4153 = vmatpush1.msra.mxu0 %v3719
    %4154 = vmatprep.subr.mxu0 %v3724
    %4155 = vmatpush1.msra.mxu0 %v3723
    %4156 = vmatprep.subr.mxu0 %v3728
    %4157 = vmatpush1.msra.mxu0 %v3727
    %4158 = vmatprep.subr.mxu0 %v3732
    %4159 = vmatpush1.msra.mxu0 %v3731
    %4160 = vmatprep.subr.mxu0 %v3736
    %4161 = vmatpush1.msra.mxu0 %v3735
    %4162 = vmatprep.subr.mxu0 %v3740
    %4163 = vmatpush1.msra.mxu0 %v3739
    %4164 = vmatprep.subr.mxu0 %v3744
    %4165 = vmatpush1.msra.mxu0 %v3743
    %4166 = vmatprep.subr.mxu0 %v3748
    %4167 = vmatpush1.msra.mxu0 %v3747
    %4168 = vmatprep.subr.mxu0 %v3752
    %4169 = vmatpush1.msra.mxu0 %v3751
    %4170 = vmatprep.subr.mxu0 %v3756
    %4171 = vmatpush1.msra.mxu0 %v3755
    %4172 = vmatprep.mubr.f32.mxu0 %v3498
    %4173 = vmatmul.mubr.f32.gmra.mrb[0].mxu0 %v3497
    %v4174 = vpop.f32.mrb[0].mxu0
    %v4175 = vadd.f32 %v4104, %v4174
    %v4176 = vpop.f32.mrb[0].mxu0
    %v4177 = vadd.f32 %v4106, %v4176
    %4178 = vdwg.mxu0
    %4179 = vmatprep.subr.mxu0 %v3760
    %4180 = vmatpush1.msra.mxu0 %v3759
    %4181 = vmatprep.subr.mxu0 %v3764
    %4182 = vmatpush1.msra.mxu0 %v3763
    %4183 = vmatprep.subr.mxu0 %v3768
    %4184 = vmatpush1.msra.mxu0 %v3767
    %4185 = vmatprep.subr.mxu0 %v3772
    %4186 = vmatpush1.msra.mxu0 %v3771
    %4187 = vmatprep.subr.mxu0 %v3776
    %4188 = vmatpush1.msra.mxu0 %v3775
    %4189 = vmatprep.subr.mxu0 %v3780
    %4190 = vmatpush1.msra.mxu0 %v3779
    %4191 = vmatprep.subr.mxu0 %v3784
    %4192 = vmatpush1.msra.mxu0 %v3783
    %4193 = vmatprep.subr.mxu0 %v3788
    %4194 = vmatpush1.msra.mxu0 %v3787
    %4195 = vmatprep.subr.mxu0 %v3792
    %4196 = vmatpush1.msra.mxu0 %v3791
    %4197 = vmatprep.subr.mxu0 %v3796
    %4198 = vmatpush1.msra.mxu0 %v3795
    %4199 = vmatprep.subr.mxu0 %v3800
    %4200 = vmatpush1.msra.mxu0 %v3799
    %4201 = vmatprep.subr.mxu0 %v3804
    %4202 = vmatpush1.msra.mxu0 %v3803
    %4203 = vmatprep.subr.mxu0 %v3808
    %4204 = vmatpush1.msra.mxu0 %v3807
    %4205 = vmatprep.subr.mxu0 %v3812
    %4206 = vmatpush1.msra.mxu0 %v3811
    %4207 = vmatprep.subr.mxu0 %v3816
    %4208 = vmatpush1.msra.mxu0 %v3815
    %4209 = vmatprep.subr.mxu0 %v3820
    %4210 = vmatpush1.msra.mxu0 %v3819
    %4211 = vmatprep.subr.mxu0 %v3824
    %4212 = vmatpush1.msra.mxu0 %v3823
    %4213 = vmatprep.subr.mxu0 %v3828
    %4214 = vmatpush1.msra.mxu0 %v3827
    %4215 = vmatprep.subr.mxu0 %v3832
    %4216 = vmatpush1.msra.mxu0 %v3831
    %4217 = vmatprep.subr.mxu0 %v3836
    %4218 = vmatpush1.msra.mxu0 %v3835
    %4219 = vmatprep.subr.mxu0 %v3840
    %4220 = vmatpush1.msra.mxu0 %v3839
    %4221 = vmatprep.subr.mxu0 %v3844
    %4222 = vmatpush1.msra.mxu0 %v3843
    %4223 = vmatprep.subr.mxu0 %v3848
    %4224 = vmatpush1.msra.mxu0 %v3847
    %4225 = vmatprep.subr.mxu0 %v3852
    %4226 = vmatpush1.msra.mxu0 %v3851
    %4227 = vmatprep.subr.mxu0 %v3856
    %4228 = vmatpush1.msra.mxu0 %v3855
    %4229 = vmatprep.subr.mxu0 %v3860
    %4230 = vmatpush1.msra.mxu0 %v3859
    %4231 = vmatprep.subr.mxu0 %v3864
    %4232 = vmatpush1.msra.mxu0 %v3863
    %4233 = vmatprep.subr.mxu0 %v3868
    %4234 = vmatpush1.msra.mxu0 %v3867
    %4235 = vmatprep.subr.mxu0 %v3872
    %4236 = vmatpush1.msra.mxu0 %v3871
    %4237 = vmatprep.subr.mxu0 %v3876
    %4238 = vmatpush1.msra.mxu0 %v3875
    %4239 = vmatprep.subr.mxu0 %v3880
    %4240 = vmatpush1.msra.mxu0 %v3879
    %4241 = vmatprep.subr.mxu0 %v3884
    %4242 = vmatpush1.msra.mxu0 %v3883
    %4243 = vmatprep.mubr.f32.mxu0 %v3500
    %4244 = vmatmul.mubr.f32.gmra.mrb[0].mxu0 %v3499
    %v4245 = vpop.f32.mrb[0].mxu0
    %v4246 = vadd.f32 %v4175, %v4245
    %v4247 = vpop.f32.mrb[0].mxu0
    %v4248 = vadd.f32 %v4177, %v4247
    %4249 = vdwg.mxu0
    %4250 = vmatprep.subr.mxu0 %v3888
    %4251 = vmatpush1.msra.mxu0 %v3887
    %4252 = vmatprep.subr.mxu0 %v3892
    %4253 = vmatpush1.msra.mxu0 %v3891
    %4254 = vmatprep.subr.mxu0 %v3896
    %4255 = vmatpush1.msra.mxu0 %v3895
    %4256 = vmatprep.subr.mxu0 %v3900
    %4257 = vmatpush1.msra.mxu0 %v3899
    %4258 = vmatprep.subr.mxu0 %v3904
    %4259 = vmatpush1.msra.mxu0 %v3903
    %4260 = vmatprep.subr.mxu0 %v3908
    %4261 = vmatpush1.msra.mxu0 %v3907
    %4262 = vmatprep.subr.mxu0 %v3912
    %4263 = vmatpush1.msra.mxu0 %v3911
    %4264 = vmatprep.subr.mxu0 %v3916
    %4265 = vmatpush1.msra.mxu0 %v3915
    %4266 = vmatprep.subr.mxu0 %v3920
    %4267 = vmatpush1.msra.mxu0 %v3919
    %4268 = vmatprep.subr.mxu0 %v3924
    %4269 = vmatpush1.msra.mxu0 %v3923
    %4270 = vmatprep.subr.mxu0 %v3928
    %4271 = vmatpush1.msra.mxu0 %v3927
    %4272 = vmatprep.subr.mxu0 %v3932
    %4273 = vmatpush1.msra.mxu0 %v3931
    %4274 = vmatprep.subr.mxu0 %v3936
    %4275 = vmatpush1.msra.mxu0 %v3935
    %4276 = vmatprep.subr.mxu0 %v3940
    %4277 = vmatpush1.msra.mxu0 %v3939
    %4278 = vmatprep.subr.mxu0 %v3944
    %4279 = vmatpush1.msra.mxu0 %v3943
    %4280 = vmatprep.subr.mxu0 %v3948
    %4281 = vmatpush1.msra.mxu0 %v3947
    %4282 = vmatprep.subr.mxu0 %v3952
    %4283 = vmatpush1.msra.mxu0 %v3951
    %4284 = vmatprep.subr.mxu0 %v3956
    %4285 = vmatpush1.msra.mxu0 %v3955
    %4286 = vmatprep.subr.mxu0 %v3960
    %4287 = vmatpush1.msra.mxu0 %v3959
    %4288 = vmatprep.subr.mxu0 %v3964
    %4289 = vmatpush1.msra.mxu0 %v3963
    %4290 = vmatprep.subr.mxu0 %v3968
    %4291 = vmatpush1.msra.mxu0 %v3967
    %4292 = vmatprep.subr.mxu0 %v3972
    %4293 = vmatpush1.msra.mxu0 %v3971
    %4294 = vmatprep.subr.mxu0 %v3976
    %4295 = vmatpush1.msra.mxu0 %v3975
    %4296 = vmatprep.subr.mxu0 %v3980
    %4297 = vmatpush1.msra.mxu0 %v3979
    %4298 = vmatprep.subr.mxu0 %v3984
    %4299 = vmatpush1.msra.mxu0 %v3983
    %4300 = vmatprep.subr.mxu0 %v3988
    %4301 = vmatpush1.msra.mxu0 %v3987
    %4302 = vmatprep.subr.mxu0 %v3992
    %4303 = vmatpush1.msra.mxu0 %v3991
    %4304 = vmatprep.subr.mxu0 %v3996
    %4305 = vmatpush1.msra.mxu0 %v3995
    %4306 = vmatprep.subr.mxu0 %v4000
    %4307 = vmatpush1.msra.mxu0 %v3999
    %4308 = vmatprep.subr.mxu0 %v4004
    %4309 = vmatpush1.msra.mxu0 %v4003
    %4310 = vmatprep.subr.mxu0 %v4008
    %4311 = vmatpush1.msra.mxu0 %v4007
    %4312 = vmatprep.subr.mxu0 %v4012
    %4313 = vmatpush1.msra.mxu0 %v4011
    %4314 = vmatprep.mubr.f32.mxu0 %v3502
    %4315 = vmatmul.mubr.f32.gmra.mrb[0].mxu0 %v3501
    %v4316 = vpop.f32.mrb[0].mxu0
    %v4317 = vadd.f32 %v4246, %v4316
    %v4318 = vpop.f32.mrb[0].mxu0
    %v4319 = vadd.f32 %v4248, %v4318
    %4320 = vdwg.mxu0
    %4321 = vmatprep.subr.mxu0 %v3506
    %4322 = vmatpush1.msra.mxu0 %v3505
    %4323 = vmatprep.subr.mxu0 %v3510
    %4324 = vmatpush1.msra.mxu0 %v3509
    %4325 = vmatprep.subr.mxu0 %v3514
    %4326 = vmatpush1.msra.mxu0 %v3513
    %4327 = vmatprep.subr.mxu0 %v3518
    %4328 = vmatpush1.msra.mxu0 %v3517
    %4329 = vmatprep.subr.mxu0 %v3522
    %4330 = vmatpush1.msra.mxu0 %v3521
    %4331 = vmatprep.subr.mxu0 %v3526
    %4332 = vmatpush1.msra.mxu0 %v3525
    %4333 = vmatprep.subr.mxu0 %v3530
    %4334 = vmatpush1.msra.mxu0 %v3529
    %4335 = vmatprep.subr.mxu0 %v3534
    %4336 = vmatpush1.msra.mxu0 %v3533
    %4337 = vmatprep.subr.mxu0 %v3538
    %4338 = vmatpush1.msra.mxu0 %v3537
    %4339 = vmatprep.subr.mxu0 %v3542
    %4340 = vmatpush1.msra.mxu0 %v3541
    %4341 = vmatprep.subr.mxu0 %v3546
    %4342 = vmatpush1.msra.mxu0 %v3545
    %4343 = vmatprep.subr.mxu0 %v3550
    %4344 = vmatpush1.msra.mxu0 %v3549
    %4345 = vmatprep.subr.mxu0 %v3554
    %4346 = vmatpush1.msra.mxu0 %v3553
    %4347 = vmatprep.subr.mxu0 %v3558
    %4348 = vmatpush1.msra.mxu0 %v3557
    %4349 = vmatprep.subr.mxu0 %v3562
    %4350 = vmatpush1.msra.mxu0 %v3561
    %4351 = vmatprep.subr.mxu0 %v3566
    %4352 = vmatpush1.msra.mxu0 %v3565
    %4353 = vmatprep.subr.mxu0 %v3570
    %4354 = vmatpush1.msra.mxu0 %v3569
    %4355 = vmatprep.subr.mxu0 %v3574
    %4356 = vmatpush1.msra.mxu0 %v3573
    %4357 = vmatprep.subr.mxu0 %v3578
    %4358 = vmatpush1.msra.mxu0 %v3577
    %4359 = vmatprep.subr.mxu0 %v3582
    %4360 = vmatpush1.msra.mxu0 %v3581
    %4361 = vmatprep.subr.mxu0 %v3586
    %4362 = vmatpush1.msra.mxu0 %v3585
    %4363 = vmatprep.subr.mxu0 %v3590
    %4364 = vmatpush1.msra.mxu0 %v3589
    %4365 = vmatprep.subr.mxu0 %v3594
    %4366 = vmatpush1.msra.mxu0 %v3593
    %4367 = vmatprep.subr.mxu0 %v3598
    %4368 = vmatpush1.msra.mxu0 %v3597
    %4369 = vmatprep.subr.mxu0 %v3602
    %4370 = vmatpush1.msra.mxu0 %v3601
    %4371 = vmatprep.subr.mxu0 %v3606
    %4372 = vmatpush1.msra.mxu0 %v3605
    %4373 = vmatprep.subr.mxu0 %v3610
    %4374 = vmatpush1.msra.mxu0 %v3609
    %4375 = vmatprep.subr.mxu0 %v3614
    %4376 = vmatpush1.msra.mxu0 %v3613
    %4377 = vmatprep.subr.mxu0 %v3618
    %4378 = vmatpush1.msra.mxu0 %v3617
    %4379 = vmatprep.subr.mxu0 %v3622
    %4380 = vmatpush1.msra.mxu0 %v3621
    %4381 = vmatprep.subr.mxu0 %v3626
    %4382 = vmatpush1.msra.mxu0 %v3625
    %4383 = vmatprep.subr.mxu0 %v3630
    %4384 = vmatpush1.msra.mxu0 %v3629
    %4385 = vmatprep.mubr.f32.mxu0 %v3496
    %4386 = vmatmul.mubr.f32.gmra.mrb[0].mxu0 %v3495
    %v4387 = vpop.f32.mrb[0].mxu0
    %v4388 = vadd.f32 %v4028, %v4387
    %v4389 = vpop.f32.mrb[0].mxu0
    %v4390 = vadd.f32 %v4032, %v4389
    %4391 = vdwg.mxu0
    %4392 = vmatprep.subr.mxu0 %v3634
    %4393 = vmatpush1.msra.mxu0 %v3633
    %4394 = vmatprep.subr.mxu0 %v3638
    %4395 = vmatpush1.msra.mxu0 %v3637
    %4396 = vmatprep.subr.mxu0 %v3642
    %4397 = vmatpush1.msra.mxu0 %v3641
    %4398 = vmatprep.subr.mxu0 %v3646
    %4399 = vmatpush1.msra.mxu0 %v3645
    %4400 = vmatprep.subr.mxu0 %v3650
    %4401 = vmatpush1.msra.mxu0 %v3649
    %4402 = vmatprep.subr.mxu0 %v3654
    %4403 = vmatpush1.msra.mxu0 %v3653
    %4404 = vmatprep.subr.mxu0 %v3658
    %4405 = vmatpush1.msra.mxu0 %v3657
    %4406 = vmatprep.subr.mxu0 %v3662
    %4407 = vmatpush1.msra.mxu0 %v3661
    %4408 = vmatprep.subr.mxu0 %v3666
    %4409 = vmatpush1.msra.mxu0 %v3665
    %4410 = vmatprep.subr.mxu0 %v3670
    %4411 = vmatpush1.msra.mxu0 %v3669
    %4412 = vmatprep.subr.mxu0 %v3674
    %4413 = vmatpush1.msra.mxu0 %v3673
    %4414 = vmatprep.subr.mxu0 %v3678
    %4415 = vmatpush1.msra.mxu0 %v3677
    %4416 = vmatprep.subr.mxu0 %v3682
    %4417 = vmatpush1.msra.mxu0 %v3681
    %4418 = vmatprep.subr.mxu0 %v3686
    %4419 = vmatpush1.msra.mxu0 %v3685
    %4420 = vmatprep.subr.mxu0 %v3690
    %4421 = vmatpush1.msra.mxu0 %v3689
    %4422 = vmatprep.subr.mxu0 %v3694
    %4423 = vmatpush1.msra.mxu0 %v3693
    %4424 = vmatprep.subr.mxu0 %v3698
    %4425 = vmatpush1.msra.mxu0 %v3697
    %4426 = vmatprep.subr.mxu0 %v3702
    %4427 = vmatpush1.msra.mxu0 %v3701
    %4428 = vmatprep.subr.mxu0 %v3706
    %4429 = vmatpush1.msra.mxu0 %v3705
    %4430 = vmatprep.subr.mxu0 %v3710
    %4431 = vmatpush1.msra.mxu0 %v3709
    %4432 = vmatprep.subr.mxu0 %v3714
    %4433 = vmatpush1.msra.mxu0 %v3713
    %4434 = vmatprep.subr.mxu0 %v3718
    %4435 = vmatpush1.msra.mxu0 %v3717
    %4436 = vmatprep.subr.mxu0 %v3722
    %4437 = vmatpush1.msra.mxu0 %v3721
    %4438 = vmatprep.subr.mxu0 %v3726
    %4439 = vmatpush1.msra.mxu0 %v3725
    %4440 = vmatprep.subr.mxu0 %v3730
    %4441 = vmatpush1.msra.mxu0 %v3729
    %4442 = vmatprep.subr.mxu0 %v3734
    %4443 = vmatpush1.msra.mxu0 %v3733
    %4444 = vmatprep.subr.mxu0 %v3738
    %4445 = vmatpush1.msra.mxu0 %v3737
    %4446 = vmatprep.subr.mxu0 %v3742
    %4447 = vmatpush1.msra.mxu0 %v3741
    %4448 = vmatprep.subr.mxu0 %v3746
    %4449 = vmatpush1.msra.mxu0 %v3745
    %4450 = vmatprep.subr.mxu0 %v3750
    %4451 = vmatpush1.msra.mxu0 %v3749
    %4452 = vmatprep.subr.mxu0 %v3754
    %4453 = vmatpush1.msra.mxu0 %v3753
    %4454 = vmatprep.subr.mxu0 %v3758
    %4455 = vmatpush1.msra.mxu0 %v3757
    %4456 = vmatprep.mubr.f32.mxu0 %v3498
    %4457 = vmatmul.mubr.f32.gmra.mrb[0].mxu0 %v3497
    %v4458 = vpop.f32.mrb[0].mxu0
    %v4459 = vadd.f32 %v4388, %v4458
    %v4460 = vpop.f32.mrb[0].mxu0
    %v4461 = vadd.f32 %v4390, %v4460
    %4462 = vdwg.mxu0
    %4463 = vmatprep.subr.mxu0 %v3762
    %4464 = vmatpush1.msra.mxu0 %v3761
    %4465 = vmatprep.subr.mxu0 %v3766
    %4466 = vmatpush1.msra.mxu0 %v3765
    %4467 = vmatprep.subr.mxu0 %v3770
    %4468 = vmatpush1.msra.mxu0 %v3769
    %4469 = vmatprep.subr.mxu0 %v3774
    %4470 = vmatpush1.msra.mxu0 %v3773
    %4471 = vmatprep.subr.mxu0 %v3778
    %4472 = vmatpush1.msra.mxu0 %v3777
    %4473 = vmatprep.subr.mxu0 %v3782
    %4474 = vmatpush1.msra.mxu0 %v3781
    %4475 = vmatprep.subr.mxu0 %v3786
    %4476 = vmatpush1.msra.mxu0 %v3785
    %4477 = vmatprep.subr.mxu0 %v3790
    %4478 = vmatpush1.msra.mxu0 %v3789
    %4479 = vmatprep.subr.mxu0 %v3794
    %4480 = vmatpush1.msra.mxu0 %v3793
    %4481 = vmatprep.subr.mxu0 %v3798
    %4482 = vmatpush1.msra.mxu0 %v3797
    %4483 = vmatprep.subr.mxu0 %v3802
    %4484 = vmatpush1.msra.mxu0 %v3801
    %4485 = vmatprep.subr.mxu0 %v3806
    %4486 = vmatpush1.msra.mxu0 %v3805
    %4487 = vmatprep.subr.mxu0 %v3810
    %4488 = vmatpush1.msra.mxu0 %v3809
    %4489 = vmatprep.subr.mxu0 %v3814
    %4490 = vmatpush1.msra.mxu0 %v3813
    %4491 = vmatprep.subr.mxu0 %v3818
    %4492 = vmatpush1.msra.mxu0 %v3817
    %4493 = vmatprep.subr.mxu0 %v3822
    %4494 = vmatpush1.msra.mxu0 %v3821
    %4495 = vmatprep.subr.mxu0 %v3826
    %4496 = vmatpush1.msra.mxu0 %v3825
    %4497 = vmatprep.subr.mxu0 %v3830
    %4498 = vmatpush1.msra.mxu0 %v3829
    %4499 = vmatprep.subr.mxu0 %v3834
    %4500 = vmatpush1.msra.mxu0 %v3833
    %4501 = vmatprep.subr.mxu0 %v3838
    %4502 = vmatpush1.msra.mxu0 %v3837
    %4503 = vmatprep.subr.mxu0 %v3842
    %4504 = vmatpush1.msra.mxu0 %v3841
    %4505 = vmatprep.subr.mxu0 %v3846
    %4506 = vmatpush1.msra.mxu0 %v3845
    %4507 = vmatprep.subr.mxu0 %v3850
    %4508 = vmatpush1.msra.mxu0 %v3849
    %4509 = vmatprep.subr.mxu0 %v3854
    %4510 = vmatpush1.msra.mxu0 %v3853
    %4511 = vmatprep.subr.mxu0 %v3858
    %4512 = vmatpush1.msra.mxu0 %v3857
    %4513 = vmatprep.subr.mxu0 %v3862
    %4514 = vmatpush1.msra.mxu0 %v3861
    %4515 = vmatprep.subr.mxu0 %v3866
    %4516 = vmatpush1.msra.mxu0 %v3865
    %4517 = vmatprep.subr.mxu0 %v3870
    %4518 = vmatpush1.msra.mxu0 %v3869
    %4519 = vmatprep.subr.mxu0 %v3874
    %4520 = vmatpush1.msra.mxu0 %v3873
    %4521 = vmatprep.subr.mxu0 %v3878
    %4522 = vmatpush1.msra.mxu0 %v3877
    %4523 = vmatprep.subr.mxu0 %v3882
    %4524 = vmatpush1.msra.mxu0 %v3881
    %4525 = vmatprep.subr.mxu0 %v3886
    %4526 = vmatpush1.msra.mxu0 %v3885
    %4527 = vmatprep.mubr.f32.mxu0 %v3500
    %4528 = vmatmul.mubr.f32.gmra.mrb[0].mxu0 %v3499
    %v4529 = vpop.f32.mrb[0].mxu0
    %v4530 = vadd.f32 %v4459, %v4529
    %v4531 = vpop.f32.mrb[0].mxu0
    %v4532 = vadd.f32 %v4461, %v4531
    %4533 = vdwg.mxu0
    %4534 = vmatprep.subr.mxu0 %v3890
    %4535 = vmatpush1.msra.mxu0 %v3889
    %4536 = vmatprep.subr.mxu0 %v3894
    %4537 = vmatpush1.msra.mxu0 %v3893
    %4538 = vmatprep.subr.mxu0 %v3898
    %4539 = vmatpush1.msra.mxu0 %v3897
    %4540 = vmatprep.subr.mxu0 %v3902
    %4541 = vmatpush1.msra.mxu0 %v3901
    %4542 = vmatprep.subr.mxu0 %v3906
    %4543 = vmatpush1.msra.mxu0 %v3905
    %4544 = vmatprep.subr.mxu0 %v3910
    %4545 = vmatpush1.msra.mxu0 %v3909
    %4546 = vmatprep.subr.mxu0 %v3914
    %4547 = vmatpush1.msra.mxu0 %v3913
    %4548 = vmatprep.subr.mxu0 %v3918
    %4549 = vmatpush1.msra.mxu0 %v3917
    %4550 = vmatprep.subr.mxu0 %v3922
    %4551 = vmatpush1.msra.mxu0 %v3921
    %4552 = vmatprep.subr.mxu0 %v3926
    %4553 = vmatpush1.msra.mxu0 %v3925
    %4554 = vmatprep.subr.mxu0 %v3930
    %4555 = vmatpush1.msra.mxu0 %v3929
    %4556 = vmatprep.subr.mxu0 %v3934
    %4557 = vmatpush1.msra.mxu0 %v3933
    %4558 = vmatprep.subr.mxu0 %v3938
    %4559 = vmatpush1.msra.mxu0 %v3937
    %4560 = vmatprep.subr.mxu0 %v3942
    %4561 = vmatpush1.msra.mxu0 %v3941
    %4562 = vmatprep.subr.mxu0 %v3946
    %4563 = vmatpush1.msra.mxu0 %v3945
    %4564 = vmatprep.subr.mxu0 %v3950
    %4565 = vmatpush1.msra.mxu0 %v3949
    %4566 = vmatprep.subr.mxu0 %v3954
    %4567 = vmatpush1.msra.mxu0 %v3953
    %4568 = vmatprep.subr.mxu0 %v3958
    %4569 = vmatpush1.msra.mxu0 %v3957
    %4570 = vmatprep.subr.mxu0 %v3962
    %4571 = vmatpush1.msra.mxu0 %v3961
    %4572 = vmatprep.subr.mxu0 %v3966
    %4573 = vmatpush1.msra.mxu0 %v3965
    %4574 = vmatprep.subr.mxu0 %v3970
    %4575 = vmatpush1.msra.mxu0 %v3969
    %4576 = vmatprep.subr.mxu0 %v3974
    %4577 = vmatpush1.msra.mxu0 %v3973
    %4578 = vmatprep.subr.mxu0 %v3978
    %4579 = vmatpush1.msra.mxu0 %v3977
    %4580 = vmatprep.subr.mxu0 %v3982
    %4581 = vmatpush1.msra.mxu0 %v3981
    %4582 = vmatprep.subr.mxu0 %v3986
    %4583 = vmatpush1.msra.mxu0 %v3985
    %4584 = vmatprep.subr.mxu0 %v3990
    %4585 = vmatpush1.msra.mxu0 %v3989
    %4586 = vmatprep.subr.mxu0 %v3994
    %4587 = vmatpush1.msra.mxu0 %v3993
    %4588 = vmatprep.subr.mxu0 %v3998
    %4589 = vmatpush1.msra.mxu0 %v3997
    %4590 = vmatprep.subr.mxu0 %v4002
    %4591 = vmatpush1.msra.mxu0 %v4001
    %4592 = vmatprep.subr.mxu0 %v4006
    %4593 = vmatpush1.msra.mxu0 %v4005
    %4594 = vmatprep.subr.mxu0 %v4010
    %4595 = vmatpush1.msra.mxu0 %v4009
    %4596 = vmatprep.subr.mxu0 %v4014
    %4597 = vmatpush1.msra.mxu0 %v4013
    %4598 = vmatprep.mubr.f32.mxu0 %v3502
    %4599 = vmatmul.mubr.f32.gmra.mrb[0].mxu0 %v3501
    %v4600 = vpop.f32.mrb[0].mxu0
    %v4601 = vadd.f32 %v4530, %v4600
    %v4602 = vpop.f32.mrb[0].mxu0
    %v4603 = vadd.f32 %v4532, %v4602
    %4604 = vdwg.mxu0
    %v4605 = vsub.f32 0.0, %v4317
    %v4606 = vsub.f32 0.0, %v4319
    %v4607 = vsub.f32 0.0, %v4601
    %v4608 = vsub.f32 0.0, %v4603
    %v4609 = vmul.f32 %v4605, 1.442695
    %v4610 = vpow.pop %v4609
    %v4611 = vmul.f32 %v4606, 1.442695
    %v4612 = vpow.pop %v4611
    %v4613 = vmul.f32 %v4607, 1.442695
    %v4614 = vpow.pop %v4613
    %v4615 = vmul.f32 %v4608, 1.442695
    %v4616 = vpow.pop %v4615
    %v4617 = vadd.f32 %v4610, 1.0
    %v4618 = vadd.f32 %v4612, 1.0
    %v4619 = vadd.f32 %v4614, 1.0
    %v4620 = vadd.f32 %v4616, 1.0
    %v4621 = vrcp.pop %v4617
    %v4622 = vmul.f32 1.0, %v4621
    %v4623 = vrcp.pop %v4618
    %v4624 = vmul.f32 1.0, %v4623
    %v4625 = vrcp.pop %v4619
    %v4626 = vmul.f32 1.0, %v4625
    %v4627 = vrcp.pop %v4620
    %v4628 = vmul.f32 1.0, %v4627
    %4629 = vst [vmem:[%s9] sm:$0xff] %v4622
    %4630 = vst [vmem:[%s9 + $0x8] sm:$0xff] %v4624
    %4631 = vst [vmem:[%s9 + $0x10] sm:$0xff] %v4626
    %4632 = vst [vmem:[%s9 + $0x18] sm:$0xff] %v4628
    // Predicated region
    $region70: #{autoencoder_forward.1} parent=1 // pred_check
      _
    $region71: #{autoencoder_forward.1} parent=1 // pred_check_branch
      %4634 = sbr.rel (0) target = $region73
    $region72: #{autoencoder_forward.1} parent=1 // pred_region
      _
    $region73: #{autoencoder_forward.1} parent=1 // pred_fallthru
      _
    // Predicated region
    $region74: #{autoencoder_forward.1} parent=1 // pred_check
      _
    $region75: #{autoencoder_forward.1} parent=1 // pred_check_branch
      %4636 = sbr.rel (0) target = $region77
    $region76: #{autoencoder_forward.1} parent=1 // pred_region
      _
    $region77: #{autoencoder_forward.1} parent=1 // pred_fallthru
      _
    %4637 = vsyncpa [#allocation3], 1
    %4638 = vsyncpa [#allocation5], 1
    %4639 = vsyncpa [#allocation8], 1
    %4640 = vsyncpa [#allocation11], 1
    %4641 = vsyncpa [#allocation14], 1

</llo_original>
